<compile_context>
chip_gen: v6e
topology: v6e:2x2x1
jax: 0.10.0
libtpu: 0.0.40
codegen_flags: <defaults>
</compile_context>

<pallas_src>
import functools

import jax
import jax.numpy as jnp
from jax.experimental import pallas as pl
from jax.experimental.pallas import tpu as pltpu

IN_DIM = 1690          # 13 * 130
H1, H2, H3, OUT = 512, 256, 64, 10

# Lane-aligned (zero-padded) output dims used inside the kernel.
H3_PAD = 128
OUT_PAD = 128


def _round_up(n, m):
    return ((n + m - 1) // m) * m


# -----------------------------------------------------------------------------
# One-time weight formatting (model-load time, NOT per forward call).
# Takes PyTorch-layout weights (out_features, in_features) and returns K-major,
# bf16, lane-padded matrices ready for the kernel.
# -----------------------------------------------------------------------------
def prepare_params(w1, w2, w3, w4):
    w1t = w1.T.astype(jnp.bfloat16)                                    # (1690, 512)
    w2t = w2.T.astype(jnp.bfloat16)                                    # (512, 256)
    w3t = jnp.pad(w3.T.astype(jnp.bfloat16),
                  ((0, 0), (0, H3_PAD - H3)))                          # (256, 128)
    w4t = jnp.pad(w4.T.astype(jnp.bfloat16),
                  ((0, H3_PAD - H3), (0, OUT_PAD - OUT)))              # (128, 128)
    return (w1t, w2t, w3t, w4t)


# -----------------------------------------------------------------------------
# Kernel: whole 4-layer MLP for one batch tile; all weights resident in VMEM.
# -----------------------------------------------------------------------------
def _mlp_kernel(x_ref, w1_ref, w2_ref, w3_ref, w4_ref, o_ref):
    # Cast the f32 activation tile to bf16 in VMEM (no extra HBM round-trip).
    x = x_ref[...].astype(jnp.bfloat16)                      # (bt, 1690)
    # Layer 1: (bt, 1690) @ (1690, 512) -- dominant matmul (bf16 MXU, f32 acc).
    h = jnp.dot(x, w1_ref[...], preferred_element_type=jnp.float32)
    h = jnp.maximum(h, 0.0).astype(jnp.bfloat16)
    # Layer 2: (bt, 512) @ (512, 256)
    h = jnp.dot(h, w2_ref[...], preferred_element_type=jnp.float32)
    h = jnp.maximum(h, 0.0).astype(jnp.bfloat16)
    # Layer 3: (bt, 256) @ (256, 128)   (cols 64..127 are zero padding)
    h = jnp.dot(h, w3_ref[...], preferred_element_type=jnp.float32)
    h = jnp.maximum(h, 0.0).astype(jnp.bfloat16)
    # Layer 4: (bt, 128) @ (128, 128)   -> lane-dense bf16 store.
    o_ref[...] = jnp.dot(
        h, w4_ref[...], preferred_element_type=jnp.float32
    ).astype(o_ref.dtype)


def _pick_batch_tile(B, batch_tile):
    # Keep >= 2 grid steps whenever the batch allows it (v7x megacore sharding
    # of the single "parallel" axis); otherwise one block covering the batch.
    half = _round_up(max(-(-B // 2), 1), 8)
    bt = _round_up(min(batch_tile, half), 8)
    if bt >= B:
        bt = B
    return bt


@functools.partial(jax.jit, static_argnames=("batch_tile",))
def net_forward(x, params, *, batch_tile=512):
    """Forward pass of `Net`.

    x      : (B, F1, F2) float array with F1*F2 == 1690.
    params : output of prepare_params() (pre-formatted bf16 weights).
    Returns (B, 10) float32 logits.
    """
    w1t, w2t, w3t, w4t = params
    B = x.shape[0]
    x2d = x.reshape(B, -1)                                   # flatten(1, 2): free reshape
    assert x2d.shape[1] == IN_DIM

    bt = _pick_batch_tile(B, batch_tile)
    grid = (pl.cdiv(B, bt),)
    const = lambda i: (0, 0)   # grid-invariant weights: fetched once, never re-DMA'd

    out = pl.pallas_call(
        _mlp_kernel,
        out_shape=jax.ShapeDtypeStruct((B, OUT_PAD), jnp.bfloat16),
        grid=grid,
        in_specs=[
            pl.BlockSpec((bt, IN_DIM), lambda i: (i, 0)),    # f32 x, full-width block
            pl.BlockSpec((IN_DIM, H1), const),
            pl.BlockSpec((H1, H2), const),
            pl.BlockSpec((H2, H3_PAD), const),
            pl.BlockSpec((H3_PAD, OUT_PAD), const),
        ],
        out_specs=pl.BlockSpec((bt, OUT_PAD), lambda i: (i, 0)),
        compiler_params=pltpu.CompilerParams(
            dimension_semantics=("parallel",),
        ),
    )(x2d, w1t, w2t, w3t, w4t)

    return out[:, :OUT].astype(jnp.float32)


# -----------------------------------------------------------------------------
# Test harness
# -----------------------------------------------------------------------------
def _init_linear(key, out_dim, in_dim):
    # PyTorch nn.Linear default init: U(-1/sqrt(in), 1/sqrt(in)),
    # stored in PyTorch layout (out_features, in_features).
    bound = 1.0 / jnp.sqrt(jnp.float32(in_dim))
    return jax.random.uniform(key, (out_dim, in_dim), jnp.float32, -bound, bound)


def _ref_forward(x, w1, w2, w3, w4):
    # Plain-JAX reference mimicking the kernel numerics (bf16 inputs/weights,
    # f32 accumulation, bf16 final store) so the comparison stays tight.
    h = x.reshape(x.shape[0], -1).astype(jnp.bfloat16)
    for w, relu in ((w1, True), (w2, True), (w3, True), (w4, False)):
        h = jnp.dot(h, w.T.astype(jnp.bfloat16),
                    preferred_element_type=jnp.float32)
        if relu:
            h = jnp.maximum(h, 0.0).astype(jnp.bfloat16)
    return h.astype(jnp.bfloat16).astype(jnp.float32)


if __name__ == "__main__":
    key = jax.random.PRNGKey(0)
    kx, k1, k2, k3, k4 = jax.random.split(key, 5)

    B, F1, F2 = 32, 13, 130                      # F1*F2 = 1690, as the forward implies
    x = jax.random.normal(kx, (B, F1, F2), jnp.float32)

    w1 = _init_linear(k1, H1, IN_DIM)
    w2 = _init_linear(k2, H2, H1)
    w3 = _init_linear(k3, H3, H2)
    w4 = _init_linear(k4, OUT, H3)

    # One-time weight formatting (model-load cost, outside the per-call path).
    params = prepare_params(w1, w2, w3, w4)

    out = net_forward(x, params)
    out = jax.block_until_ready(out)
    assert out.shape == (B, OUT)

    ref = _ref_forward(x, w1, w2, w3, w4)
    max_err = float(jnp.max(jnp.abs(out - ref)))
    assert jnp.allclose(out, ref, atol=2e-2, rtol=2e-2), (
        "mismatch vs reference: max abs err = %g" % max_err)

    print("KERNEL_OK")
</pallas_src>

<mosaic_0001>
module attributes {stable_mosaic.version = 11 : i64} {
  func.func @_mlp_kernel(%arg0: i32, %arg1: memref<16x1690xf32, #tpu.memory_space<vmem>>, %arg2: memref<1690x512xbf16, #tpu.memory_space<vmem>>, %arg3: memref<512x256xbf16, #tpu.memory_space<vmem>>, %arg4: memref<256x128xbf16, #tpu.memory_space<vmem>>, %arg5: memref<128x128xbf16, #tpu.memory_space<vmem>>, %arg6: memref<16x128xbf16, #tpu.memory_space<vmem>>) attributes {dimension_semantics = [#tpu.dimension_semantics<parallel>], iteration_bounds = array<i64: 2>, scalar_prefetch = 0 : i64, scratch_operands = 0 : i64, tpu.core_type = #tpu.core_type<tc>, window_params = [{transform_indices = @transform_0, window_bounds = array<i64: 16, 1690>}, {pipeline_mode = #tpu.pipeline_mode<synchronous>, transform_indices = @transform_1, window_bounds = array<i64: 1690, 512>}, {pipeline_mode = #tpu.pipeline_mode<synchronous>, transform_indices = @transform_2, window_bounds = array<i64: 512, 256>}, {pipeline_mode = #tpu.pipeline_mode<synchronous>, transform_indices = @transform_3, window_bounds = array<i64: 256, 128>}, {pipeline_mode = #tpu.pipeline_mode<synchronous>, transform_indices = @transform_4, window_bounds = array<i64: 128, 128>}, {transform_indices = @transform_5, window_bounds = array<i64: 16, 128>}]} {
    %c0 = arith.constant 0 : index
    %c0_0 = arith.constant 0 : index
    %0 = vector.load %arg1[%c0, %c0_0] : memref<16x1690xf32, #tpu.memory_space<vmem>>, vector<16x1690xf32>
    %1 = arith.truncf %0 : vector<16x1690xf32> to vector<16x1690xbf16>
    %c0_1 = arith.constant 0 : index
    %c0_2 = arith.constant 0 : index
    %2 = vector.load %arg2[%c0_1, %c0_2] : memref<1690x512xbf16, #tpu.memory_space<vmem>>, vector<1690x512xbf16>
    %cst = arith.constant dense<0.000000e+00> : vector<16x512xf32>
    %3 = tpu.matmul %1, %2, %cst {dimension_numbers = #tpu.dot_dimension_numbers<[1], [0], [0], [1], [0, 0, 1, 1], [], []>} : vector<16x1690xbf16>, vector<1690x512xbf16>, vector<16x512xf32> -> vector<16x512xf32>
    %cst_3 = arith.constant 0.000000e+00 : f32
    %4 = vector.broadcast %cst_3 : f32 to vector<16x512xf32>
    %5 = arith.maximumf %3, %4 : vector<16x512xf32>
    %6 = arith.truncf %5 : vector<16x512xf32> to vector<16x512xbf16>
    %c0_4 = arith.constant 0 : index
    %c0_5 = arith.constant 0 : index
    %7 = vector.load %arg3[%c0_4, %c0_5] : memref<512x256xbf16, #tpu.memory_space<vmem>>, vector<512x256xbf16>
    %cst_6 = arith.constant dense<0.000000e+00> : vector<16x256xf32>
    %8 = tpu.matmul %6, %7, %cst_6 {dimension_numbers = #tpu.dot_dimension_numbers<[1], [0], [0], [1], [0, 0, 1, 1], [], []>} : vector<16x512xbf16>, vector<512x256xbf16>, vector<16x256xf32> -> vector<16x256xf32>
    %cst_7 = arith.constant 0.000000e+00 : f32
    %9 = vector.broadcast %cst_7 : f32 to vector<16x256xf32>
    %10 = arith.maximumf %8, %9 : vector<16x256xf32>
    %11 = arith.truncf %10 : vector<16x256xf32> to vector<16x256xbf16>
    %c0_8 = arith.constant 0 : index
    %c0_9 = arith.constant 0 : index
    %12 = vector.load %arg4[%c0_8, %c0_9] : memref<256x128xbf16, #tpu.memory_space<vmem>>, vector<256x128xbf16>
    %cst_10 = arith.constant dense<0.000000e+00> : vector<16x128xf32>
    %13 = tpu.matmul %11, %12, %cst_10 {dimension_numbers = #tpu.dot_dimension_numbers<[1], [0], [0], [1], [0, 0, 1, 1], [], []>} : vector<16x256xbf16>, vector<256x128xbf16>, vector<16x128xf32> -> vector<16x128xf32>
    %cst_11 = arith.constant 0.000000e+00 : f32
    %14 = vector.broadcast %cst_11 : f32 to vector<16x128xf32>
    %15 = arith.maximumf %13, %14 : vector<16x128xf32>
    %16 = arith.truncf %15 : vector<16x128xf32> to vector<16x128xbf16>
    %c0_12 = arith.constant 0 : index
    %c0_13 = arith.constant 0 : index
    %17 = vector.load %arg5[%c0_12, %c0_13] : memref<128x128xbf16, #tpu.memory_space<vmem>>, vector<128x128xbf16>
    %cst_14 = arith.constant dense<0.000000e+00> : vector<16x128xf32>
    %18 = tpu.matmul %16, %17, %cst_14 {dimension_numbers = #tpu.dot_dimension_numbers<[1], [0], [0], [1], [0, 0, 1, 1], [], []>} : vector<16x128xbf16>, vector<128x128xbf16>, vector<16x128xf32> -> vector<16x128xf32>
    %19 = arith.truncf %18 : vector<16x128xf32> to vector<16x128xbf16>
    %c0_15 = arith.constant 0 : index
    %c0_16 = arith.constant 0 : index
    %20 = vector.load %arg6[%c0_15, %c0_16] : memref<16x128xbf16, #tpu.memory_space<vmem>>, vector<16x128xbf16>
    tpu.vector_store %arg6[%c0_15, %c0_16], %19 {strides = array<i32>} : memref<16x128xbf16, #tpu.memory_space<vmem>>, vector<16x128xbf16>,
    return
  }
  func.func @transform_0(%arg0: i32) -> (i32, i32) {
    %c0_i32 = arith.constant 0 : i32
    %c0_i32_0 = arith.constant 0 : i32
    return %arg0, %c0_i32 : i32, i32
  }
  func.func @transform_1(%arg0: i32) -> (i32, i32) {
    %c0_i32 = arith.constant 0 : i32
    %c0_i32_0 = arith.constant 0 : i32
    %c0_i32_1 = arith.constant 0 : i32
    return %c0_i32, %c0_i32_0 : i32, i32
  }
  func.func @transform_2(%arg0: i32) -> (i32, i32) {
    %c0_i32 = arith.constant 0 : i32
    %c0_i32_0 = arith.constant 0 : i32
    %c0_i32_1 = arith.constant 0 : i32
    return %c0_i32, %c0_i32_0 : i32, i32
  }
  func.func @transform_3(%arg0: i32) -> (i32, i32) {
    %c0_i32 = arith.constant 0 : i32
    %c0_i32_0 = arith.constant 0 : i32
    %c0_i32_1 = arith.constant 0 : i32
    return %c0_i32, %c0_i32_0 : i32, i32
  }
  func.func @transform_4(%arg0: i32) -> (i32, i32) {
    %c0_i32 = arith.constant 0 : i32
    %c0_i32_0 = arith.constant 0 : i32
    %c0_i32_1 = arith.constant 0 : i32
    return %c0_i32, %c0_i32_0 : i32, i32
  }
  func.func @transform_5(%arg0: i32) -> (i32, i32) {
    %c0_i32 = arith.constant 0 : i32
    %c0_i32_0 = arith.constant 0 : i32
    return %arg0, %c0_i32 : i32, i32
  }
}

</mosaic_0001>

<llo_original>
// kernel: net_forward.1
$region0: #{net_forward.1}
  #allocation0 [shape = 'u32[]', space=smem, size = 0x4, offset = 0x4, fixed_abs, tag = 'smem constant byte address 0x4 - core index']
  #allocation1 [shape = 'u32[144,128]{1,0:T(1,128)}', space=vmem, size = 0x12000, scoped, tag = 'internal scratch']
  %s0 = inlined_call_operand.vmem [shape: f32[32,1690], index: 0, kind: input, shape index: {}]
  %s1 = inlined_call_operand.hbm [shape: bf16[1690,512], index: 1, kind: input, shape index: {}]
  %s2 = inlined_call_operand.vmem [shape: bf16[512,256], index: 2, kind: input, shape index: {}]
  %s3 = inlined_call_operand.vmem [shape: bf16[256,128], index: 3, kind: input, shape index: {}]
  %s4 = inlined_call_operand.vmem [shape: bf16[128,128], index: 4, kind: input, shape index: {}]
  %s5 = inlined_call_operand.vmem [shape: bf16[32,128], index: 5, kind: output, shape index: {}]
  %s6 = sld [smem:[#allocation0]]
  $region57: #{net_forward.1} parent=0
    _
  %s8 = ssub.s32 1, %s6
  %s9 = scalar_select 0, %s8, %s6
  $region1: #{net_forward.1} parent=0
    #allocation2 [shape = 'u8[1736704]{0}', space=vmem, size = 0x1a8000, scoped, tag = 'input window, operand 1, single buffered']
    #allocation3 [shape = 's32[2]{0}', space=sflag, size = 0x8, scoped, tag = 'scoped memory for net_forward.1']
    %10 = vsyncpa [#allocation3], 0
    loop: start=0, step=1, limit=4
    $region2: #{net_forward.1} parent=1 // loop_pre_header
      _
    $region3: #{net_forward.1} parent=1 // loop_header
      %s12 = sphi 0, %s16
      %p13 = scmp.ge.s32.totalorder %s12, 4
      %s22 = sphi 0, %s24
      %s25 = sphi 0, %s22
      %s26 = sphi 0, %s25
      %s42 = sphi 0, %s26
      %s46 = sphi 0, %s46
      %s48 = sphi 0, %s46
      %s49 = sphi 0, %s48
      %s63 = sphi 0, %s49
      %s67 = sphi 0, %s67
      %s69 = sphi 0, %s67
      %s70 = sphi 0, %s69
      %s84 = sphi 0, %s70
      %s88 = sphi 0, %s88
      %s90 = sphi 0, %s88
      %s91 = sphi 0, %s90
      %s105 = sphi 0, %s91
      %s109 = sphi 0, %s109
      %s111 = sphi 0, %s109
      %s112 = sphi 0, %s111
      %s126 = sphi 0, %s112
      %s132 = sphi 0, %s134
      %s135 = sphi 0, %s132
      %s136 = sphi 0, %s135
      %s152 = sphi 0, %s136
    $region4: #{net_forward.1} parent=1 // loop_header_branch
      %15 = sbr.rel (%p13) target = $region8
    $region5: #{net_forward.1} parent=1 // loop_body
      %s17 = ssub.s32 %s12, 1
      %s18 = ssub.s32 %s12, 2
      %s19 = sadd.s32 %s12, 1
      %s20 = ssub.s32 %s12, %s19
      %p21 = scmp.eq.s32.totalorder %s20, 0
      %s23 = sadd.s32 %s22, 1
      %s24 = scalar_select %p21, %s22, %s23
      %p27 = pneg %p21
      %p28 = scmp.eq.s32.totalorder %s12, 1
      %p29 = por %p27, %p28
      %p30 = scmp.ne.s32.totalorder %s22, %s25
      %p31 = scmp.eq.s32.totalorder %s12, 0
      %p32 = por %p30, %p31
      %p33 = scmp.ne.s32.totalorder %s22, %s25
      %p34 = scmp.eq.s32.totalorder %s17, 1
      %p35 = por %p33, %p34
      %p36 = scmp.ne.s32.totalorder %s25, %s26
      %p37 = scmp.eq.s32.totalorder %s17, 0
      %p38 = por %p36, %p37
      %p39 = scmp.ne.s32.totalorder %s25, %s26
      %p40 = scmp.eq.s32.totalorder %s18, 1
      %p41 = por %p39, %p40
      %p43 = scmp.ne.s32.totalorder %s26, %s42
      %p44 = scmp.eq.s32.totalorder %s18, 0
      %p45 = por %p43, %p44
      %s47 = sadd.s32 %s46, 1
      %p50 = scmp.eq.s32.totalorder %s12, 1
      %p51 = scmp.ne.s32.totalorder %s46, %s48
      %p52 = scmp.eq.s32.totalorder %s12, 0
      %p53 = por %p51, %p52
      %p54 = scmp.ne.s32.totalorder %s46, %s48
      %p55 = scmp.eq.s32.totalorder %s17, 1
      %p56 = por %p54, %p55
      %p57 = scmp.ne.s32.totalorder %s48, %s49
      %p58 = scmp.eq.s32.totalorder %s17, 0
      %p59 = por %p57, %p58
      %p60 = scmp.ne.s32.totalorder %s48, %s49
      %p61 = scmp.eq.s32.totalorder %s18, 1
      %p62 = por %p60, %p61
      %p64 = scmp.ne.s32.totalorder %s49, %s63
      %p65 = scmp.eq.s32.totalorder %s18, 0
      %p66 = por %p64, %p65
      %s68 = sadd.s32 %s67, 1
      %p71 = scmp.eq.s32.totalorder %s12, 1
      %p72 = scmp.ne.s32.totalorder %s67, %s69
      %p73 = scmp.eq.s32.totalorder %s12, 0
      %p74 = por %p72, %p73
      %p75 = scmp.ne.s32.totalorder %s67, %s69
      %p76 = scmp.eq.s32.totalorder %s17, 1
      %p77 = por %p75, %p76
      %p78 = scmp.ne.s32.totalorder %s69, %s70
      %p79 = scmp.eq.s32.totalorder %s17, 0
      %p80 = por %p78, %p79
      %p81 = scmp.ne.s32.totalorder %s69, %s70
      %p82 = scmp.eq.s32.totalorder %s18, 1
      %p83 = por %p81, %p82
      %p85 = scmp.ne.s32.totalorder %s70, %s84
      %p86 = scmp.eq.s32.totalorder %s18, 0
      %p87 = por %p85, %p86
      %s89 = sadd.s32 %s88, 1
      %p92 = scmp.eq.s32.totalorder %s12, 1
      %p93 = scmp.ne.s32.totalorder %s88, %s90
      %p94 = scmp.eq.s32.totalorder %s12, 0
      %p95 = por %p93, %p94
      %p96 = scmp.ne.s32.totalorder %s88, %s90
      %p97 = scmp.eq.s32.totalorder %s17, 1
      %p98 = por %p96, %p97
      %p99 = scmp.ne.s32.totalorder %s90, %s91
      %p100 = scmp.eq.s32.totalorder %s17, 0
      %p101 = por %p99, %p100
      %p102 = scmp.ne.s32.totalorder %s90, %s91
      %p103 = scmp.eq.s32.totalorder %s18, 1
      %p104 = por %p102, %p103
      %p106 = scmp.ne.s32.totalorder %s91, %s105
      %p107 = scmp.eq.s32.totalorder %s18, 0
      %p108 = por %p106, %p107
      %s110 = sadd.s32 %s109, 1
      %p113 = scmp.eq.s32.totalorder %s12, 1
      %p114 = scmp.ne.s32.totalorder %s109, %s111
      %p115 = scmp.eq.s32.totalorder %s12, 0
      %p116 = por %p114, %p115
      %p117 = scmp.ne.s32.totalorder %s109, %s111
      %p118 = scmp.eq.s32.totalorder %s17, 1
      %p119 = por %p117, %p118
      %p120 = scmp.ne.s32.totalorder %s111, %s112
      %p121 = scmp.eq.s32.totalorder %s17, 0
      %p122 = por %p120, %p121
      %p123 = scmp.ne.s32.totalorder %s111, %s112
      %p124 = scmp.eq.s32.totalorder %s18, 1
      %p125 = por %p123, %p124
      %p127 = scmp.ne.s32.totalorder %s112, %s126
      %p128 = scmp.eq.s32.totalorder %s18, 0
      %p129 = por %p127, %p128
      %s130 = ssub.s32 %s12, %s19
      %p131 = scmp.eq.s32.totalorder %s130, 0
      %s133 = sadd.s32 %s132, 1
      %s134 = scalar_select %p131, %s132, %s133
      %p137 = pneg %p131
      %p138 = scmp.eq.s32.totalorder %s12, 1
      %p139 = por %p137, %p138
      %p140 = scmp.ne.s32.totalorder %s132, %s135
      %p141 = scmp.eq.s32.totalorder %s12, 0
      %p142 = por %p140, %p141
      %p143 = scmp.ne.s32.totalorder %s132, %s135
      %p144 = scmp.eq.s32.totalorder %s17, 1
      %p145 = por %p143, %p144
      %p146 = scmp.ne.s32.totalorder %s135, %s136
      %p147 = scmp.eq.s32.totalorder %s17, 0
      %p148 = por %p146, %p147
      %p149 = scmp.ne.s32.totalorder %s135, %s136
      %p150 = scmp.eq.s32.totalorder %s18, 1
      %p151 = por %p149, %p150
      %p153 = scmp.ne.s32.totalorder %s136, %s152
      %p154 = scmp.eq.s32.totalorder %s18, 0
      %p155 = por %p153, %p154
      %p156 = scmp.le.s32.totalorder 1, %s12
      %p157 = scmp.lt.s32.totalorder %s12, 3
      %p158 = pnand %p156, %p157
      %p159 = pneg %p158
      // Predicated region
      $region9: #{net_forward.1} parent=5 // pred_check
        _
      $region10: #{net_forward.1} parent=5 // pred_check_branch
        %161 = sbr.rel (%p158) target = $region12
      $region11: #{net_forward.1} parent=5 // pred_region
        %s162 = ssub.s32 %s12, 1
        // Predicated region
        $region13: #{net_forward.1} parent=11 // pred_check
          %p163 = pneg %p59
        $region14: #{net_forward.1} parent=11 // pred_check_branch
          %165 = sbr.rel (%p163) target = $region16
        $region15: #{net_forward.1} parent=11 // pred_region
          %s167 = ssub.s32 54272, 54272
          %168 = vsyncadd [#allocation3], %s167
          %s169 = sshll.u32 [#allocation2], 4
          %s170 = int_to_ptr.vmem [resolvable:$true] %s169
          %175 = dma.hbm_to_vmem [thread:$0]  %s1, 54272, %s170, [#allocation3], 256, 256, 16
        $region16: #{net_forward.1} parent=11 // pred_fallthru
          _
        // Predicated region
        $region17: #{net_forward.1} parent=11 // pred_check
          %p176 = pneg %p80
        $region18: #{net_forward.1} parent=11 // pred_check_branch
          %178 = sbr.rel (%p176) target = $region20
        $region19: #{net_forward.1} parent=11 // pred_region
          _
        $region20: #{net_forward.1} parent=11 // pred_fallthru
          _
        // Predicated region
        $region21: #{net_forward.1} parent=11 // pred_check
          %p179 = pneg %p101
        $region22: #{net_forward.1} parent=11 // pred_check_branch
          %181 = sbr.rel (%p179) target = $region24
        $region23: #{net_forward.1} parent=11 // pred_region
          _
        $region24: #{net_forward.1} parent=11 // pred_fallthru
          _
        // Predicated region
        $region25: #{net_forward.1} parent=11 // pred_check
          %p182 = pneg %p122
        $region26: #{net_forward.1} parent=11 // pred_check_branch
          %184 = sbr.rel (%p182) target = $region28
        $region27: #{net_forward.1} parent=11 // pred_region
          _
        $region28: #{net_forward.1} parent=11 // pred_fallthru
          _
      $region12: #{net_forward.1} parent=5 // pred_fallthru
        _
      %p185 = scmp.lt.s32.totalorder %s12, 2
      // Predicated region
      $region29: #{net_forward.1} parent=5 // pred_check
        %p186 = pneg %p185
      $region30: #{net_forward.1} parent=5 // pred_check_branch
        %188 = sbr.rel (%p186) target = $region32
      $region31: #{net_forward.1} parent=5 // pred_region
        // Predicated region
        $region33: #{net_forward.1} parent=31 // pred_check
          %p189 = pneg %p32
        $region34: #{net_forward.1} parent=31 // pred_check_branch
          %191 = sbr.rel (%p189) target = $region36
        $region35: #{net_forward.1} parent=31 // pred_region
          %s192 = smul.u32 2, %s12
          %p193 = scmp.lt.s32.totalorder %s192, 3
          %s194 = scalar_select %p193, %s192, 3
          %s195 = smul.addr %s194, 14
          %s196 = smul.addr %s195, 8
          %s197 = scalar_lea.vmem %s0, %s196
          %s198 = smul.u32 2, %s12
        $region36: #{net_forward.1} parent=31 // pred_fallthru
          _
      $region32: #{net_forward.1} parent=5 // pred_fallthru
        _
      %p199 = scmp.le.s32.totalorder 1, %s12
      %p200 = scmp.lt.s32.totalorder %s12, 3
      %p201 = pnand %p199, %p200
      %p202 = pneg %p201
      // Predicated region
      $region37: #{net_forward.1} parent=5 // pred_check
        _
      $region38: #{net_forward.1} parent=5 // pred_check_branch
        %204 = sbr.rel (%p201) target = $region40
      $region39: #{net_forward.1} parent=5 // pred_region
        %s205 = ssub.s32 %s12, 1
        // Predicated region
        $region41: #{net_forward.1} parent=39 // pred_check
          %p206 = pneg %p59
        $region42: #{net_forward.1} parent=39 // pred_check_branch
          %208 = sbr.rel (%p206) target = $region44
        $region43: #{net_forward.1} parent=39 // pred_region
          %209 = dma.done [#allocation3], 54272
        $region44: #{net_forward.1} parent=39 // pred_fallthru
          _
        %s210 = smul.u32 2, %s17
        %p211 = scmp.lt.s32.totalorder %s210, 3
        %s212 = scalar_select %p211, %s210, 3
        %s213 = smul.addr %s212, 14
        %s214 = smul.addr %s213, 8
        %s215 = scalar_lea.vmem %s0, %s214
        %p216 = pneg %p38
        %p217 = pneg %p35
        %p218 = pneg %p59
        %p219 = pneg %p56
        %p220 = pneg %p80
        %p221 = pneg %p77
        %p222 = pneg %p101
        %p223 = pneg %p98
        %p224 = pneg %p122
        %p225 = pneg %p119
        %p226 = pneg %p148
        %p227 = pneg %p145
        %s228 = smul.u32 2, %s17
        %p229 = scmp.lt.s32.totalorder %s228, 3
        %s230 = scalar_select %p229, %s228, 3
        %s231 = smul.addr %s230, 4
        %s232 = scalar_lea.vmem %s5, %s231
        %s233 = smul.u32 2, %s17
        %p234 = scmp.lt.s32.totalorder %s233, 3
        %s235 = scalar_select %p234, %s233, 3
        %s236 = smul.addr %s235, 14
        %s237 = smul.addr %s236, 8
        %s238 = scalar_lea.vmem %s0, %s237
        %s239 = smul.u32 2, %s17
        %s240 = smul.u32 2, %s17
        %p241 = scmp.lt.s32.totalorder %s240, 3
        %s242 = scalar_select %p241, %s240, 3
        %s243 = smul.addr %s242, 4
        %s244 = scalar_lea.vmem %s5, %s243
        %s245 = smul.u32 2, %s17
        %v247 = vld [vmem:[%s238] sm:$0xff]
        %v248 = vld [vmem:[%s238 + $0x8] sm:$0xff]
        %v249 = vld [vmem:[%s238 + $0x10] sm:$0xff]
        %v250 = vld [vmem:[%s238 + $0x18] sm:$0xff]
        %v251 = vld [vmem:[%s238 + $0x20] sm:$0xff]
        %v252 = vld [vmem:[%s238 + $0x28] sm:$0xff]
        %v253 = vld [vmem:[%s238 + $0x30] sm:$0xff]
        %v254 = vld [vmem:[%s238 + $0x38] sm:$0xff]
        %v255 = vld [vmem:[%s238 + $0x40] sm:$0xff]
        %v256 = vld [vmem:[%s238 + $0x48] sm:$0xff]
        %v257 = vld [vmem:[%s238 + $0x50] sm:$0xff]
        %v258 = vld [vmem:[%s238 + $0x58] sm:$0xff]
        %v259 = vld [vmem:[%s238 + $0x60] sm:$0xff]
        %v260 = vld [vmem:[%s238 + $0x68] sm:$0xff]
        %v261 = vld [vmem:[%s238 + $0x70] sm:$0xff]
        %v262 = vld [vmem:[%s238 + $0x78] sm:$0xff]
        %v263 = vld [vmem:[%s238 + $0x80] sm:$0xff]
        %v264 = vld [vmem:[%s238 + $0x88] sm:$0xff]
        %v265 = vld [vmem:[%s238 + $0x90] sm:$0xff]
        %v266 = vld [vmem:[%s238 + $0x98] sm:$0xff]
        %v267 = vld [vmem:[%s238 + $0xa0] sm:$0xff]
        %v268 = vld [vmem:[%s238 + $0xa8] sm:$0xff]
        %v269 = vld [vmem:[%s238 + $0xb0] sm:$0xff]
        %v270 = vld [vmem:[%s238 + $0xb8] sm:$0xff]
        %v271 = vld [vmem:[%s238 + $0xc0] sm:$0xff]
        %v272 = vld [vmem:[%s238 + $0xc8] sm:$0xff]
        %v273 = vld [vmem:[%s238 + $0xd0] sm:$0xff]
        %v274 = vld [vmem:[%s238 + $0xd8] sm:$0xff]
        %v275 = vpack.c.bf16 %v261, %v247
        %v276 = vpack.c.bf16 %v262, %v248
        %v277 = vpack.c.bf16 %v263, %v249
        %v278 = vpack.c.bf16 %v264, %v250
        %v279 = vpack.c.bf16 %v265, %v251
        %v280 = vpack.c.bf16 %v266, %v252
        %v281 = vpack.c.bf16 %v267, %v253
        %v282 = vpack.c.bf16 %v268, %v254
        %v283 = vpack.c.bf16 %v269, %v255
        %v284 = vpack.c.bf16 %v270, %v256
        %v285 = vpack.c.bf16 %v271, %v257
        %v286 = vpack.c.bf16 %v272, %v258
        %v287 = vpack.c.bf16 %v273, %v259
        %v288 = vpack.c.bf16 %v274, %v260
        %v289 = vld [vmem:[#allocation2] sm:$0xff]
        %v290 = vld [vmem:[#allocation2 + $0x8] sm:$0xff]
        %v291 = vld [vmem:[#allocation2 + $0x10] sm:$0xff]
        %v292 = vld [vmem:[#allocation2 + $0x18] sm:$0xff]
        %v293 = vld [vmem:[#allocation2 + $0x20] sm:$0xff]
        %v294 = vld [vmem:[#allocation2 + $0x28] sm:$0xff]
        %v295 = vld [vmem:[#allocation2 + $0x30] sm:$0xff]
        %v296 = vld [vmem:[#allocation2 + $0x38] sm:$0xff]
        %v297 = vld [vmem:[#allocation2 + $0x40] sm:$0xff]
        %v298 = vld [vmem:[#allocation2 + $0x48] sm:$0xff]
        %v299 = vld [vmem:[#allocation2 + $0x50] sm:$0xff]
        %v300 = vld [vmem:[#allocation2 + $0x58] sm:$0xff]
        %v301 = vld [vmem:[#allocation2 + $0x60] sm:$0xff]
        %v302 = vld [vmem:[#allocation2 + $0x68] sm:$0xff]
        %v303 = vld [vmem:[#allocation2 + $0x70] sm:$0xff]
        %v304 = vld [vmem:[#allocation2 + $0x78] sm:$0xff]
        %v305 = vld [vmem:[#allocation2 + $0x80] sm:$0xff]
        %v306 = vld [vmem:[#allocation2 + $0x88] sm:$0xff]
        %v307 = vld [vmem:[#allocation2 + $0x90] sm:$0xff]
        %v308 = vld [vmem:[#allocation2 + $0x98] sm:$0xff]
        %v309 = vld [vmem:[#allocation2 + $0xa0] sm:$0xff]
        %v310 = vld [vmem:[#allocation2 + $0xa8] sm:$0xff]
        %v311 = vld [vmem:[#allocation2 + $0xb0] sm:$0xff]
        %v312 = vld [vmem:[#allocation2 + $0xb8] sm:$0xff]
        %v313 = vld [vmem:[#allocation2 + $0xc0] sm:$0xff]
        %v314 = vld [vmem:[#allocation2 + $0xc8] sm:$0xff]
        %v315 = vld [vmem:[#allocation2 + $0xd0] sm:$0xff]
        %v316 = vld [vmem:[#allocation2 + $0xd8] sm:$0xff]
        %v317 = vld [vmem:[#allocation2 + $0xe0] sm:$0xff]
        %v318 = vld [vmem:[#allocation2 + $0xe8] sm:$0xff]
        %v319 = vld [vmem:[#allocation2 + $0xf0] sm:$0xff]
        %v320 = vld [vmem:[#allocation2 + $0xf8] sm:$0xff]
        %v321 = vld [vmem:[#allocation2 + $0x100] sm:$0xff]
        %v322 = vld [vmem:[#allocation2 + $0x108] sm:$0xff]
        %v323 = vld [vmem:[#allocation2 + $0x110] sm:$0xff]
        %v324 = vld [vmem:[#allocation2 + $0x118] sm:$0xff]
        %v325 = vld [vmem:[#allocation2 + $0x120] sm:$0xff]
        %v326 = vld [vmem:[#allocation2 + $0x128] sm:$0xff]
        %v327 = vld [vmem:[#allocation2 + $0x130] sm:$0xff]
        %v328 = vld [vmem:[#allocation2 + $0x138] sm:$0xff]
        %v329 = vld [vmem:[#allocation2 + $0x140] sm:$0xff]
        %v330 = vld [vmem:[#allocation2 + $0x148] sm:$0xff]
        %v331 = vld [vmem:[#allocation2 + $0x150] sm:$0xff]
        %v332 = vld [vmem:[#allocation2 + $0x158] sm:$0xff]
        %v333 = vld [vmem:[#allocation2 + $0x160] sm:$0xff]
        %v334 = vld [vmem:[#allocation2 + $0x168] sm:$0xff]
        %v335 = vld [vmem:[#allocation2 + $0x170] sm:$0xff]
        %v336 = vld [vmem:[#allocation2 + $0x178] sm:$0xff]
        %v337 = vld [vmem:[#allocation2 + $0x180] sm:$0xff]
        %v338 = vld [vmem:[#allocation2 + $0x188] sm:$0xff]
        %v339 = vld [vmem:[#allocation2 + $0x190] sm:$0xff]
        %v340 = vld [vmem:[#allocation2 + $0x198] sm:$0xff]
        %v341 = vld [vmem:[#allocation2 + $0x1a0] sm:$0xff]
        %v342 = vld [vmem:[#allocation2 + $0x1a8] sm:$0xff]
        %v343 = vld [vmem:[#allocation2 + $0x1b0] sm:$0xff]
        %v344 = vld [vmem:[#allocation2 + $0x1b8] sm:$0xff]
        %v345 = vld [vmem:[#allocation2 + $0x1c0] sm:$0xff]
        %v346 = vld [vmem:[#allocation2 + $0x1c8] sm:$0xff]
        %v347 = vld [vmem:[#allocation2 + $0x1d0] sm:$0xff]
        %v348 = vld [vmem:[#allocation2 + $0x1d8] sm:$0xff]
        %v349 = vld [vmem:[#allocation2 + $0x1e0] sm:$0xff]
        %v350 = vld [vmem:[#allocation2 + $0x1e8] sm:$0xff]
        %v351 = vld [vmem:[#allocation2 + $0x1f0] sm:$0xff]
        %v352 = vld [vmem:[#allocation2 + $0x1f8] sm:$0xff]
        %v353 = vld [vmem:[#allocation2 + $0x200] sm:$0xff]
        %v354 = vld [vmem:[#allocation2 + $0x208] sm:$0xff]
        %v355 = vld [vmem:[#allocation2 + $0x210] sm:$0xff]
        %v356 = vld [vmem:[#allocation2 + $0x218] sm:$0xff]
        %v357 = vld [vmem:[#allocation2 + $0x220] sm:$0xff]
        %v358 = vld [vmem:[#allocation2 + $0x228] sm:$0xff]
        %v359 = vld [vmem:[#allocation2 + $0x230] sm:$0xff]
        %v360 = vld [vmem:[#allocation2 + $0x238] sm:$0xff]
        %v361 = vld [vmem:[#allocation2 + $0x240] sm:$0xff]
        %v362 = vld [vmem:[#allocation2 + $0x248] sm:$0xff]
        %v363 = vld [vmem:[#allocation2 + $0x250] sm:$0xff]
        %v364 = vld [vmem:[#allocation2 + $0x258] sm:$0xff]
        %v365 = vld [vmem:[#allocation2 + $0x260] sm:$0xff]
        %v366 = vld [vmem:[#allocation2 + $0x268] sm:$0xff]
        %v367 = vld [vmem:[#allocation2 + $0x270] sm:$0xff]
        %v368 = vld [vmem:[#allocation2 + $0x278] sm:$0xff]
        %v369 = vld [vmem:[#allocation2 + $0x280] sm:$0xff]
        %v370 = vld [vmem:[#allocation2 + $0x288] sm:$0xff]
        %v371 = vld [vmem:[#allocation2 + $0x290] sm:$0xff]
        %v372 = vld [vmem:[#allocation2 + $0x298] sm:$0xff]
        %v373 = vld [vmem:[#allocation2 + $0x2a0] sm:$0xff]
        %v374 = vld [vmem:[#allocation2 + $0x2a8] sm:$0xff]
        %v375 = vld [vmem:[#allocation2 + $0x2b0] sm:$0xff]
        %v376 = vld [vmem:[#allocation2 + $0x2b8] sm:$0xff]
        %v377 = vld [vmem:[#allocation2 + $0x2c0] sm:$0xff]
        %v378 = vld [vmem:[#allocation2 + $0x2c8] sm:$0xff]
        %v379 = vld [vmem:[#allocation2 + $0x2d0] sm:$0xff]
        %v380 = vld [vmem:[#allocation2 + $0x2d8] sm:$0xff]
        %v381 = vld [vmem:[#allocation2 + $0x2e0] sm:$0xff]
        %v382 = vld [vmem:[#allocation2 + $0x2e8] sm:$0xff]
        %v383 = vld [vmem:[#allocation2 + $0x2f0] sm:$0xff]
        %v384 = vld [vmem:[#allocation2 + $0x2f8] sm:$0xff]
        %v385 = vld [vmem:[#allocation2 + $0x300] sm:$0xff]
        %v386 = vld [vmem:[#allocation2 + $0x308] sm:$0xff]
        %v387 = vld [vmem:[#allocation2 + $0x310] sm:$0xff]
        %v388 = vld [vmem:[#allocation2 + $0x318] sm:$0xff]
        %v389 = vld [vmem:[#allocation2 + $0x320] sm:$0xff]
        %v390 = vld [vmem:[#allocation2 + $0x328] sm:$0xff]
        %v391 = vld [vmem:[#allocation2 + $0x330] sm:$0xff]
        %v392 = vld [vmem:[#allocation2 + $0x338] sm:$0xff]
        %v393 = vld [vmem:[#allocation2 + $0x340] sm:$0xff]
        %v394 = vld [vmem:[#allocation2 + $0x348] sm:$0xff]
        %v395 = vld [vmem:[#allocation2 + $0x350] sm:$0xff]
        %v396 = vld [vmem:[#allocation2 + $0x358] sm:$0xff]
        %v397 = vld [vmem:[#allocation2 + $0x360] sm:$0xff]
        %v398 = vld [vmem:[#allocation2 + $0x368] sm:$0xff]
        %v399 = vld [vmem:[#allocation2 + $0x370] sm:$0xff]
        %v400 = vld [vmem:[#allocation2 + $0x378] sm:$0xff]
        %v401 = vld [vmem:[#allocation2 + $0x380] sm:$0xff]
        %v402 = vld [vmem:[#allocation2 + $0x388] sm:$0xff]
        %v403 = vld [vmem:[#allocation2 + $0x390] sm:$0xff]
        %v404 = vld [vmem:[#allocation2 + $0x398] sm:$0xff]
        %v405 = vld [vmem:[#allocation2 + $0x3a0] sm:$0xff]
        %v406 = vld [vmem:[#allocation2 + $0x3a8] sm:$0xff]
        %v407 = vld [vmem:[#allocation2 + $0x3b0] sm:$0xff]
        %v408 = vld [vmem:[#allocation2 + $0x3b8] sm:$0xff]
        %v409 = vld [vmem:[#allocation2 + $0x3c0] sm:$0xff]
        %v410 = vld [vmem:[#allocation2 + $0x3c8] sm:$0xff]
        %v411 = vld [vmem:[#allocation2 + $0x3d0] sm:$0xff]
        %v412 = vld [vmem:[#allocation2 + $0x3d8] sm:$0xff]
        %v413 = vld [vmem:[#allocation2 + $0x3e0] sm:$0xff]
        %v414 = vld [vmem:[#allocation2 + $0x3e8] sm:$0xff]
        %v415 = vld [vmem:[#allocation2 + $0x3f0] sm:$0xff]
        %v416 = vld [vmem:[#allocation2 + $0x3f8] sm:$0xff]
        %v417 = vld [vmem:[#allocation2 + $0x400] sm:$0xff]
        %v418 = vld [vmem:[#allocation2 + $0x408] sm:$0xff]
        %v419 = vld [vmem:[#allocation2 + $0x410] sm:$0xff]
        %v420 = vld [vmem:[#allocation2 + $0x418] sm:$0xff]
        %v421 = vld [vmem:[#allocation2 + $0x420] sm:$0xff]
        %v422 = vld [vmem:[#allocation2 + $0x428] sm:$0xff]
        %v423 = vld [vmem:[#allocation2 + $0x430] sm:$0xff]
        %v424 = vld [vmem:[#allocation2 + $0x438] sm:$0xff]
        %v425 = vld [vmem:[#allocation2 + $0x440] sm:$0xff]
        %v426 = vld [vmem:[#allocation2 + $0x448] sm:$0xff]
        %v427 = vld [vmem:[#allocation2 + $0x450] sm:$0xff]
        %v428 = vld [vmem:[#allocation2 + $0x458] sm:$0xff]
        %v429 = vld [vmem:[#allocation2 + $0x460] sm:$0xff]
        %v430 = vld [vmem:[#allocation2 + $0x468] sm:$0xff]
        %v431 = vld [vmem:[#allocation2 + $0x470] sm:$0xff]
        %v432 = vld [vmem:[#allocation2 + $0x478] sm:$0xff]
        %v433 = vld [vmem:[#allocation2 + $0x480] sm:$0xff]
        %v434 = vld [vmem:[#allocation2 + $0x488] sm:$0xff]
        %v435 = vld [vmem:[#allocation2 + $0x490] sm:$0xff]
        %v436 = vld [vmem:[#allocation2 + $0x498] sm:$0xff]
        %v437 = vld [vmem:[#allocation2 + $0x4a0] sm:$0xff]
        %v438 = vld [vmem:[#allocation2 + $0x4a8] sm:$0xff]
        %v439 = vld [vmem:[#allocation2 + $0x4b0] sm:$0xff]
        %v440 = vld [vmem:[#allocation2 + $0x4b8] sm:$0xff]
        %v441 = vld [vmem:[#allocation2 + $0x4c0] sm:$0xff]
        %v442 = vld [vmem:[#allocation2 + $0x4c8] sm:$0xff]
        %v443 = vld [vmem:[#allocation2 + $0x4d0] sm:$0xff]
        %v444 = vld [vmem:[#allocation2 + $0x4d8] sm:$0xff]
        %v445 = vld [vmem:[#allocation2 + $0x4e0] sm:$0xff]
        %v446 = vld [vmem:[#allocation2 + $0x4e8] sm:$0xff]
        %v447 = vld [vmem:[#allocation2 + $0x4f0] sm:$0xff]
        %v448 = vld [vmem:[#allocation2 + $0x4f8] sm:$0xff]
        %v449 = vld [vmem:[#allocation2 + $0x500] sm:$0xff]
        %v450 = vld [vmem:[#allocation2 + $0x508] sm:$0xff]
        %v451 = vld [vmem:[#allocation2 + $0x510] sm:$0xff]
        %v452 = vld [vmem:[#allocation2 + $0x518] sm:$0xff]
        %v453 = vld [vmem:[#allocation2 + $0x520] sm:$0xff]
        %v454 = vld [vmem:[#allocation2 + $0x528] sm:$0xff]
        %v455 = vld [vmem:[#allocation2 + $0x530] sm:$0xff]
        %v456 = vld [vmem:[#allocation2 + $0x538] sm:$0xff]
        %v457 = vld [vmem:[#allocation2 + $0x540] sm:$0xff]
        %v458 = vld [vmem:[#allocation2 + $0x548] sm:$0xff]
        %v459 = vld [vmem:[#allocation2 + $0x550] sm:$0xff]
        %v460 = vld [vmem:[#allocation2 + $0x558] sm:$0xff]
        %v461 = vld [vmem:[#allocation2 + $0x560] sm:$0xff]
        %v462 = vld [vmem:[#allocation2 + $0x568] sm:$0xff]
        %v463 = vld [vmem:[#allocation2 + $0x570] sm:$0xff]
        %v464 = vld [vmem:[#allocation2 + $0x578] sm:$0xff]
        %v465 = vld [vmem:[#allocation2 + $0x580] sm:$0xff]
        %v466 = vld [vmem:[#allocation2 + $0x588] sm:$0xff]
        %v467 = vld [vmem:[#allocation2 + $0x590] sm:$0xff]
        %v468 = vld [vmem:[#allocation2 + $0x598] sm:$0xff]
        %v469 = vld [vmem:[#allocation2 + $0x5a0] sm:$0xff]
        %v470 = vld [vmem:[#allocation2 + $0x5a8] sm:$0xff]
        %v471 = vld [vmem:[#allocation2 + $0x5b0] sm:$0xff]
        %v472 = vld [vmem:[#allocation2 + $0x5b8] sm:$0xff]
        %v473 = vld [vmem:[#allocation2 + $0x5c0] sm:$0xff]
        %v474 = vld [vmem:[#allocation2 + $0x5c8] sm:$0xff]
        %v475 = vld [vmem:[#allocation2 + $0x5d0] sm:$0xff]
        %v476 = vld [vmem:[#allocation2 + $0x5d8] sm:$0xff]
        %v477 = vld [vmem:[#allocation2 + $0x5e0] sm:$0xff]
        %v478 = vld [vmem:[#allocation2 + $0x5e8] sm:$0xff]
        %v479 = vld [vmem:[#allocation2 + $0x5f0] sm:$0xff]
        %v480 = vld [vmem:[#allocation2 + $0x5f8] sm:$0xff]
        %v481 = vld [vmem:[#allocation2 + $0x600] sm:$0xff]
        %v482 = vld [vmem:[#allocation2 + $0x608] sm:$0xff]
        %v483 = vld [vmem:[#allocation2 + $0x610] sm:$0xff]
        %v484 = vld [vmem:[#allocation2 + $0x618] sm:$0xff]
        %v485 = vld [vmem:[#allocation2 + $0x620] sm:$0xff]
        %v486 = vld [vmem:[#allocation2 + $0x628] sm:$0xff]
        %v487 = vld [vmem:[#allocation2 + $0x630] sm:$0xff]
        %v488 = vld [vmem:[#allocation2 + $0x638] sm:$0xff]
        %v489 = vld [vmem:[#allocation2 + $0x640] sm:$0xff]
        %v490 = vld [vmem:[#allocation2 + $0x648] sm:$0xff]
        %v491 = vld [vmem:[#allocation2 + $0x650] sm:$0xff]
        %v492 = vld [vmem:[#allocation2 + $0x658] sm:$0xff]
        %v493 = vld [vmem:[#allocation2 + $0x660] sm:$0xff]
        %v494 = vld [vmem:[#allocation2 + $0x668] sm:$0xff]
        %v495 = vld [vmem:[#allocation2 + $0x670] sm:$0xff]
        %v496 = vld [vmem:[#allocation2 + $0x678] sm:$0xff]
        %v497 = vld [vmem:[#allocation2 + $0x680] sm:$0xff]
        %v498 = vld [vmem:[#allocation2 + $0x688] sm:$0xff]
        %v499 = vld [vmem:[#allocation2 + $0x690] sm:$0xff]
        %v500 = vld [vmem:[#allocation2 + $0x698] sm:$0xff]
        %v501 = vld [vmem:[#allocation2 + $0x6a0] sm:$0xff]
        %v502 = vld [vmem:[#allocation2 + $0x6a8] sm:$0xff]
        %v503 = vld [vmem:[#allocation2 + $0x6b0] sm:$0xff]
        %v504 = vld [vmem:[#allocation2 + $0x6b8] sm:$0xff]
        %v505 = vld [vmem:[#allocation2 + $0x6c0] sm:$0xff]
        %v506 = vld [vmem:[#allocation2 + $0x6c8] sm:$0xff]
        %v507 = vld [vmem:[#allocation2 + $0x6d0] sm:$0xff]
        %v508 = vld [vmem:[#allocation2 + $0x6d8] sm:$0xff]
        %v509 = vld [vmem:[#allocation2 + $0x6e0] sm:$0xff]
        %v510 = vld [vmem:[#allocation2 + $0x6e8] sm:$0xff]
        %v511 = vld [vmem:[#allocation2 + $0x6f0] sm:$0xff]
        %v512 = vld [vmem:[#allocation2 + $0x6f8] sm:$0xff]
        %v513 = vld [vmem:[#allocation2 + $0x700] sm:$0xff]
        %v514 = vld [vmem:[#allocation2 + $0x708] sm:$0xff]
        %v515 = vld [vmem:[#allocation2 + $0x710] sm:$0xff]
        %v516 = vld [vmem:[#allocation2 + $0x718] sm:$0xff]
        %v517 = vld [vmem:[#allocation2 + $0x720] sm:$0xff]
        %v518 = vld [vmem:[#allocation2 + $0x728] sm:$0xff]
        %v519 = vld [vmem:[#allocation2 + $0x730] sm:$0xff]
        %v520 = vld [vmem:[#allocation2 + $0x738] sm:$0xff]
        %v521 = vld [vmem:[#allocation2 + $0x740] sm:$0xff]
        %v522 = vld [vmem:[#allocation2 + $0x748] sm:$0xff]
        %v523 = vld [vmem:[#allocation2 + $0x750] sm:$0xff]
        %v524 = vld [vmem:[#allocation2 + $0x758] sm:$0xff]
        %v525 = vld [vmem:[#allocation2 + $0x760] sm:$0xff]
        %v526 = vld [vmem:[#allocation2 + $0x768] sm:$0xff]
        %v527 = vld [vmem:[#allocation2 + $0x770] sm:$0xff]
        %v528 = vld [vmem:[#allocation2 + $0x778] sm:$0xff]
        %v529 = vld [vmem:[#allocation2 + $0x780] sm:$0xff]
        %v530 = vld [vmem:[#allocation2 + $0x788] sm:$0xff]
        %v531 = vld [vmem:[#allocation2 + $0x790] sm:$0xff]
        %v532 = vld [vmem:[#allocation2 + $0x798] sm:$0xff]
        %v533 = vld [vmem:[#allocation2 + $0x7a0] sm:$0xff]
        %v534 = vld [vmem:[#allocation2 + $0x7a8] sm:$0xff]
        %v535 = vld [vmem:[#allocation2 + $0x7b0] sm:$0xff]
        %v536 = vld [vmem:[#allocation2 + $0x7b8] sm:$0xff]
        %v537 = vld [vmem:[#allocation2 + $0x7c0] sm:$0xff]
        %v538 = vld [vmem:[#allocation2 + $0x7c8] sm:$0xff]
        %v539 = vld [vmem:[#allocation2 + $0x7d0] sm:$0xff]
        %v540 = vld [vmem:[#allocation2 + $0x7d8] sm:$0xff]
        %v541 = vld [vmem:[#allocation2 + $0x7e0] sm:$0xff]
        %v542 = vld [vmem:[#allocation2 + $0x7e8] sm:$0xff]
        %v543 = vld [vmem:[#allocation2 + $0x7f0] sm:$0xff]
        %v544 = vld [vmem:[#allocation2 + $0x7f8] sm:$0xff]
        %v545 = vld [vmem:[#allocation2 + $0x800] sm:$0xff]
        %v546 = vld [vmem:[#allocation2 + $0x808] sm:$0xff]
        %v547 = vld [vmem:[#allocation2 + $0x810] sm:$0xff]
        %v548 = vld [vmem:[#allocation2 + $0x818] sm:$0xff]
        %v549 = vld [vmem:[#allocation2 + $0x820] sm:$0xff]
        %v550 = vld [vmem:[#allocation2 + $0x828] sm:$0xff]
        %v551 = vld [vmem:[#allocation2 + $0x830] sm:$0xff]
        %v552 = vld [vmem:[#allocation2 + $0x838] sm:$0xff]
        %v553 = vld [vmem:[#allocation2 + $0x840] sm:$0xff]
        %v554 = vld [vmem:[#allocation2 + $0x848] sm:$0xff]
        %v555 = vld [vmem:[#allocation2 + $0x850] sm:$0xff]
        %v556 = vld [vmem:[#allocation2 + $0x858] sm:$0xff]
        %v557 = vld [vmem:[#allocation2 + $0x860] sm:$0xff]
        %v558 = vld [vmem:[#allocation2 + $0x868] sm:$0xff]
        %v559 = vld [vmem:[#allocation2 + $0x870] sm:$0xff]
        %v560 = vld [vmem:[#allocation2 + $0x878] sm:$0xff]
        %v561 = vld [vmem:[#allocation2 + $0x880] sm:$0xff]
        %v562 = vld [vmem:[#allocation2 + $0x888] sm:$0xff]
        %v563 = vld [vmem:[#allocation2 + $0x890] sm:$0xff]
        %v564 = vld [vmem:[#allocation2 + $0x898] sm:$0xff]
        %v565 = vld [vmem:[#allocation2 + $0x8a0] sm:$0xff]
        %v566 = vld [vmem:[#allocation2 + $0x8a8] sm:$0xff]
        %v567 = vld [vmem:[#allocation2 + $0x8b0] sm:$0xff]
        %v568 = vld [vmem:[#allocation2 + $0x8b8] sm:$0xff]
        %v569 = vld [vmem:[#allocation2 + $0x8c0] sm:$0xff]
        %v570 = vld [vmem:[#allocation2 + $0x8c8] sm:$0xff]
        %v571 = vld [vmem:[#allocation2 + $0x8d0] sm:$0xff]
        %v572 = vld [vmem:[#allocation2 + $0x8d8] sm:$0xff]
        %v573 = vld [vmem:[#allocation2 + $0x8e0] sm:$0xff]
        %v574 = vld [vmem:[#allocation2 + $0x8e8] sm:$0xff]
        %v575 = vld [vmem:[#allocation2 + $0x8f0] sm:$0xff]
        %v576 = vld [vmem:[#allocation2 + $0x8f8] sm:$0xff]
        %v577 = vld [vmem:[#allocation2 + $0x900] sm:$0xff]
        %v578 = vld [vmem:[#allocation2 + $0x908] sm:$0xff]
        %v579 = vld [vmem:[#allocation2 + $0x910] sm:$0xff]
        %v580 = vld [vmem:[#allocation2 + $0x918] sm:$0xff]
        %v581 = vld [vmem:[#allocation2 + $0x920] sm:$0xff]
        %v582 = vld [vmem:[#allocation2 + $0x928] sm:$0xff]
        %v583 = vld [vmem:[#allocation2 + $0x930] sm:$0xff]
        %v584 = vld [vmem:[#allocation2 + $0x938] sm:$0xff]
        %v585 = vld [vmem:[#allocation2 + $0x940] sm:$0xff]
        %v586 = vld [vmem:[#allocation2 + $0x948] sm:$0xff]
        %v587 = vld [vmem:[#allocation2 + $0x950] sm:$0xff]
        %v588 = vld [vmem:[#allocation2 + $0x958] sm:$0xff]
        %v589 = vld [vmem:[#allocation2 + $0x960] sm:$0xff]
        %v590 = vld [vmem:[#allocation2 + $0x968] sm:$0xff]
        %v591 = vld [vmem:[#allocation2 + $0x970] sm:$0xff]
        %v592 = vld [vmem:[#allocation2 + $0x978] sm:$0xff]
        %v593 = vld [vmem:[#allocation2 + $0x980] sm:$0xff]
        %v594 = vld [vmem:[#allocation2 + $0x988] sm:$0xff]
        %v595 = vld [vmem:[#allocation2 + $0x990] sm:$0xff]
        %v596 = vld [vmem:[#allocation2 + $0x998] sm:$0xff]
        %v597 = vld [vmem:[#allocation2 + $0x9a0] sm:$0xff]
        %v598 = vld [vmem:[#allocation2 + $0x9a8] sm:$0xff]
        %v599 = vld [vmem:[#allocation2 + $0x9b0] sm:$0xff]
        %v600 = vld [vmem:[#allocation2 + $0x9b8] sm:$0xff]
        %v601 = vld [vmem:[#allocation2 + $0x9c0] sm:$0xff]
        %v602 = vld [vmem:[#allocation2 + $0x9c8] sm:$0xff]
        %v603 = vld [vmem:[#allocation2 + $0x9d0] sm:$0xff]
        %v604 = vld [vmem:[#allocation2 + $0x9d8] sm:$0xff]
        %v605 = vld [vmem:[#allocation2 + $0x9e0] sm:$0xff]
        %v606 = vld [vmem:[#allocation2 + $0x9e8] sm:$0xff]
        %v607 = vld [vmem:[#allocation2 + $0x9f0] sm:$0xff]
        %v608 = vld [vmem:[#allocation2 + $0x9f8] sm:$0xff]
        %v609 = vld [vmem:[#allocation2 + $0xa00] sm:$0xff]
        %v610 = vld [vmem:[#allocation2 + $0xa08] sm:$0xff]
        %v611 = vld [vmem:[#allocation2 + $0xa10] sm:$0xff]
        %v612 = vld [vmem:[#allocation2 + $0xa18] sm:$0xff]
        %v613 = vld [vmem:[#allocation2 + $0xa20] sm:$0xff]
        %v614 = vld [vmem:[#allocation2 + $0xa28] sm:$0xff]
        %v615 = vld [vmem:[#allocation2 + $0xa30] sm:$0xff]
        %v616 = vld [vmem:[#allocation2 + $0xa38] sm:$0xff]
        %v617 = vld [vmem:[#allocation2 + $0xa40] sm:$0xff]
        %v618 = vld [vmem:[#allocation2 + $0xa48] sm:$0xff]
        %v619 = vld [vmem:[#allocation2 + $0xa50] sm:$0xff]
        %v620 = vld [vmem:[#allocation2 + $0xa58] sm:$0xff]
        %v621 = vld [vmem:[#allocation2 + $0xa60] sm:$0xff]
        %v622 = vld [vmem:[#allocation2 + $0xa68] sm:$0xff]
        %v623 = vld [vmem:[#allocation2 + $0xa70] sm:$0xff]
        %v624 = vld [vmem:[#allocation2 + $0xa78] sm:$0xff]
        %v625 = vld [vmem:[#allocation2 + $0xa80] sm:$0xff]
        %v626 = vld [vmem:[#allocation2 + $0xa88] sm:$0xff]
        %v627 = vld [vmem:[#allocation2 + $0xa90] sm:$0xff]
        %v628 = vld [vmem:[#allocation2 + $0xa98] sm:$0xff]
        %v629 = vld [vmem:[#allocation2 + $0xaa0] sm:$0xff]
        %v630 = vld [vmem:[#allocation2 + $0xaa8] sm:$0xff]
        %v631 = vld [vmem:[#allocation2 + $0xab0] sm:$0xff]
        %v632 = vld [vmem:[#allocation2 + $0xab8] sm:$0xff]
        %v633 = vld [vmem:[#allocation2 + $0xac0] sm:$0xff]
        %v634 = vld [vmem:[#allocation2 + $0xac8] sm:$0xff]
        %v635 = vld [vmem:[#allocation2 + $0xad0] sm:$0xff]
        %v636 = vld [vmem:[#allocation2 + $0xad8] sm:$0xff]
        %v637 = vld [vmem:[#allocation2 + $0xae0] sm:$0xff]
        %v638 = vld [vmem:[#allocation2 + $0xae8] sm:$0xff]
        %v639 = vld [vmem:[#allocation2 + $0xaf0] sm:$0xff]
        %v640 = vld [vmem:[#allocation2 + $0xaf8] sm:$0xff]
        %v641 = vld [vmem:[#allocation2 + $0xb00] sm:$0xff]
        %v642 = vld [vmem:[#allocation2 + $0xb08] sm:$0xff]
        %v643 = vld [vmem:[#allocation2 + $0xb10] sm:$0xff]
        %v644 = vld [vmem:[#allocation2 + $0xb18] sm:$0xff]
        %v645 = vld [vmem:[#allocation2 + $0xb20] sm:$0xff]
        %v646 = vld [vmem:[#allocation2 + $0xb28] sm:$0xff]
        %v647 = vld [vmem:[#allocation2 + $0xb30] sm:$0xff]
        %v648 = vld [vmem:[#allocation2 + $0xb38] sm:$0xff]
        %v649 = vld [vmem:[#allocation2 + $0xb40] sm:$0xff]
        %v650 = vld [vmem:[#allocation2 + $0xb48] sm:$0xff]
        %v651 = vld [vmem:[#allocation2 + $0xb50] sm:$0xff]
        %v652 = vld [vmem:[#allocation2 + $0xb58] sm:$0xff]
        %v653 = vld [vmem:[#allocation2 + $0xb60] sm:$0xff]
        %v654 = vld [vmem:[#allocation2 + $0xb68] sm:$0xff]
        %v655 = vld [vmem:[#allocation2 + $0xb70] sm:$0xff]
        %v656 = vld [vmem:[#allocation2 + $0xb78] sm:$0xff]
        %v657 = vld [vmem:[#allocation2 + $0xb80] sm:$0xff]
        %v658 = vld [vmem:[#allocation2 + $0xb88] sm:$0xff]
        %v659 = vld [vmem:[#allocation2 + $0xb90] sm:$0xff]
        %v660 = vld [vmem:[#allocation2 + $0xb98] sm:$0xff]
        %v661 = vld [vmem:[#allocation2 + $0xba0] sm:$0xff]
        %v662 = vld [vmem:[#allocation2 + $0xba8] sm:$0xff]
        %v663 = vld [vmem:[#allocation2 + $0xbb0] sm:$0xff]
        %v664 = vld [vmem:[#allocation2 + $0xbb8] sm:$0xff]
        %v665 = vld [vmem:[#allocation2 + $0xbc0] sm:$0xff]
        %v666 = vld [vmem:[#allocation2 + $0xbc8] sm:$0xff]
        %v667 = vld [vmem:[#allocation2 + $0xbd0] sm:$0xff]
        %v668 = vld [vmem:[#allocation2 + $0xbd8] sm:$0xff]
        %v669 = vld [vmem:[#allocation2 + $0xbe0] sm:$0xff]
        %v670 = vld [vmem:[#allocation2 + $0xbe8] sm:$0xff]
        %v671 = vld [vmem:[#allocation2 + $0xbf0] sm:$0xff]
        %v672 = vld [vmem:[#allocation2 + $0xbf8] sm:$0xff]
        %v673 = vld [vmem:[#allocation2 + $0xc00] sm:$0xff]
        %v674 = vld [vmem:[#allocation2 + $0xc08] sm:$0xff]
        %v675 = vld [vmem:[#allocation2 + $0xc10] sm:$0xff]
        %v676 = vld [vmem:[#allocation2 + $0xc18] sm:$0xff]
        %v677 = vld [vmem:[#allocation2 + $0xc20] sm:$0xff]
        %v678 = vld [vmem:[#allocation2 + $0xc28] sm:$0xff]
        %v679 = vld [vmem:[#allocation2 + $0xc30] sm:$0xff]
        %v680 = vld [vmem:[#allocation2 + $0xc38] sm:$0xff]
        %v681 = vld [vmem:[#allocation2 + $0xc40] sm:$0xff]
        %v682 = vld [vmem:[#allocation2 + $0xc48] sm:$0xff]
        %v683 = vld [vmem:[#allocation2 + $0xc50] sm:$0xff]
        %v684 = vld [vmem:[#allocation2 + $0xc58] sm:$0xff]
        %v685 = vld [vmem:[#allocation2 + $0xc60] sm:$0xff]
        %v686 = vld [vmem:[#allocation2 + $0xc68] sm:$0xff]
        %v687 = vld [vmem:[#allocation2 + $0xc70] sm:$0xff]
        %v688 = vld [vmem:[#allocation2 + $0xc78] sm:$0xff]
        %v689 = vld [vmem:[#allocation2 + $0xc80] sm:$0xff]
        %v690 = vld [vmem:[#allocation2 + $0xc88] sm:$0xff]
        %v691 = vld [vmem:[#allocation2 + $0xc90] sm:$0xff]
        %v692 = vld [vmem:[#allocation2 + $0xc98] sm:$0xff]
        %v693 = vld [vmem:[#allocation2 + $0xca0] sm:$0xff]
        %v694 = vld [vmem:[#allocation2 + $0xca8] sm:$0xff]
        %v695 = vld [vmem:[#allocation2 + $0xcb0] sm:$0xff]
        %v696 = vld [vmem:[#allocation2 + $0xcb8] sm:$0xff]
        %v697 = vld [vmem:[#allocation2 + $0xcc0] sm:$0xff]
        %v698 = vld [vmem:[#allocation2 + $0xcc8] sm:$0xff]
        %v699 = vld [vmem:[#allocation2 + $0xcd0] sm:$0xff]
        %v700 = vld [vmem:[#allocation2 + $0xcd8] sm:$0xff]
        %v701 = vld [vmem:[#allocation2 + $0xce0] sm:$0xff]
        %v702 = vld [vmem:[#allocation2 + $0xce8] sm:$0xff]
        %v703 = vld [vmem:[#allocation2 + $0xcf0] sm:$0xff]
        %v704 = vld [vmem:[#allocation2 + $0xcf8] sm:$0xff]
        %v705 = vld [vmem:[#allocation2 + $0xd00] sm:$0xff]
        %v706 = vld [vmem:[#allocation2 + $0xd08] sm:$0xff]
        %v707 = vld [vmem:[#allocation2 + $0xd10] sm:$0xff]
        %v708 = vld [vmem:[#allocation2 + $0xd18] sm:$0xff]
        %v709 = vld [vmem:[#allocation2 + $0xd20] sm:$0xff]
        %v710 = vld [vmem:[#allocation2 + $0xd28] sm:$0xff]
        %v711 = vld [vmem:[#allocation2 + $0xd30] sm:$0x11]
        %v712 = vld [vmem:[#allocation2 + $0xd38] sm:$0x11]
        %v1137 = vunpack.c.l.b16 %v289
        %v1138 = vunpack.c.h.b16 %v289
        %v1139 = vunpack.c.l.b16 %v290
        %v1140 = vunpack.c.h.b16 %v290
        %v1141 = vunpack.c.l.b16 %v291
        %v1142 = vunpack.c.h.b16 %v291
        %v1143 = vunpack.c.l.b16 %v292
        %v1144 = vunpack.c.h.b16 %v292
        %v1145 = vunpack.c.l.b16 %v293
        %v1146 = vunpack.c.h.b16 %v293
        %v1147 = vunpack.c.l.b16 %v294
        %v1148 = vunpack.c.h.b16 %v294
        %v1149 = vunpack.c.l.b16 %v295
        %v1150 = vunpack.c.h.b16 %v295
        %v1151 = vunpack.c.l.b16 %v296
        %v1152 = vunpack.c.h.b16 %v296
        %v1153 = vunpack.c.l.b16 %v297
        %v1154 = vunpack.c.h.b16 %v297
        %v1155 = vunpack.c.l.b16 %v298
        %v1156 = vunpack.c.h.b16 %v298
        %v1157 = vunpack.c.l.b16 %v299
        %v1158 = vunpack.c.h.b16 %v299
        %v1159 = vunpack.c.l.b16 %v300
        %v1160 = vunpack.c.h.b16 %v300
        %v1161 = vunpack.c.l.b16 %v301
        %v1162 = vunpack.c.h.b16 %v301
        %v1163 = vunpack.c.l.b16 %v302
        %v1164 = vunpack.c.h.b16 %v302
        %v1165 = vunpack.c.l.b16 %v303
        %v1166 = vunpack.c.h.b16 %v303
        %v1167 = vunpack.c.l.b16 %v304
        %v1168 = vunpack.c.h.b16 %v304
        %v1169 = vunpack.c.l.b16 %v305
        %v1170 = vunpack.c.h.b16 %v305
        %v1171 = vunpack.c.l.b16 %v306
        %v1172 = vunpack.c.h.b16 %v306
        %v1173 = vunpack.c.l.b16 %v307
        %v1174 = vunpack.c.h.b16 %v307
        %v1175 = vunpack.c.l.b16 %v308
        %v1176 = vunpack.c.h.b16 %v308
        %v1177 = vunpack.c.l.b16 %v309
        %v1178 = vunpack.c.h.b16 %v309
        %v1179 = vunpack.c.l.b16 %v310
        %v1180 = vunpack.c.h.b16 %v310
        %v1181 = vunpack.c.l.b16 %v311
        %v1182 = vunpack.c.h.b16 %v311
        %v1183 = vunpack.c.l.b16 %v312
        %v1184 = vunpack.c.h.b16 %v312
        %v1185 = vunpack.c.l.b16 %v313
        %v1186 = vunpack.c.h.b16 %v313
        %v1187 = vunpack.c.l.b16 %v314
        %v1188 = vunpack.c.h.b16 %v314
        %v1189 = vunpack.c.l.b16 %v315
        %v1190 = vunpack.c.h.b16 %v315
        %v1191 = vunpack.c.l.b16 %v316
        %v1192 = vunpack.c.h.b16 %v316
        %v1193 = vunpack.c.l.b16 %v317
        %v1194 = vunpack.c.h.b16 %v317
        %v1195 = vunpack.c.l.b16 %v318
        %v1196 = vunpack.c.h.b16 %v318
        %v1197 = vunpack.c.l.b16 %v319
        %v1198 = vunpack.c.h.b16 %v319
        %v1199 = vunpack.c.l.b16 %v320
        %v1200 = vunpack.c.h.b16 %v320
        %v1201 = vunpack.c.l.b16 %v321
        %v1202 = vunpack.c.h.b16 %v321
        %v1203 = vunpack.c.l.b16 %v322
        %v1204 = vunpack.c.h.b16 %v322
        %v1205 = vunpack.c.l.b16 %v323
        %v1206 = vunpack.c.h.b16 %v323
        %v1207 = vunpack.c.l.b16 %v324
        %v1208 = vunpack.c.h.b16 %v324
        %v1209 = vunpack.c.l.b16 %v325
        %v1210 = vunpack.c.h.b16 %v325
        %v1211 = vunpack.c.l.b16 %v326
        %v1212 = vunpack.c.h.b16 %v326
        %v1213 = vunpack.c.l.b16 %v327
        %v1214 = vunpack.c.h.b16 %v327
        %v1215 = vunpack.c.l.b16 %v328
        %v1216 = vunpack.c.h.b16 %v328
        %v1217 = vunpack.c.l.b16 %v329
        %v1218 = vunpack.c.h.b16 %v329
        %v1219 = vunpack.c.l.b16 %v330
        %v1220 = vunpack.c.h.b16 %v330
        %v1221 = vunpack.c.l.b16 %v331
        %v1222 = vunpack.c.h.b16 %v331
        %v1223 = vunpack.c.l.b16 %v332
        %v1224 = vunpack.c.h.b16 %v332
        %v1225 = vunpack.c.l.b16 %v333
        %v1226 = vunpack.c.h.b16 %v333
        %v1227 = vunpack.c.l.b16 %v334
        %v1228 = vunpack.c.h.b16 %v334
        %v1229 = vunpack.c.l.b16 %v335
        %v1230 = vunpack.c.h.b16 %v335
        %v1231 = vunpack.c.l.b16 %v336
        %v1232 = vunpack.c.h.b16 %v336
        %v1233 = vunpack.c.l.b16 %v337
        %v1234 = vunpack.c.h.b16 %v337
        %v1235 = vunpack.c.l.b16 %v338
        %v1236 = vunpack.c.h.b16 %v338
        %v1237 = vunpack.c.l.b16 %v339
        %v1238 = vunpack.c.h.b16 %v339
        %v1239 = vunpack.c.l.b16 %v340
        %v1240 = vunpack.c.h.b16 %v340
        %v1241 = vunpack.c.l.b16 %v341
        %v1242 = vunpack.c.h.b16 %v341
        %v1243 = vunpack.c.l.b16 %v342
        %v1244 = vunpack.c.h.b16 %v342
        %v1245 = vunpack.c.l.b16 %v343
        %v1246 = vunpack.c.h.b16 %v343
        %v1247 = vunpack.c.l.b16 %v344
        %v1248 = vunpack.c.h.b16 %v344
        %v1249 = vunpack.c.l.b16 %v345
        %v1250 = vunpack.c.h.b16 %v345
        %v1251 = vunpack.c.l.b16 %v346
        %v1252 = vunpack.c.h.b16 %v346
        %v1253 = vunpack.c.l.b16 %v347
        %v1254 = vunpack.c.h.b16 %v347
        %v1255 = vunpack.c.l.b16 %v348
        %v1256 = vunpack.c.h.b16 %v348
        %v1257 = vunpack.c.l.b16 %v349
        %v1258 = vunpack.c.h.b16 %v349
        %v1259 = vunpack.c.l.b16 %v350
        %v1260 = vunpack.c.h.b16 %v350
        %v1261 = vunpack.c.l.b16 %v351
        %v1262 = vunpack.c.h.b16 %v351
        %v1263 = vunpack.c.l.b16 %v352
        %v1264 = vunpack.c.h.b16 %v352
        %v1265 = vunpack.c.l.b16 %v353
        %v1266 = vunpack.c.h.b16 %v353
        %v1267 = vunpack.c.l.b16 %v354
        %v1268 = vunpack.c.h.b16 %v354
        %v1269 = vunpack.c.l.b16 %v355
        %v1270 = vunpack.c.h.b16 %v355
        %v1271 = vunpack.c.l.b16 %v356
        %v1272 = vunpack.c.h.b16 %v356
        %v1273 = vunpack.c.l.b16 %v357
        %v1274 = vunpack.c.h.b16 %v357
        %v1275 = vunpack.c.l.b16 %v358
        %v1276 = vunpack.c.h.b16 %v358
        %v1277 = vunpack.c.l.b16 %v359
        %v1278 = vunpack.c.h.b16 %v359
        %v1279 = vunpack.c.l.b16 %v360
        %v1280 = vunpack.c.h.b16 %v360
        %v1281 = vunpack.c.l.b16 %v361
        %v1282 = vunpack.c.h.b16 %v361
        %v1283 = vunpack.c.l.b16 %v362
        %v1284 = vunpack.c.h.b16 %v362
        %v1285 = vunpack.c.l.b16 %v363
        %v1286 = vunpack.c.h.b16 %v363
        %v1287 = vunpack.c.l.b16 %v364
        %v1288 = vunpack.c.h.b16 %v364
        %v1289 = vunpack.c.l.b16 %v365
        %v1290 = vunpack.c.h.b16 %v365
        %v1291 = vunpack.c.l.b16 %v366
        %v1292 = vunpack.c.h.b16 %v366
        %v1293 = vunpack.c.l.b16 %v367
        %v1294 = vunpack.c.h.b16 %v367
        %v1295 = vunpack.c.l.b16 %v368
        %v1296 = vunpack.c.h.b16 %v368
        %v1297 = vunpack.c.l.b16 %v369
        %v1298 = vunpack.c.h.b16 %v369
        %v1299 = vunpack.c.l.b16 %v370
        %v1300 = vunpack.c.h.b16 %v370
        %v1301 = vunpack.c.l.b16 %v371
        %v1302 = vunpack.c.h.b16 %v371
        %v1303 = vunpack.c.l.b16 %v372
        %v1304 = vunpack.c.h.b16 %v372
        %v1305 = vunpack.c.l.b16 %v373
        %v1306 = vunpack.c.h.b16 %v373
        %v1307 = vunpack.c.l.b16 %v374
        %v1308 = vunpack.c.h.b16 %v374
        %v1309 = vunpack.c.l.b16 %v375
        %v1310 = vunpack.c.h.b16 %v375
        %v1311 = vunpack.c.l.b16 %v376
        %v1312 = vunpack.c.h.b16 %v376
        %v1313 = vunpack.c.l.b16 %v377
        %v1314 = vunpack.c.h.b16 %v377
        %v1315 = vunpack.c.l.b16 %v378
        %v1316 = vunpack.c.h.b16 %v378
        %v1317 = vunpack.c.l.b16 %v379
        %v1318 = vunpack.c.h.b16 %v379
        %v1319 = vunpack.c.l.b16 %v380
        %v1320 = vunpack.c.h.b16 %v380
        %v1321 = vunpack.c.l.b16 %v381
        %v1322 = vunpack.c.h.b16 %v381
        %v1323 = vunpack.c.l.b16 %v382
        %v1324 = vunpack.c.h.b16 %v382
        %v1325 = vunpack.c.l.b16 %v383
        %v1326 = vunpack.c.h.b16 %v383
        %v1327 = vunpack.c.l.b16 %v384
        %v1328 = vunpack.c.h.b16 %v384
        %v1329 = vunpack.c.l.b16 %v385
        %v1330 = vunpack.c.h.b16 %v385
        %v1331 = vunpack.c.l.b16 %v386
        %v1332 = vunpack.c.h.b16 %v386
        %v1333 = vunpack.c.l.b16 %v387
        %v1334 = vunpack.c.h.b16 %v387
        %v1335 = vunpack.c.l.b16 %v388
        %v1336 = vunpack.c.h.b16 %v388
        %v1337 = vunpack.c.l.b16 %v389
        %v1338 = vunpack.c.h.b16 %v389
        %v1339 = vunpack.c.l.b16 %v390
        %v1340 = vunpack.c.h.b16 %v390
        %v1341 = vunpack.c.l.b16 %v391
        %v1342 = vunpack.c.h.b16 %v391
        %v1343 = vunpack.c.l.b16 %v392
        %v1344 = vunpack.c.h.b16 %v392
        %v1345 = vunpack.c.l.b16 %v393
        %v1346 = vunpack.c.h.b16 %v393
        %v1347 = vunpack.c.l.b16 %v394
        %v1348 = vunpack.c.h.b16 %v394
        %v1349 = vunpack.c.l.b16 %v395
        %v1350 = vunpack.c.h.b16 %v395
        %v1351 = vunpack.c.l.b16 %v396
        %v1352 = vunpack.c.h.b16 %v396
        %v1353 = vunpack.c.l.b16 %v397
        %v1354 = vunpack.c.h.b16 %v397
        %v1355 = vunpack.c.l.b16 %v398
        %v1356 = vunpack.c.h.b16 %v398
        %v1357 = vunpack.c.l.b16 %v399
        %v1358 = vunpack.c.h.b16 %v399
        %v1359 = vunpack.c.l.b16 %v400
        %v1360 = vunpack.c.h.b16 %v400
        %v1361 = vunpack.c.l.b16 %v401
        %v1362 = vunpack.c.h.b16 %v401
        %v1363 = vunpack.c.l.b16 %v402
        %v1364 = vunpack.c.h.b16 %v402
        %v1365 = vunpack.c.l.b16 %v403
        %v1366 = vunpack.c.h.b16 %v403
        %v1367 = vunpack.c.l.b16 %v404
        %v1368 = vunpack.c.h.b16 %v404
        %v1369 = vunpack.c.l.b16 %v405
        %v1370 = vunpack.c.h.b16 %v405
        %v1371 = vunpack.c.l.b16 %v406
        %v1372 = vunpack.c.h.b16 %v406
        %v1373 = vunpack.c.l.b16 %v407
        %v1374 = vunpack.c.h.b16 %v407
        %v1375 = vunpack.c.l.b16 %v408
        %v1376 = vunpack.c.h.b16 %v408
        %v1377 = vunpack.c.l.b16 %v409
        %v1378 = vunpack.c.h.b16 %v409
        %v1379 = vunpack.c.l.b16 %v410
        %v1380 = vunpack.c.h.b16 %v410
        %v1381 = vunpack.c.l.b16 %v411
        %v1382 = vunpack.c.h.b16 %v411
        %v1383 = vunpack.c.l.b16 %v412
        %v1384 = vunpack.c.h.b16 %v412
        %v1385 = vunpack.c.l.b16 %v413
        %v1386 = vunpack.c.h.b16 %v413
        %v1387 = vunpack.c.l.b16 %v414
        %v1388 = vunpack.c.h.b16 %v414
        %v1389 = vunpack.c.l.b16 %v415
        %v1390 = vunpack.c.h.b16 %v415
        %v1391 = vunpack.c.l.b16 %v416
        %v1392 = vunpack.c.h.b16 %v416
        %v1393 = vunpack.c.l.b16 %v417
        %v1394 = vunpack.c.h.b16 %v417
        %v1395 = vunpack.c.l.b16 %v418
        %v1396 = vunpack.c.h.b16 %v418
        %v1397 = vunpack.c.l.b16 %v419
        %v1398 = vunpack.c.h.b16 %v419
        %v1399 = vunpack.c.l.b16 %v420
        %v1400 = vunpack.c.h.b16 %v420
        %v1401 = vunpack.c.l.b16 %v421
        %v1402 = vunpack.c.h.b16 %v421
        %v1403 = vunpack.c.l.b16 %v422
        %v1404 = vunpack.c.h.b16 %v422
        %v1405 = vunpack.c.l.b16 %v423
        %v1406 = vunpack.c.h.b16 %v423
        %v1407 = vunpack.c.l.b16 %v424
        %v1408 = vunpack.c.h.b16 %v424
        %v1409 = vunpack.c.l.b16 %v425
        %v1410 = vunpack.c.h.b16 %v425
        %v1411 = vunpack.c.l.b16 %v426
        %v1412 = vunpack.c.h.b16 %v426
        %v1413 = vunpack.c.l.b16 %v427
        %v1414 = vunpack.c.h.b16 %v427
        %v1415 = vunpack.c.l.b16 %v428
        %v1416 = vunpack.c.h.b16 %v428
        %v1417 = vunpack.c.l.b16 %v429
        %v1418 = vunpack.c.h.b16 %v429
        %v1419 = vunpack.c.l.b16 %v430
        %v1420 = vunpack.c.h.b16 %v430
        %v1421 = vunpack.c.l.b16 %v431
        %v1422 = vunpack.c.h.b16 %v431
        %v1423 = vunpack.c.l.b16 %v432
        %v1424 = vunpack.c.h.b16 %v432
        %v1425 = vunpack.c.l.b16 %v433
        %v1426 = vunpack.c.h.b16 %v433
        %v1427 = vunpack.c.l.b16 %v434
        %v1428 = vunpack.c.h.b16 %v434
        %v1429 = vunpack.c.l.b16 %v435
        %v1430 = vunpack.c.h.b16 %v435
        %v1431 = vunpack.c.l.b16 %v436
        %v1432 = vunpack.c.h.b16 %v436
        %v1433 = vunpack.c.l.b16 %v437
        %v1434 = vunpack.c.h.b16 %v437
        %v1435 = vunpack.c.l.b16 %v438
        %v1436 = vunpack.c.h.b16 %v438
        %v1437 = vunpack.c.l.b16 %v439
        %v1438 = vunpack.c.h.b16 %v439
        %v1439 = vunpack.c.l.b16 %v440
        %v1440 = vunpack.c.h.b16 %v440
        %v1441 = vunpack.c.l.b16 %v441
        %v1442 = vunpack.c.h.b16 %v441
        %v1443 = vunpack.c.l.b16 %v442
        %v1444 = vunpack.c.h.b16 %v442
        %v1445 = vunpack.c.l.b16 %v443
        %v1446 = vunpack.c.h.b16 %v443
        %v1447 = vunpack.c.l.b16 %v444
        %v1448 = vunpack.c.h.b16 %v444
        %v1449 = vunpack.c.l.b16 %v445
        %v1450 = vunpack.c.h.b16 %v445
        %v1451 = vunpack.c.l.b16 %v446
        %v1452 = vunpack.c.h.b16 %v446
        %v1453 = vunpack.c.l.b16 %v447
        %v1454 = vunpack.c.h.b16 %v447
        %v1455 = vunpack.c.l.b16 %v448
        %v1456 = vunpack.c.h.b16 %v448
        %v1457 = vunpack.c.l.b16 %v449
        %v1458 = vunpack.c.h.b16 %v449
        %v1459 = vunpack.c.l.b16 %v450
        %v1460 = vunpack.c.h.b16 %v450
        %v1461 = vunpack.c.l.b16 %v451
        %v1462 = vunpack.c.h.b16 %v451
        %v1463 = vunpack.c.l.b16 %v452
        %v1464 = vunpack.c.h.b16 %v452
        %v1465 = vunpack.c.l.b16 %v453
        %v1466 = vunpack.c.h.b16 %v453
        %v1467 = vunpack.c.l.b16 %v454
        %v1468 = vunpack.c.h.b16 %v454
        %v1469 = vunpack.c.l.b16 %v455
        %v1470 = vunpack.c.h.b16 %v455
        %v1471 = vunpack.c.l.b16 %v456
        %v1472 = vunpack.c.h.b16 %v456
        %v1473 = vunpack.c.l.b16 %v457
        %v1474 = vunpack.c.h.b16 %v457
        %v1475 = vunpack.c.l.b16 %v458
        %v1476 = vunpack.c.h.b16 %v458
        %v1477 = vunpack.c.l.b16 %v459
        %v1478 = vunpack.c.h.b16 %v459
        %v1479 = vunpack.c.l.b16 %v460
        %v1480 = vunpack.c.h.b16 %v460
        %v1481 = vunpack.c.l.b16 %v461
        %v1482 = vunpack.c.h.b16 %v461
        %v1483 = vunpack.c.l.b16 %v462
        %v1484 = vunpack.c.h.b16 %v462
        %v1485 = vunpack.c.l.b16 %v463
        %v1486 = vunpack.c.h.b16 %v463
        %v1487 = vunpack.c.l.b16 %v464
        %v1488 = vunpack.c.h.b16 %v464
        %v1489 = vunpack.c.l.b16 %v465
        %v1490 = vunpack.c.h.b16 %v465
        %v1491 = vunpack.c.l.b16 %v466
        %v1492 = vunpack.c.h.b16 %v466
        %v1493 = vunpack.c.l.b16 %v467
        %v1494 = vunpack.c.h.b16 %v467
        %v1495 = vunpack.c.l.b16 %v468
        %v1496 = vunpack.c.h.b16 %v468
        %v1497 = vunpack.c.l.b16 %v469
        %v1498 = vunpack.c.h.b16 %v469
        %v1499 = vunpack.c.l.b16 %v470
        %v1500 = vunpack.c.h.b16 %v470
        %v1501 = vunpack.c.l.b16 %v471
        %v1502 = vunpack.c.h.b16 %v471
        %v1503 = vunpack.c.l.b16 %v472
        %v1504 = vunpack.c.h.b16 %v472
        %v1505 = vunpack.c.l.b16 %v473
        %v1506 = vunpack.c.h.b16 %v473
        %v1507 = vunpack.c.l.b16 %v474
        %v1508 = vunpack.c.h.b16 %v474
        %v1509 = vunpack.c.l.b16 %v475
        %v1510 = vunpack.c.h.b16 %v475
        %v1511 = vunpack.c.l.b16 %v476
        %v1512 = vunpack.c.h.b16 %v476
        %v1513 = vunpack.c.l.b16 %v477
        %v1514 = vunpack.c.h.b16 %v477
        %v1515 = vunpack.c.l.b16 %v478
        %v1516 = vunpack.c.h.b16 %v478
        %v1517 = vunpack.c.l.b16 %v479
        %v1518 = vunpack.c.h.b16 %v479
        %v1519 = vunpack.c.l.b16 %v480
        %v1520 = vunpack.c.h.b16 %v480
        %v1521 = vunpack.c.l.b16 %v481
        %v1522 = vunpack.c.h.b16 %v481
        %v1523 = vunpack.c.l.b16 %v482
        %v1524 = vunpack.c.h.b16 %v482
        %v1525 = vunpack.c.l.b16 %v483
        %v1526 = vunpack.c.h.b16 %v483
        %v1527 = vunpack.c.l.b16 %v484
        %v1528 = vunpack.c.h.b16 %v484
        %v1529 = vunpack.c.l.b16 %v485
        %v1530 = vunpack.c.h.b16 %v485
        %v1531 = vunpack.c.l.b16 %v486
        %v1532 = vunpack.c.h.b16 %v486
        %v1533 = vunpack.c.l.b16 %v487
        %v1534 = vunpack.c.h.b16 %v487
        %v1535 = vunpack.c.l.b16 %v488
        %v1536 = vunpack.c.h.b16 %v488
        %v1537 = vunpack.c.l.b16 %v489
        %v1538 = vunpack.c.h.b16 %v489
        %v1539 = vunpack.c.l.b16 %v490
        %v1540 = vunpack.c.h.b16 %v490
        %v1541 = vunpack.c.l.b16 %v491
        %v1542 = vunpack.c.h.b16 %v491
        %v1543 = vunpack.c.l.b16 %v492
        %v1544 = vunpack.c.h.b16 %v492
        %v1545 = vunpack.c.l.b16 %v493
        %v1546 = vunpack.c.h.b16 %v493
        %v1547 = vunpack.c.l.b16 %v494
        %v1548 = vunpack.c.h.b16 %v494
        %v1549 = vunpack.c.l.b16 %v495
        %v1550 = vunpack.c.h.b16 %v495
        %v1551 = vunpack.c.l.b16 %v496
        %v1552 = vunpack.c.h.b16 %v496
        %v1553 = vunpack.c.l.b16 %v497
        %v1554 = vunpack.c.h.b16 %v497
        %v1555 = vunpack.c.l.b16 %v498
        %v1556 = vunpack.c.h.b16 %v498
        %v1557 = vunpack.c.l.b16 %v499
        %v1558 = vunpack.c.h.b16 %v499
        %v1559 = vunpack.c.l.b16 %v500
        %v1560 = vunpack.c.h.b16 %v500
        %v1561 = vunpack.c.l.b16 %v501
        %v1562 = vunpack.c.h.b16 %v501
        %v1563 = vunpack.c.l.b16 %v502
        %v1564 = vunpack.c.h.b16 %v502
        %v1565 = vunpack.c.l.b16 %v503
        %v1566 = vunpack.c.h.b16 %v503
        %v1567 = vunpack.c.l.b16 %v504
        %v1568 = vunpack.c.h.b16 %v504
        %v1569 = vunpack.c.l.b16 %v505
        %v1570 = vunpack.c.h.b16 %v505
        %v1571 = vunpack.c.l.b16 %v506
        %v1572 = vunpack.c.h.b16 %v506
        %v1573 = vunpack.c.l.b16 %v507
        %v1574 = vunpack.c.h.b16 %v507
        %v1575 = vunpack.c.l.b16 %v508
        %v1576 = vunpack.c.h.b16 %v508
        %v1577 = vunpack.c.l.b16 %v509
        %v1578 = vunpack.c.h.b16 %v509
        %v1579 = vunpack.c.l.b16 %v510
        %v1580 = vunpack.c.h.b16 %v510
        %v1581 = vunpack.c.l.b16 %v511
        %v1582 = vunpack.c.h.b16 %v511
        %v1583 = vunpack.c.l.b16 %v512
        %v1584 = vunpack.c.h.b16 %v512
        %v1585 = vunpack.c.l.b16 %v513
        %v1586 = vunpack.c.h.b16 %v513
        %v1587 = vunpack.c.l.b16 %v514
        %v1588 = vunpack.c.h.b16 %v514
        %v1589 = vunpack.c.l.b16 %v515
        %v1590 = vunpack.c.h.b16 %v515
        %v1591 = vunpack.c.l.b16 %v516
        %v1592 = vunpack.c.h.b16 %v516
        %v1593 = vunpack.c.l.b16 %v517
        %v1594 = vunpack.c.h.b16 %v517
        %v1595 = vunpack.c.l.b16 %v518
        %v1596 = vunpack.c.h.b16 %v518
        %v1597 = vunpack.c.l.b16 %v519
        %v1598 = vunpack.c.h.b16 %v519
        %v1599 = vunpack.c.l.b16 %v520
        %v1600 = vunpack.c.h.b16 %v520
        %v1601 = vunpack.c.l.b16 %v521
        %v1602 = vunpack.c.h.b16 %v521
        %v1603 = vunpack.c.l.b16 %v522
        %v1604 = vunpack.c.h.b16 %v522
        %v1605 = vunpack.c.l.b16 %v523
        %v1606 = vunpack.c.h.b16 %v523
        %v1607 = vunpack.c.l.b16 %v524
        %v1608 = vunpack.c.h.b16 %v524
        %v1609 = vunpack.c.l.b16 %v525
        %v1610 = vunpack.c.h.b16 %v525
        %v1611 = vunpack.c.l.b16 %v526
        %v1612 = vunpack.c.h.b16 %v526
        %v1613 = vunpack.c.l.b16 %v527
        %v1614 = vunpack.c.h.b16 %v527
        %v1615 = vunpack.c.l.b16 %v528
        %v1616 = vunpack.c.h.b16 %v528
        %v1617 = vunpack.c.l.b16 %v529
        %v1618 = vunpack.c.h.b16 %v529
        %v1619 = vunpack.c.l.b16 %v530
        %v1620 = vunpack.c.h.b16 %v530
        %v1621 = vunpack.c.l.b16 %v531
        %v1622 = vunpack.c.h.b16 %v531
        %v1623 = vunpack.c.l.b16 %v532
        %v1624 = vunpack.c.h.b16 %v532
        %v1625 = vunpack.c.l.b16 %v533
        %v1626 = vunpack.c.h.b16 %v533
        %v1627 = vunpack.c.l.b16 %v534
        %v1628 = vunpack.c.h.b16 %v534
        %v1629 = vunpack.c.l.b16 %v535
        %v1630 = vunpack.c.h.b16 %v535
        %v1631 = vunpack.c.l.b16 %v536
        %v1632 = vunpack.c.h.b16 %v536
        %v1633 = vunpack.c.l.b16 %v537
        %v1634 = vunpack.c.h.b16 %v537
        %v1635 = vunpack.c.l.b16 %v538
        %v1636 = vunpack.c.h.b16 %v538
        %v1637 = vunpack.c.l.b16 %v539
        %v1638 = vunpack.c.h.b16 %v539
        %v1639 = vunpack.c.l.b16 %v540
        %v1640 = vunpack.c.h.b16 %v540
        %v1641 = vunpack.c.l.b16 %v541
        %v1642 = vunpack.c.h.b16 %v541
        %v1643 = vunpack.c.l.b16 %v542
        %v1644 = vunpack.c.h.b16 %v542
        %v1645 = vunpack.c.l.b16 %v543
        %v1646 = vunpack.c.h.b16 %v543
        %v1647 = vunpack.c.l.b16 %v544
        %v1648 = vunpack.c.h.b16 %v544
        %v1649 = vunpack.c.l.b16 %v545
        %v1650 = vunpack.c.h.b16 %v545
        %v1651 = vunpack.c.l.b16 %v546
        %v1652 = vunpack.c.h.b16 %v546
        %v1653 = vunpack.c.l.b16 %v547
        %v1654 = vunpack.c.h.b16 %v547
        %v1655 = vunpack.c.l.b16 %v548
        %v1656 = vunpack.c.h.b16 %v548
        %v1657 = vunpack.c.l.b16 %v549
        %v1658 = vunpack.c.h.b16 %v549
        %v1659 = vunpack.c.l.b16 %v550
        %v1660 = vunpack.c.h.b16 %v550
        %v1661 = vunpack.c.l.b16 %v551
        %v1662 = vunpack.c.h.b16 %v551
        %v1663 = vunpack.c.l.b16 %v552
        %v1664 = vunpack.c.h.b16 %v552
        %v1665 = vunpack.c.l.b16 %v553
        %v1666 = vunpack.c.h.b16 %v553
        %v1667 = vunpack.c.l.b16 %v554
        %v1668 = vunpack.c.h.b16 %v554
        %v1669 = vunpack.c.l.b16 %v555
        %v1670 = vunpack.c.h.b16 %v555
        %v1671 = vunpack.c.l.b16 %v556
        %v1672 = vunpack.c.h.b16 %v556
        %v1673 = vunpack.c.l.b16 %v557
        %v1674 = vunpack.c.h.b16 %v557
        %v1675 = vunpack.c.l.b16 %v558
        %v1676 = vunpack.c.h.b16 %v558
        %v1677 = vunpack.c.l.b16 %v559
        %v1678 = vunpack.c.h.b16 %v559
        %v1679 = vunpack.c.l.b16 %v560
        %v1680 = vunpack.c.h.b16 %v560
        %v1681 = vunpack.c.l.b16 %v561
        %v1682 = vunpack.c.h.b16 %v561
        %v1683 = vunpack.c.l.b16 %v562
        %v1684 = vunpack.c.h.b16 %v562
        %v1685 = vunpack.c.l.b16 %v563
        %v1686 = vunpack.c.h.b16 %v563
        %v1687 = vunpack.c.l.b16 %v564
        %v1688 = vunpack.c.h.b16 %v564
        %v1689 = vunpack.c.l.b16 %v565
        %v1690 = vunpack.c.h.b16 %v565
        %v1691 = vunpack.c.l.b16 %v566
        %v1692 = vunpack.c.h.b16 %v566
        %v1693 = vunpack.c.l.b16 %v567
        %v1694 = vunpack.c.h.b16 %v567
        %v1695 = vunpack.c.l.b16 %v568
        %v1696 = vunpack.c.h.b16 %v568
        %v1697 = vunpack.c.l.b16 %v569
        %v1698 = vunpack.c.h.b16 %v569
        %v1699 = vunpack.c.l.b16 %v570
        %v1700 = vunpack.c.h.b16 %v570
        %v1701 = vunpack.c.l.b16 %v571
        %v1702 = vunpack.c.h.b16 %v571
        %v1703 = vunpack.c.l.b16 %v572
        %v1704 = vunpack.c.h.b16 %v572
        %v1705 = vunpack.c.l.b16 %v573
        %v1706 = vunpack.c.h.b16 %v573
        %v1707 = vunpack.c.l.b16 %v574
        %v1708 = vunpack.c.h.b16 %v574
        %v1709 = vunpack.c.l.b16 %v575
        %v1710 = vunpack.c.h.b16 %v575
        %v1711 = vunpack.c.l.b16 %v576
        %v1712 = vunpack.c.h.b16 %v576
        %v1713 = vunpack.c.l.b16 %v577
        %v1714 = vunpack.c.h.b16 %v577
        %v1715 = vunpack.c.l.b16 %v578
        %v1716 = vunpack.c.h.b16 %v578
        %v1717 = vunpack.c.l.b16 %v579
        %v1718 = vunpack.c.h.b16 %v579
        %v1719 = vunpack.c.l.b16 %v580
        %v1720 = vunpack.c.h.b16 %v580
        %v1721 = vunpack.c.l.b16 %v581
        %v1722 = vunpack.c.h.b16 %v581
        %v1723 = vunpack.c.l.b16 %v582
        %v1724 = vunpack.c.h.b16 %v582
        %v1725 = vunpack.c.l.b16 %v583
        %v1726 = vunpack.c.h.b16 %v583
        %v1727 = vunpack.c.l.b16 %v584
        %v1728 = vunpack.c.h.b16 %v584
        %v1729 = vunpack.c.l.b16 %v585
        %v1730 = vunpack.c.h.b16 %v585
        %v1731 = vunpack.c.l.b16 %v586
        %v1732 = vunpack.c.h.b16 %v586
        %v1733 = vunpack.c.l.b16 %v587
        %v1734 = vunpack.c.h.b16 %v587
        %v1735 = vunpack.c.l.b16 %v588
        %v1736 = vunpack.c.h.b16 %v588
        %v1737 = vunpack.c.l.b16 %v589
        %v1738 = vunpack.c.h.b16 %v589
        %v1739 = vunpack.c.l.b16 %v590
        %v1740 = vunpack.c.h.b16 %v590
        %v1741 = vunpack.c.l.b16 %v591
        %v1742 = vunpack.c.h.b16 %v591
        %v1743 = vunpack.c.l.b16 %v592
        %v1744 = vunpack.c.h.b16 %v592
        %v1745 = vunpack.c.l.b16 %v593
        %v1746 = vunpack.c.h.b16 %v593
        %v1747 = vunpack.c.l.b16 %v594
        %v1748 = vunpack.c.h.b16 %v594
        %v1749 = vunpack.c.l.b16 %v595
        %v1750 = vunpack.c.h.b16 %v595
        %v1751 = vunpack.c.l.b16 %v596
        %v1752 = vunpack.c.h.b16 %v596
        %v1753 = vunpack.c.l.b16 %v597
        %v1754 = vunpack.c.h.b16 %v597
        %v1755 = vunpack.c.l.b16 %v598
        %v1756 = vunpack.c.h.b16 %v598
        %v1757 = vunpack.c.l.b16 %v599
        %v1758 = vunpack.c.h.b16 %v599
        %v1759 = vunpack.c.l.b16 %v600
        %v1760 = vunpack.c.h.b16 %v600
        %v1761 = vunpack.c.l.b16 %v601
        %v1762 = vunpack.c.h.b16 %v601
        %v1763 = vunpack.c.l.b16 %v602
        %v1764 = vunpack.c.h.b16 %v602
        %v1765 = vunpack.c.l.b16 %v603
        %v1766 = vunpack.c.h.b16 %v603
        %v1767 = vunpack.c.l.b16 %v604
        %v1768 = vunpack.c.h.b16 %v604
        %v1769 = vunpack.c.l.b16 %v605
        %v1770 = vunpack.c.h.b16 %v605
        %v1771 = vunpack.c.l.b16 %v606
        %v1772 = vunpack.c.h.b16 %v606
        %v1773 = vunpack.c.l.b16 %v607
        %v1774 = vunpack.c.h.b16 %v607
        %v1775 = vunpack.c.l.b16 %v608
        %v1776 = vunpack.c.h.b16 %v608
        %v1777 = vunpack.c.l.b16 %v609
        %v1778 = vunpack.c.h.b16 %v609
        %v1779 = vunpack.c.l.b16 %v610
        %v1780 = vunpack.c.h.b16 %v610
        %v1781 = vunpack.c.l.b16 %v611
        %v1782 = vunpack.c.h.b16 %v611
        %v1783 = vunpack.c.l.b16 %v612
        %v1784 = vunpack.c.h.b16 %v612
        %v1785 = vunpack.c.l.b16 %v613
        %v1786 = vunpack.c.h.b16 %v613
        %v1787 = vunpack.c.l.b16 %v614
        %v1788 = vunpack.c.h.b16 %v614
        %v1789 = vunpack.c.l.b16 %v615
        %v1790 = vunpack.c.h.b16 %v615
        %v1791 = vunpack.c.l.b16 %v616
        %v1792 = vunpack.c.h.b16 %v616
        %v1793 = vunpack.c.l.b16 %v617
        %v1794 = vunpack.c.h.b16 %v617
        %v1795 = vunpack.c.l.b16 %v618
        %v1796 = vunpack.c.h.b16 %v618
        %v1797 = vunpack.c.l.b16 %v619
        %v1798 = vunpack.c.h.b16 %v619
        %v1799 = vunpack.c.l.b16 %v620
        %v1800 = vunpack.c.h.b16 %v620
        %v1801 = vunpack.c.l.b16 %v621
        %v1802 = vunpack.c.h.b16 %v621
        %v1803 = vunpack.c.l.b16 %v622
        %v1804 = vunpack.c.h.b16 %v622
        %v1805 = vunpack.c.l.b16 %v623
        %v1806 = vunpack.c.h.b16 %v623
        %v1807 = vunpack.c.l.b16 %v624
        %v1808 = vunpack.c.h.b16 %v624
        %v1809 = vunpack.c.l.b16 %v625
        %v1810 = vunpack.c.h.b16 %v625
        %v1811 = vunpack.c.l.b16 %v626
        %v1812 = vunpack.c.h.b16 %v626
        %v1813 = vunpack.c.l.b16 %v627
        %v1814 = vunpack.c.h.b16 %v627
        %v1815 = vunpack.c.l.b16 %v628
        %v1816 = vunpack.c.h.b16 %v628
        %v1817 = vunpack.c.l.b16 %v629
        %v1818 = vunpack.c.h.b16 %v629
        %v1819 = vunpack.c.l.b16 %v630
        %v1820 = vunpack.c.h.b16 %v630
        %v1821 = vunpack.c.l.b16 %v631
        %v1822 = vunpack.c.h.b16 %v631
        %v1823 = vunpack.c.l.b16 %v632
        %v1824 = vunpack.c.h.b16 %v632
        %v1825 = vunpack.c.l.b16 %v633
        %v1826 = vunpack.c.h.b16 %v633
        %v1827 = vunpack.c.l.b16 %v634
        %v1828 = vunpack.c.h.b16 %v634
        %v1829 = vunpack.c.l.b16 %v635
        %v1830 = vunpack.c.h.b16 %v635
        %v1831 = vunpack.c.l.b16 %v636
        %v1832 = vunpack.c.h.b16 %v636
        %v1833 = vunpack.c.l.b16 %v637
        %v1834 = vunpack.c.h.b16 %v637
        %v1835 = vunpack.c.l.b16 %v638
        %v1836 = vunpack.c.h.b16 %v638
        %v1837 = vunpack.c.l.b16 %v639
        %v1838 = vunpack.c.h.b16 %v639
        %v1839 = vunpack.c.l.b16 %v640
        %v1840 = vunpack.c.h.b16 %v640
        %v1841 = vunpack.c.l.b16 %v641
        %v1842 = vunpack.c.h.b16 %v641
        %v1843 = vunpack.c.l.b16 %v642
        %v1844 = vunpack.c.h.b16 %v642
        %v1845 = vunpack.c.l.b16 %v643
        %v1846 = vunpack.c.h.b16 %v643
        %v1847 = vunpack.c.l.b16 %v644
        %v1848 = vunpack.c.h.b16 %v644
        %v1849 = vunpack.c.l.b16 %v645
        %v1850 = vunpack.c.h.b16 %v645
        %v1851 = vunpack.c.l.b16 %v646
        %v1852 = vunpack.c.h.b16 %v646
        %v1853 = vunpack.c.l.b16 %v647
        %v1854 = vunpack.c.h.b16 %v647
        %v1855 = vunpack.c.l.b16 %v648
        %v1856 = vunpack.c.h.b16 %v648
        %v1857 = vunpack.c.l.b16 %v649
        %v1858 = vunpack.c.h.b16 %v649
        %v1859 = vunpack.c.l.b16 %v650
        %v1860 = vunpack.c.h.b16 %v650
        %v1861 = vunpack.c.l.b16 %v651
        %v1862 = vunpack.c.h.b16 %v651
        %v1863 = vunpack.c.l.b16 %v652
        %v1864 = vunpack.c.h.b16 %v652
        %v1865 = vunpack.c.l.b16 %v653
        %v1866 = vunpack.c.h.b16 %v653
        %v1867 = vunpack.c.l.b16 %v654
        %v1868 = vunpack.c.h.b16 %v654
        %v1869 = vunpack.c.l.b16 %v655
        %v1870 = vunpack.c.h.b16 %v655
        %v1871 = vunpack.c.l.b16 %v656
        %v1872 = vunpack.c.h.b16 %v656
        %v1873 = vunpack.c.l.b16 %v657
        %v1874 = vunpack.c.h.b16 %v657
        %v1875 = vunpack.c.l.b16 %v658
        %v1876 = vunpack.c.h.b16 %v658
        %v1877 = vunpack.c.l.b16 %v659
        %v1878 = vunpack.c.h.b16 %v659
        %v1879 = vunpack.c.l.b16 %v660
        %v1880 = vunpack.c.h.b16 %v660
        %v1881 = vunpack.c.l.b16 %v661
        %v1882 = vunpack.c.h.b16 %v661
        %v1883 = vunpack.c.l.b16 %v662
        %v1884 = vunpack.c.h.b16 %v662
        %v1885 = vunpack.c.l.b16 %v663
        %v1886 = vunpack.c.h.b16 %v663
        %v1887 = vunpack.c.l.b16 %v664
        %v1888 = vunpack.c.h.b16 %v664
        %v1889 = vunpack.c.l.b16 %v665
        %v1890 = vunpack.c.h.b16 %v665
        %v1891 = vunpack.c.l.b16 %v666
        %v1892 = vunpack.c.h.b16 %v666
        %v1893 = vunpack.c.l.b16 %v667
        %v1894 = vunpack.c.h.b16 %v667
        %v1895 = vunpack.c.l.b16 %v668
        %v1896 = vunpack.c.h.b16 %v668
        %v1897 = vunpack.c.l.b16 %v669
        %v1898 = vunpack.c.h.b16 %v669
        %v1899 = vunpack.c.l.b16 %v670
        %v1900 = vunpack.c.h.b16 %v670
        %v1901 = vunpack.c.l.b16 %v671
        %v1902 = vunpack.c.h.b16 %v671
        %v1903 = vunpack.c.l.b16 %v672
        %v1904 = vunpack.c.h.b16 %v672
        %v1905 = vunpack.c.l.b16 %v673
        %v1906 = vunpack.c.h.b16 %v673
        %v1907 = vunpack.c.l.b16 %v674
        %v1908 = vunpack.c.h.b16 %v674
        %v1909 = vunpack.c.l.b16 %v675
        %v1910 = vunpack.c.h.b16 %v675
        %v1911 = vunpack.c.l.b16 %v676
        %v1912 = vunpack.c.h.b16 %v676
        %v1913 = vunpack.c.l.b16 %v677
        %v1914 = vunpack.c.h.b16 %v677
        %v1915 = vunpack.c.l.b16 %v678
        %v1916 = vunpack.c.h.b16 %v678
        %v1917 = vunpack.c.l.b16 %v679
        %v1918 = vunpack.c.h.b16 %v679
        %v1919 = vunpack.c.l.b16 %v680
        %v1920 = vunpack.c.h.b16 %v680
        %v1921 = vunpack.c.l.b16 %v681
        %v1922 = vunpack.c.h.b16 %v681
        %v1923 = vunpack.c.l.b16 %v682
        %v1924 = vunpack.c.h.b16 %v682
        %v1925 = vunpack.c.l.b16 %v683
        %v1926 = vunpack.c.h.b16 %v683
        %v1927 = vunpack.c.l.b16 %v684
        %v1928 = vunpack.c.h.b16 %v684
        %v1929 = vunpack.c.l.b16 %v685
        %v1930 = vunpack.c.h.b16 %v685
        %v1931 = vunpack.c.l.b16 %v686
        %v1932 = vunpack.c.h.b16 %v686
        %v1933 = vunpack.c.l.b16 %v687
        %v1934 = vunpack.c.h.b16 %v687
        %v1935 = vunpack.c.l.b16 %v688
        %v1936 = vunpack.c.h.b16 %v688
        %v1937 = vunpack.c.l.b16 %v689
        %v1938 = vunpack.c.h.b16 %v689
        %v1939 = vunpack.c.l.b16 %v690
        %v1940 = vunpack.c.h.b16 %v690
        %v1941 = vunpack.c.l.b16 %v691
        %v1942 = vunpack.c.h.b16 %v691
        %v1943 = vunpack.c.l.b16 %v692
        %v1944 = vunpack.c.h.b16 %v692
        %v1945 = vunpack.c.l.b16 %v693
        %v1946 = vunpack.c.h.b16 %v693
        %v1947 = vunpack.c.l.b16 %v694
        %v1948 = vunpack.c.h.b16 %v694
        %v1949 = vunpack.c.l.b16 %v695
        %v1950 = vunpack.c.h.b16 %v695
        %v1951 = vunpack.c.l.b16 %v696
        %v1952 = vunpack.c.h.b16 %v696
        %v1953 = vunpack.c.l.b16 %v697
        %v1954 = vunpack.c.h.b16 %v697
        %v1955 = vunpack.c.l.b16 %v698
        %v1956 = vunpack.c.h.b16 %v698
        %v1957 = vunpack.c.l.b16 %v699
        %v1958 = vunpack.c.h.b16 %v699
        %v1959 = vunpack.c.l.b16 %v700
        %v1960 = vunpack.c.h.b16 %v700
        %v1961 = vunpack.c.l.b16 %v701
        %v1962 = vunpack.c.h.b16 %v701
        %v1963 = vunpack.c.l.b16 %v702
        %v1964 = vunpack.c.h.b16 %v702
        %v1965 = vunpack.c.l.b16 %v703
        %v1966 = vunpack.c.h.b16 %v703
        %v1967 = vunpack.c.l.b16 %v704
        %v1968 = vunpack.c.h.b16 %v704
        %v1969 = vunpack.c.l.b16 %v705
        %v1970 = vunpack.c.h.b16 %v705
        %v1971 = vunpack.c.l.b16 %v706
        %v1972 = vunpack.c.h.b16 %v706
        %v1973 = vunpack.c.l.b16 %v707
        %v1974 = vunpack.c.h.b16 %v707
        %v1975 = vunpack.c.l.b16 %v708
        %v1976 = vunpack.c.h.b16 %v708
        %v1977 = vunpack.c.l.b16 %v709
        %v1978 = vunpack.c.h.b16 %v709
        %v1979 = vunpack.c.l.b16 %v710
        %v1980 = vunpack.c.h.b16 %v710
        %v1981 = vunpack.c.l.b16 %v711
        %v1982 = vunpack.c.h.b16 %v711
        %v1983 = vunpack.c.l.b16 %v712
        %v1984 = vunpack.c.h.b16 %v712
        %v1985 = vpack.c.b16 %v1141, %v1137
        %v1986 = vpack.c.b16 %v1142, %v1138
        %v1987 = vpack.c.b16 %v1143, %v1139
        %v1988 = vpack.c.b16 %v1144, %v1140
        %v1989 = vpack.c.b16 %v1149, %v1145
        %v1990 = vpack.c.b16 %v1150, %v1146
        %v1991 = vpack.c.b16 %v1151, %v1147
        %v1992 = vpack.c.b16 %v1152, %v1148
        %v1993 = vpack.c.b16 %v1157, %v1153
        %v1994 = vpack.c.b16 %v1158, %v1154
        %v1995 = vpack.c.b16 %v1159, %v1155
        %v1996 = vpack.c.b16 %v1160, %v1156
        %v1997 = vpack.c.b16 %v1165, %v1161
        %v1998 = vpack.c.b16 %v1166, %v1162
        %v1999 = vpack.c.b16 %v1167, %v1163
        %v2000 = vpack.c.b16 %v1168, %v1164
        %v2001 = vpack.c.b16 %v1173, %v1169
        %v2002 = vpack.c.b16 %v1174, %v1170
        %v2003 = vpack.c.b16 %v1175, %v1171
        %v2004 = vpack.c.b16 %v1176, %v1172
        %v2005 = vpack.c.b16 %v1181, %v1177
        %v2006 = vpack.c.b16 %v1182, %v1178
        %v2007 = vpack.c.b16 %v1183, %v1179
        %v2008 = vpack.c.b16 %v1184, %v1180
        %v2009 = vpack.c.b16 %v1189, %v1185
        %v2010 = vpack.c.b16 %v1190, %v1186
        %v2011 = vpack.c.b16 %v1191, %v1187
        %v2012 = vpack.c.b16 %v1192, %v1188
        %v2013 = vpack.c.b16 %v1197, %v1193
        %v2014 = vpack.c.b16 %v1198, %v1194
        %v2015 = vpack.c.b16 %v1199, %v1195
        %v2016 = vpack.c.b16 %v1200, %v1196
        %v2017 = vpack.c.b16 %v1205, %v1201
        %v2018 = vpack.c.b16 %v1206, %v1202
        %v2019 = vpack.c.b16 %v1207, %v1203
        %v2020 = vpack.c.b16 %v1208, %v1204
        %v2021 = vpack.c.b16 %v1213, %v1209
        %v2022 = vpack.c.b16 %v1214, %v1210
        %v2023 = vpack.c.b16 %v1215, %v1211
        %v2024 = vpack.c.b16 %v1216, %v1212
        %v2025 = vpack.c.b16 %v1221, %v1217
        %v2026 = vpack.c.b16 %v1222, %v1218
        %v2027 = vpack.c.b16 %v1223, %v1219
        %v2028 = vpack.c.b16 %v1224, %v1220
        %v2029 = vpack.c.b16 %v1229, %v1225
        %v2030 = vpack.c.b16 %v1230, %v1226
        %v2031 = vpack.c.b16 %v1231, %v1227
        %v2032 = vpack.c.b16 %v1232, %v1228
        %v2033 = vpack.c.b16 %v1237, %v1233
        %v2034 = vpack.c.b16 %v1238, %v1234
        %v2035 = vpack.c.b16 %v1239, %v1235
        %v2036 = vpack.c.b16 %v1240, %v1236
        %v2037 = vpack.c.b16 %v1245, %v1241
        %v2038 = vpack.c.b16 %v1246, %v1242
        %v2039 = vpack.c.b16 %v1247, %v1243
        %v2040 = vpack.c.b16 %v1248, %v1244
        %v2041 = vpack.c.b16 %v1253, %v1249
        %v2042 = vpack.c.b16 %v1254, %v1250
        %v2043 = vpack.c.b16 %v1255, %v1251
        %v2044 = vpack.c.b16 %v1256, %v1252
        %v2045 = vpack.c.b16 %v1261, %v1257
        %v2046 = vpack.c.b16 %v1262, %v1258
        %v2047 = vpack.c.b16 %v1263, %v1259
        %v2048 = vpack.c.b16 %v1264, %v1260
        %v2049 = vpack.c.b16 %v1269, %v1265
        %v2050 = vpack.c.b16 %v1270, %v1266
        %v2051 = vpack.c.b16 %v1271, %v1267
        %v2052 = vpack.c.b16 %v1272, %v1268
        %v2053 = vpack.c.b16 %v1277, %v1273
        %v2054 = vpack.c.b16 %v1278, %v1274
        %v2055 = vpack.c.b16 %v1279, %v1275
        %v2056 = vpack.c.b16 %v1280, %v1276
        %v2057 = vpack.c.b16 %v1285, %v1281
        %v2058 = vpack.c.b16 %v1286, %v1282
        %v2059 = vpack.c.b16 %v1287, %v1283
        %v2060 = vpack.c.b16 %v1288, %v1284
        %v2061 = vpack.c.b16 %v1293, %v1289
        %v2062 = vpack.c.b16 %v1294, %v1290
        %v2063 = vpack.c.b16 %v1295, %v1291
        %v2064 = vpack.c.b16 %v1296, %v1292
        %v2065 = vpack.c.b16 %v1301, %v1297
        %v2066 = vpack.c.b16 %v1302, %v1298
        %v2067 = vpack.c.b16 %v1303, %v1299
        %v2068 = vpack.c.b16 %v1304, %v1300
        %v2069 = vpack.c.b16 %v1309, %v1305
        %v2070 = vpack.c.b16 %v1310, %v1306
        %v2071 = vpack.c.b16 %v1311, %v1307
        %v2072 = vpack.c.b16 %v1312, %v1308
        %v2073 = vpack.c.b16 %v1317, %v1313
        %v2074 = vpack.c.b16 %v1318, %v1314
        %v2075 = vpack.c.b16 %v1319, %v1315
        %v2076 = vpack.c.b16 %v1320, %v1316
        %v2077 = vpack.c.b16 %v1325, %v1321
        %v2078 = vpack.c.b16 %v1326, %v1322
        %v2079 = vpack.c.b16 %v1327, %v1323
        %v2080 = vpack.c.b16 %v1328, %v1324
        %v2081 = vpack.c.b16 %v1333, %v1329
        %v2082 = vpack.c.b16 %v1334, %v1330
        %v2083 = vpack.c.b16 %v1335, %v1331
        %v2084 = vpack.c.b16 %v1336, %v1332
        %v2085 = vpack.c.b16 %v1341, %v1337
        %v2086 = vpack.c.b16 %v1342, %v1338
        %v2087 = vpack.c.b16 %v1343, %v1339
        %v2088 = vpack.c.b16 %v1344, %v1340
        %v2089 = vpack.c.b16 %v1349, %v1345
        %v2090 = vpack.c.b16 %v1350, %v1346
        %v2091 = vpack.c.b16 %v1351, %v1347
        %v2092 = vpack.c.b16 %v1352, %v1348
        %v2093 = vpack.c.b16 %v1357, %v1353
        %v2094 = vpack.c.b16 %v1358, %v1354
        %v2095 = vpack.c.b16 %v1359, %v1355
        %v2096 = vpack.c.b16 %v1360, %v1356
        %v2097 = vpack.c.b16 %v1365, %v1361
        %v2098 = vpack.c.b16 %v1366, %v1362
        %v2099 = vpack.c.b16 %v1367, %v1363
        %v2100 = vpack.c.b16 %v1368, %v1364
        %v2101 = vpack.c.b16 %v1373, %v1369
        %v2102 = vpack.c.b16 %v1374, %v1370
        %v2103 = vpack.c.b16 %v1375, %v1371
        %v2104 = vpack.c.b16 %v1376, %v1372
        %v2105 = vpack.c.b16 %v1381, %v1377
        %v2106 = vpack.c.b16 %v1382, %v1378
        %v2107 = vpack.c.b16 %v1383, %v1379
        %v2108 = vpack.c.b16 %v1384, %v1380
        %v2109 = vpack.c.b16 %v1389, %v1385
        %v2110 = vpack.c.b16 %v1390, %v1386
        %v2111 = vpack.c.b16 %v1391, %v1387
        %v2112 = vpack.c.b16 %v1392, %v1388
        %v2113 = vpack.c.b16 %v1397, %v1393
        %v2114 = vpack.c.b16 %v1398, %v1394
        %v2115 = vpack.c.b16 %v1399, %v1395
        %v2116 = vpack.c.b16 %v1400, %v1396
        %v2117 = vpack.c.b16 %v1405, %v1401
        %v2118 = vpack.c.b16 %v1406, %v1402
        %v2119 = vpack.c.b16 %v1407, %v1403
        %v2120 = vpack.c.b16 %v1408, %v1404
        %v2121 = vpack.c.b16 %v1413, %v1409
        %v2122 = vpack.c.b16 %v1414, %v1410
        %v2123 = vpack.c.b16 %v1415, %v1411
        %v2124 = vpack.c.b16 %v1416, %v1412
        %v2125 = vpack.c.b16 %v1421, %v1417
        %v2126 = vpack.c.b16 %v1422, %v1418
        %v2127 = vpack.c.b16 %v1423, %v1419
        %v2128 = vpack.c.b16 %v1424, %v1420
        %v2129 = vpack.c.b16 %v1429, %v1425
        %v2130 = vpack.c.b16 %v1430, %v1426
        %v2131 = vpack.c.b16 %v1431, %v1427
        %v2132 = vpack.c.b16 %v1432, %v1428
        %v2133 = vpack.c.b16 %v1437, %v1433
        %v2134 = vpack.c.b16 %v1438, %v1434
        %v2135 = vpack.c.b16 %v1439, %v1435
        %v2136 = vpack.c.b16 %v1440, %v1436
        %v2137 = vpack.c.b16 %v1445, %v1441
        %v2138 = vpack.c.b16 %v1446, %v1442
        %v2139 = vpack.c.b16 %v1447, %v1443
        %v2140 = vpack.c.b16 %v1448, %v1444
        %v2141 = vpack.c.b16 %v1453, %v1449
        %v2142 = vpack.c.b16 %v1454, %v1450
        %v2143 = vpack.c.b16 %v1455, %v1451
        %v2144 = vpack.c.b16 %v1456, %v1452
        %v2145 = vpack.c.b16 %v1461, %v1457
        %v2146 = vpack.c.b16 %v1462, %v1458
        %v2147 = vpack.c.b16 %v1463, %v1459
        %v2148 = vpack.c.b16 %v1464, %v1460
        %v2149 = vpack.c.b16 %v1469, %v1465
        %v2150 = vpack.c.b16 %v1470, %v1466
        %v2151 = vpack.c.b16 %v1471, %v1467
        %v2152 = vpack.c.b16 %v1472, %v1468
        %v2153 = vpack.c.b16 %v1477, %v1473
        %v2154 = vpack.c.b16 %v1478, %v1474
        %v2155 = vpack.c.b16 %v1479, %v1475
        %v2156 = vpack.c.b16 %v1480, %v1476
        %v2157 = vpack.c.b16 %v1485, %v1481
        %v2158 = vpack.c.b16 %v1486, %v1482
        %v2159 = vpack.c.b16 %v1487, %v1483
        %v2160 = vpack.c.b16 %v1488, %v1484
        %v2161 = vpack.c.b16 %v1493, %v1489
        %v2162 = vpack.c.b16 %v1494, %v1490
        %v2163 = vpack.c.b16 %v1495, %v1491
        %v2164 = vpack.c.b16 %v1496, %v1492
        %v2165 = vpack.c.b16 %v1501, %v1497
        %v2166 = vpack.c.b16 %v1502, %v1498
        %v2167 = vpack.c.b16 %v1503, %v1499
        %v2168 = vpack.c.b16 %v1504, %v1500
        %v2169 = vpack.c.b16 %v1509, %v1505
        %v2170 = vpack.c.b16 %v1510, %v1506
        %v2171 = vpack.c.b16 %v1511, %v1507
        %v2172 = vpack.c.b16 %v1512, %v1508
        %v2173 = vpack.c.b16 %v1517, %v1513
        %v2174 = vpack.c.b16 %v1518, %v1514
        %v2175 = vpack.c.b16 %v1519, %v1515
        %v2176 = vpack.c.b16 %v1520, %v1516
        %v2177 = vpack.c.b16 %v1525, %v1521
        %v2178 = vpack.c.b16 %v1526, %v1522
        %v2179 = vpack.c.b16 %v1527, %v1523
        %v2180 = vpack.c.b16 %v1528, %v1524
        %v2181 = vpack.c.b16 %v1533, %v1529
        %v2182 = vpack.c.b16 %v1534, %v1530
        %v2183 = vpack.c.b16 %v1535, %v1531
        %v2184 = vpack.c.b16 %v1536, %v1532
        %v2185 = vpack.c.b16 %v1541, %v1537
        %v2186 = vpack.c.b16 %v1542, %v1538
        %v2187 = vpack.c.b16 %v1543, %v1539
        %v2188 = vpack.c.b16 %v1544, %v1540
        %v2189 = vpack.c.b16 %v1549, %v1545
        %v2190 = vpack.c.b16 %v1550, %v1546
        %v2191 = vpack.c.b16 %v1551, %v1547
        %v2192 = vpack.c.b16 %v1552, %v1548
        %v2193 = vpack.c.b16 %v1557, %v1553
        %v2194 = vpack.c.b16 %v1558, %v1554
        %v2195 = vpack.c.b16 %v1559, %v1555
        %v2196 = vpack.c.b16 %v1560, %v1556
        %v2197 = vpack.c.b16 %v1565, %v1561
        %v2198 = vpack.c.b16 %v1566, %v1562
        %v2199 = vpack.c.b16 %v1567, %v1563
        %v2200 = vpack.c.b16 %v1568, %v1564
        %v2201 = vpack.c.b16 %v1573, %v1569
        %v2202 = vpack.c.b16 %v1574, %v1570
        %v2203 = vpack.c.b16 %v1575, %v1571
        %v2204 = vpack.c.b16 %v1576, %v1572
        %v2205 = vpack.c.b16 %v1581, %v1577
        %v2206 = vpack.c.b16 %v1582, %v1578
        %v2207 = vpack.c.b16 %v1583, %v1579
        %v2208 = vpack.c.b16 %v1584, %v1580
        %v2209 = vpack.c.b16 %v1589, %v1585
        %v2210 = vpack.c.b16 %v1590, %v1586
        %v2211 = vpack.c.b16 %v1591, %v1587
        %v2212 = vpack.c.b16 %v1592, %v1588
        %v2213 = vpack.c.b16 %v1597, %v1593
        %v2214 = vpack.c.b16 %v1598, %v1594
        %v2215 = vpack.c.b16 %v1599, %v1595
        %v2216 = vpack.c.b16 %v1600, %v1596
        %v2217 = vpack.c.b16 %v1605, %v1601
        %v2218 = vpack.c.b16 %v1606, %v1602
        %v2219 = vpack.c.b16 %v1607, %v1603
        %v2220 = vpack.c.b16 %v1608, %v1604
        %v2221 = vpack.c.b16 %v1613, %v1609
        %v2222 = vpack.c.b16 %v1614, %v1610
        %v2223 = vpack.c.b16 %v1615, %v1611
        %v2224 = vpack.c.b16 %v1616, %v1612
        %v2225 = vpack.c.b16 %v1621, %v1617
        %v2226 = vpack.c.b16 %v1622, %v1618
        %v2227 = vpack.c.b16 %v1623, %v1619
        %v2228 = vpack.c.b16 %v1624, %v1620
        %v2229 = vpack.c.b16 %v1629, %v1625
        %v2230 = vpack.c.b16 %v1630, %v1626
        %v2231 = vpack.c.b16 %v1631, %v1627
        %v2232 = vpack.c.b16 %v1632, %v1628
        %v2233 = vpack.c.b16 %v1637, %v1633
        %v2234 = vpack.c.b16 %v1638, %v1634
        %v2235 = vpack.c.b16 %v1639, %v1635
        %v2236 = vpack.c.b16 %v1640, %v1636
        %v2237 = vpack.c.b16 %v1645, %v1641
        %v2238 = vpack.c.b16 %v1646, %v1642
        %v2239 = vpack.c.b16 %v1647, %v1643
        %v2240 = vpack.c.b16 %v1648, %v1644
        %v2241 = vpack.c.b16 %v1653, %v1649
        %v2242 = vpack.c.b16 %v1654, %v1650
        %v2243 = vpack.c.b16 %v1655, %v1651
        %v2244 = vpack.c.b16 %v1656, %v1652
        %v2245 = vpack.c.b16 %v1661, %v1657
        %v2246 = vpack.c.b16 %v1662, %v1658
        %v2247 = vpack.c.b16 %v1663, %v1659
        %v2248 = vpack.c.b16 %v1664, %v1660
        %v2249 = vpack.c.b16 %v1669, %v1665
        %v2250 = vpack.c.b16 %v1670, %v1666
        %v2251 = vpack.c.b16 %v1671, %v1667
        %v2252 = vpack.c.b16 %v1672, %v1668
        %v2253 = vpack.c.b16 %v1677, %v1673
        %v2254 = vpack.c.b16 %v1678, %v1674
        %v2255 = vpack.c.b16 %v1679, %v1675
        %v2256 = vpack.c.b16 %v1680, %v1676
        %v2257 = vpack.c.b16 %v1685, %v1681
        %v2258 = vpack.c.b16 %v1686, %v1682
        %v2259 = vpack.c.b16 %v1687, %v1683
        %v2260 = vpack.c.b16 %v1688, %v1684
        %v2261 = vpack.c.b16 %v1693, %v1689
        %v2262 = vpack.c.b16 %v1694, %v1690
        %v2263 = vpack.c.b16 %v1695, %v1691
        %v2264 = vpack.c.b16 %v1696, %v1692
        %v2265 = vpack.c.b16 %v1701, %v1697
        %v2266 = vpack.c.b16 %v1702, %v1698
        %v2267 = vpack.c.b16 %v1703, %v1699
        %v2268 = vpack.c.b16 %v1704, %v1700
        %v2269 = vpack.c.b16 %v1709, %v1705
        %v2270 = vpack.c.b16 %v1710, %v1706
        %v2271 = vpack.c.b16 %v1711, %v1707
        %v2272 = vpack.c.b16 %v1712, %v1708
        %v2273 = vpack.c.b16 %v1717, %v1713
        %v2274 = vpack.c.b16 %v1718, %v1714
        %v2275 = vpack.c.b16 %v1719, %v1715
        %v2276 = vpack.c.b16 %v1720, %v1716
        %v2277 = vpack.c.b16 %v1725, %v1721
        %v2278 = vpack.c.b16 %v1726, %v1722
        %v2279 = vpack.c.b16 %v1727, %v1723
        %v2280 = vpack.c.b16 %v1728, %v1724
        %v2281 = vpack.c.b16 %v1733, %v1729
        %v2282 = vpack.c.b16 %v1734, %v1730
        %v2283 = vpack.c.b16 %v1735, %v1731
        %v2284 = vpack.c.b16 %v1736, %v1732
        %v2285 = vpack.c.b16 %v1741, %v1737
        %v2286 = vpack.c.b16 %v1742, %v1738
        %v2287 = vpack.c.b16 %v1743, %v1739
        %v2288 = vpack.c.b16 %v1744, %v1740
        %v2289 = vpack.c.b16 %v1749, %v1745
        %v2290 = vpack.c.b16 %v1750, %v1746
        %v2291 = vpack.c.b16 %v1751, %v1747
        %v2292 = vpack.c.b16 %v1752, %v1748
        %v2293 = vpack.c.b16 %v1757, %v1753
        %v2294 = vpack.c.b16 %v1758, %v1754
        %v2295 = vpack.c.b16 %v1759, %v1755
        %v2296 = vpack.c.b16 %v1760, %v1756
        %v2297 = vpack.c.b16 %v1765, %v1761
        %v2298 = vpack.c.b16 %v1766, %v1762
        %v2299 = vpack.c.b16 %v1767, %v1763
        %v2300 = vpack.c.b16 %v1768, %v1764
        %v2301 = vpack.c.b16 %v1773, %v1769
        %v2302 = vpack.c.b16 %v1774, %v1770
        %v2303 = vpack.c.b16 %v1775, %v1771
        %v2304 = vpack.c.b16 %v1776, %v1772
        %v2305 = vpack.c.b16 %v1781, %v1777
        %v2306 = vpack.c.b16 %v1782, %v1778
        %v2307 = vpack.c.b16 %v1783, %v1779
        %v2308 = vpack.c.b16 %v1784, %v1780
        %v2309 = vpack.c.b16 %v1789, %v1785
        %v2310 = vpack.c.b16 %v1790, %v1786
        %v2311 = vpack.c.b16 %v1791, %v1787
        %v2312 = vpack.c.b16 %v1792, %v1788
        %v2313 = vpack.c.b16 %v1797, %v1793
        %v2314 = vpack.c.b16 %v1798, %v1794
        %v2315 = vpack.c.b16 %v1799, %v1795
        %v2316 = vpack.c.b16 %v1800, %v1796
        %v2317 = vpack.c.b16 %v1805, %v1801
        %v2318 = vpack.c.b16 %v1806, %v1802
        %v2319 = vpack.c.b16 %v1807, %v1803
        %v2320 = vpack.c.b16 %v1808, %v1804
        %v2321 = vpack.c.b16 %v1813, %v1809
        %v2322 = vpack.c.b16 %v1814, %v1810
        %v2323 = vpack.c.b16 %v1815, %v1811
        %v2324 = vpack.c.b16 %v1816, %v1812
        %v2325 = vpack.c.b16 %v1821, %v1817
        %v2326 = vpack.c.b16 %v1822, %v1818
        %v2327 = vpack.c.b16 %v1823, %v1819
        %v2328 = vpack.c.b16 %v1824, %v1820
        %v2329 = vpack.c.b16 %v1829, %v1825
        %v2330 = vpack.c.b16 %v1830, %v1826
        %v2331 = vpack.c.b16 %v1831, %v1827
        %v2332 = vpack.c.b16 %v1832, %v1828
        %v2333 = vpack.c.b16 %v1837, %v1833
        %v2334 = vpack.c.b16 %v1838, %v1834
        %v2335 = vpack.c.b16 %v1839, %v1835
        %v2336 = vpack.c.b16 %v1840, %v1836
        %v2337 = vpack.c.b16 %v1845, %v1841
        %v2338 = vpack.c.b16 %v1846, %v1842
        %v2339 = vpack.c.b16 %v1847, %v1843
        %v2340 = vpack.c.b16 %v1848, %v1844
        %v2341 = vpack.c.b16 %v1853, %v1849
        %v2342 = vpack.c.b16 %v1854, %v1850
        %v2343 = vpack.c.b16 %v1855, %v1851
        %v2344 = vpack.c.b16 %v1856, %v1852
        %v2345 = vpack.c.b16 %v1861, %v1857
        %v2346 = vpack.c.b16 %v1862, %v1858
        %v2347 = vpack.c.b16 %v1863, %v1859
        %v2348 = vpack.c.b16 %v1864, %v1860
        %v2349 = vpack.c.b16 %v1869, %v1865
        %v2350 = vpack.c.b16 %v1870, %v1866
        %v2351 = vpack.c.b16 %v1871, %v1867
        %v2352 = vpack.c.b16 %v1872, %v1868
        %v2353 = vpack.c.b16 %v1877, %v1873
        %v2354 = vpack.c.b16 %v1878, %v1874
        %v2355 = vpack.c.b16 %v1879, %v1875
        %v2356 = vpack.c.b16 %v1880, %v1876
        %v2357 = vpack.c.b16 %v1885, %v1881
        %v2358 = vpack.c.b16 %v1886, %v1882
        %v2359 = vpack.c.b16 %v1887, %v1883
        %v2360 = vpack.c.b16 %v1888, %v1884
        %v2361 = vpack.c.b16 %v1893, %v1889
        %v2362 = vpack.c.b16 %v1894, %v1890
        %v2363 = vpack.c.b16 %v1895, %v1891
        %v2364 = vpack.c.b16 %v1896, %v1892
        %v2365 = vpack.c.b16 %v1901, %v1897
        %v2366 = vpack.c.b16 %v1902, %v1898
        %v2367 = vpack.c.b16 %v1903, %v1899
        %v2368 = vpack.c.b16 %v1904, %v1900
        %v2369 = vpack.c.b16 %v1909, %v1905
        %v2370 = vpack.c.b16 %v1910, %v1906
        %v2371 = vpack.c.b16 %v1911, %v1907
        %v2372 = vpack.c.b16 %v1912, %v1908
        %v2373 = vpack.c.b16 %v1917, %v1913
        %v2374 = vpack.c.b16 %v1918, %v1914
        %v2375 = vpack.c.b16 %v1919, %v1915
        %v2376 = vpack.c.b16 %v1920, %v1916
        %v2377 = vpack.c.b16 %v1925, %v1921
        %v2378 = vpack.c.b16 %v1926, %v1922
        %v2379 = vpack.c.b16 %v1927, %v1923
        %v2380 = vpack.c.b16 %v1928, %v1924
        %v2381 = vpack.c.b16 %v1933, %v1929
        %v2382 = vpack.c.b16 %v1934, %v1930
        %v2383 = vpack.c.b16 %v1935, %v1931
        %v2384 = vpack.c.b16 %v1936, %v1932
        %v2385 = vpack.c.b16 %v1941, %v1937
        %v2386 = vpack.c.b16 %v1942, %v1938
        %v2387 = vpack.c.b16 %v1943, %v1939
        %v2388 = vpack.c.b16 %v1944, %v1940
        %v2389 = vpack.c.b16 %v1949, %v1945
        %v2390 = vpack.c.b16 %v1950, %v1946
        %v2391 = vpack.c.b16 %v1951, %v1947
        %v2392 = vpack.c.b16 %v1952, %v1948
        %v2393 = vpack.c.b16 %v1957, %v1953
        %v2394 = vpack.c.b16 %v1958, %v1954
        %v2395 = vpack.c.b16 %v1959, %v1955
        %v2396 = vpack.c.b16 %v1960, %v1956
        %v2397 = vpack.c.b16 %v1965, %v1961
        %v2398 = vpack.c.b16 %v1966, %v1962
        %v2399 = vpack.c.b16 %v1967, %v1963
        %v2400 = vpack.c.b16 %v1968, %v1964
        %v2401 = vpack.c.b16 %v1973, %v1969
        %v2402 = vpack.c.b16 %v1974, %v1970
        %v2403 = vpack.c.b16 %v1975, %v1971
        %v2404 = vpack.c.b16 %v1976, %v1972
        %v2405 = vpack.c.b16 %v1981, %v1977
        %v2406 = vpack.c.b16 %v1982, %v1978
        %v2407 = vpack.c.b16 %v1983, %v1979
        %v2408 = vpack.c.b16 %v1984, %v1980
        %vm2829 = vcmask 211968
        %v2831 = vsel %vm2829, %v288, 0
        %vm2833 = vcmask 1044480
        %v2835 = vsel %vm2833, %v2405, 0
        %v2838 = vsel %vm2833, %v2406, 0
        %v2841 = vsel %vm2833, %v2407, 0
        %v2844 = vsel %vm2833, %v2408, 0
        %2846 = vmatprep.subr.bf16.mxu0 %v2014
        %2847 = vmatpush1.bf16.msra.mxu0 %v2013
        %2848 = vmatprep.subr.bf16.mxu0 %v2010
        %2849 = vmatpush1.bf16.msra.mxu0 %v2009
        %2850 = vmatprep.subr.bf16.mxu0 %v2006
        %2851 = vmatpush1.bf16.msra.mxu0 %v2005
        %2852 = vmatprep.subr.bf16.mxu0 %v2002
        %2853 = vmatpush1.bf16.msra.mxu0 %v2001
        %2854 = vmatprep.subr.bf16.mxu0 %v1998
        %2855 = vmatpush1.bf16.msra.mxu0 %v1997
        %2856 = vmatprep.subr.bf16.mxu0 %v1994
        %2857 = vmatpush1.bf16.msra.mxu0 %v1993
        %2858 = vmatprep.subr.bf16.mxu0 %v1990
        %2859 = vmatpush1.bf16.msra.mxu0 %v1989
        %2860 = vmatprep.subr.bf16.mxu0 %v1986
        %2861 = vmatpush1.bf16.msra.mxu0 %v1985
        %2862 = vmatprep.subr.bf16.mxu0 %v2046
        %2863 = vmatpush2.bf16.msra.mxu0 %v2045
        %2864 = vmatprep.subr.bf16.mxu0 %v2042
        %2865 = vmatpush2.bf16.msra.mxu0 %v2041
        %2866 = vmatprep.subr.bf16.mxu0 %v2038
        %2867 = vmatpush2.bf16.msra.mxu0 %v2037
        %2868 = vmatprep.subr.bf16.mxu0 %v2034
        %2869 = vmatpush2.bf16.msra.mxu0 %v2033
        %2870 = vmatprep.subr.bf16.mxu0 %v2030
        %2871 = vmatpush2.bf16.msra.mxu0 %v2029
        %2872 = vmatprep.subr.bf16.mxu0 %v2026
        %2873 = vmatpush2.bf16.msra.mxu0 %v2025
        %2874 = vmatprep.subr.bf16.mxu0 %v2022
        %2875 = vmatpush2.bf16.msra.mxu0 %v2021
        %2876 = vmatprep.subr.bf16.mxu0 %v2018
        %2877 = vmatpush2.bf16.msra.mxu0 %v2017
        %2878 = vmatprep.mubr.bf16.mxu0 %v276
        %2879 = vmatmul.mubr.bf16.gmra.mxu0 %v275
        %v2880 = vpop.f32.mrf.mxu0
        %v2881 = vadd.f32 0.0, %v2880
        %v2882 = vpop.f32.mrf.mxu0
        %v2883 = vadd.f32 0.0, %v2882
        %v2884 = vpop.f32.mrf.mxu0
        %v2885 = vadd.f32 0.0, %v2884
        %v2886 = vpop.f32.mrf.mxu0
        %v2887 = vadd.f32 0.0, %v2886
        %2888 = vdwg.mxu0
        %2889 = vmatprep.subr.bf16.mxu0 %v2078
        %2890 = vmatpush1.bf16.msra.mxu0 %v2077
        %2891 = vmatprep.subr.bf16.mxu0 %v2074
        %2892 = vmatpush1.bf16.msra.mxu0 %v2073
        %2893 = vmatprep.subr.bf16.mxu0 %v2070
        %2894 = vmatpush1.bf16.msra.mxu0 %v2069
        %2895 = vmatprep.subr.bf16.mxu0 %v2066
        %2896 = vmatpush1.bf16.msra.mxu0 %v2065
        %2897 = vmatprep.subr.bf16.mxu0 %v2062
        %2898 = vmatpush1.bf16.msra.mxu0 %v2061
        %2899 = vmatprep.subr.bf16.mxu0 %v2058
        %2900 = vmatpush1.bf16.msra.mxu0 %v2057
        %2901 = vmatprep.subr.bf16.mxu0 %v2054
        %2902 = vmatpush1.bf16.msra.mxu0 %v2053
        %2903 = vmatprep.subr.bf16.mxu0 %v2050
        %2904 = vmatpush1.bf16.msra.mxu0 %v2049
        %2905 = vmatprep.subr.bf16.mxu0 %v2110
        %2906 = vmatpush2.bf16.msra.mxu0 %v2109
        %2907 = vmatprep.subr.bf16.mxu0 %v2106
        %2908 = vmatpush2.bf16.msra.mxu0 %v2105
        %2909 = vmatprep.subr.bf16.mxu0 %v2102
        %2910 = vmatpush2.bf16.msra.mxu0 %v2101
        %2911 = vmatprep.subr.bf16.mxu0 %v2098
        %2912 = vmatpush2.bf16.msra.mxu0 %v2097
        %2913 = vmatprep.subr.bf16.mxu0 %v2094
        %2914 = vmatpush2.bf16.msra.mxu0 %v2093
        %2915 = vmatprep.subr.bf16.mxu0 %v2090
        %2916 = vmatpush2.bf16.msra.mxu0 %v2089
        %2917 = vmatprep.subr.bf16.mxu0 %v2086
        %2918 = vmatpush2.bf16.msra.mxu0 %v2085
        %2919 = vmatprep.subr.bf16.mxu0 %v2082
        %2920 = vmatpush2.bf16.msra.mxu0 %v2081
        %2921 = vmatprep.mubr.bf16.mxu0 %v278
        %2922 = vmatmul.mubr.bf16.gmra.mxu0 %v277
        %v2923 = vpop.f32.mrf.mxu0
        %v2924 = vadd.f32 %v2881, %v2923
        %v2925 = vpop.f32.mrf.mxu0
        %v2926 = vadd.f32 %v2883, %v2925
        %v2927 = vpop.f32.mrf.mxu0
        %v2928 = vadd.f32 %v2885, %v2927
        %v2929 = vpop.f32.mrf.mxu0
        %v2930 = vadd.f32 %v2887, %v2929
        %2931 = vdwg.mxu0
        %2932 = vmatprep.subr.bf16.mxu0 %v2142
        %2933 = vmatpush1.bf16.msra.mxu0 %v2141
        %2934 = vmatprep.subr.bf16.mxu0 %v2138
        %2935 = vmatpush1.bf16.msra.mxu0 %v2137
        %2936 = vmatprep.subr.bf16.mxu0 %v2134
        %2937 = vmatpush1.bf16.msra.mxu0 %v2133
        %2938 = vmatprep.subr.bf16.mxu0 %v2130
        %2939 = vmatpush1.bf16.msra.mxu0 %v2129
        %2940 = vmatprep.subr.bf16.mxu0 %v2126
        %2941 = vmatpush1.bf16.msra.mxu0 %v2125
        %2942 = vmatprep.subr.bf16.mxu0 %v2122
        %2943 = vmatpush1.bf16.msra.mxu0 %v2121
        %2944 = vmatprep.subr.bf16.mxu0 %v2118
        %2945 = vmatpush1.bf16.msra.mxu0 %v2117
        %2946 = vmatprep.subr.bf16.mxu0 %v2114
        %2947 = vmatpush1.bf16.msra.mxu0 %v2113
        %2948 = vmatprep.subr.bf16.mxu0 %v2174
        %2949 = vmatpush2.bf16.msra.mxu0 %v2173
        %2950 = vmatprep.subr.bf16.mxu0 %v2170
        %2951 = vmatpush2.bf16.msra.mxu0 %v2169
        %2952 = vmatprep.subr.bf16.mxu0 %v2166
        %2953 = vmatpush2.bf16.msra.mxu0 %v2165
        %2954 = vmatprep.subr.bf16.mxu0 %v2162
        %2955 = vmatpush2.bf16.msra.mxu0 %v2161
        %2956 = vmatprep.subr.bf16.mxu0 %v2158
        %2957 = vmatpush2.bf16.msra.mxu0 %v2157
        %2958 = vmatprep.subr.bf16.mxu0 %v2154
        %2959 = vmatpush2.bf16.msra.mxu0 %v2153
        %2960 = vmatprep.subr.bf16.mxu0 %v2150
        %2961 = vmatpush2.bf16.msra.mxu0 %v2149
        %2962 = vmatprep.subr.bf16.mxu0 %v2146
        %2963 = vmatpush2.bf16.msra.mxu0 %v2145
        %2964 = vmatprep.mubr.bf16.mxu0 %v280
        %2965 = vmatmul.mubr.bf16.gmra.mxu0 %v279
        %v2966 = vpop.f32.mrf.mxu0
        %v2967 = vadd.f32 %v2924, %v2966
        %v2968 = vpop.f32.mrf.mxu0
        %v2969 = vadd.f32 %v2926, %v2968
        %v2970 = vpop.f32.mrf.mxu0
        %v2971 = vadd.f32 %v2928, %v2970
        %v2972 = vpop.f32.mrf.mxu0
        %v2973 = vadd.f32 %v2930, %v2972
        %2974 = vdwg.mxu0
        %2975 = vmatprep.subr.bf16.mxu0 %v2206
        %2976 = vmatpush1.bf16.msra.mxu0 %v2205
        %2977 = vmatprep.subr.bf16.mxu0 %v2202
        %2978 = vmatpush1.bf16.msra.mxu0 %v2201
        %2979 = vmatprep.subr.bf16.mxu0 %v2198
        %2980 = vmatpush1.bf16.msra.mxu0 %v2197
        %2981 = vmatprep.subr.bf16.mxu0 %v2194
        %2982 = vmatpush1.bf16.msra.mxu0 %v2193
        %2983 = vmatprep.subr.bf16.mxu0 %v2190
        %2984 = vmatpush1.bf16.msra.mxu0 %v2189
        %2985 = vmatprep.subr.bf16.mxu0 %v2186
        %2986 = vmatpush1.bf16.msra.mxu0 %v2185
        %2987 = vmatprep.subr.bf16.mxu0 %v2182
        %2988 = vmatpush1.bf16.msra.mxu0 %v2181
        %2989 = vmatprep.subr.bf16.mxu0 %v2178
        %2990 = vmatpush1.bf16.msra.mxu0 %v2177
        %2991 = vmatprep.subr.bf16.mxu0 %v2238
        %2992 = vmatpush2.bf16.msra.mxu0 %v2237
        %2993 = vmatprep.subr.bf16.mxu0 %v2234
        %2994 = vmatpush2.bf16.msra.mxu0 %v2233
        %2995 = vmatprep.subr.bf16.mxu0 %v2230
        %2996 = vmatpush2.bf16.msra.mxu0 %v2229
        %2997 = vmatprep.subr.bf16.mxu0 %v2226
        %2998 = vmatpush2.bf16.msra.mxu0 %v2225
        %2999 = vmatprep.subr.bf16.mxu0 %v2222
        %3000 = vmatpush2.bf16.msra.mxu0 %v2221
        %3001 = vmatprep.subr.bf16.mxu0 %v2218
        %3002 = vmatpush2.bf16.msra.mxu0 %v2217
        %3003 = vmatprep.subr.bf16.mxu0 %v2214
        %3004 = vmatpush2.bf16.msra.mxu0 %v2213
        %3005 = vmatprep.subr.bf16.mxu0 %v2210
        %3006 = vmatpush2.bf16.msra.mxu0 %v2209
        %3007 = vmatprep.mubr.bf16.mxu0 %v282
        %3008 = vmatmul.mubr.bf16.gmra.mxu0 %v281
        %v3009 = vpop.f32.mrf.mxu0
        %v3010 = vadd.f32 %v2967, %v3009
        %v3011 = vpop.f32.mrf.mxu0
        %v3012 = vadd.f32 %v2969, %v3011
        %v3013 = vpop.f32.mrf.mxu0
        %v3014 = vadd.f32 %v2971, %v3013
        %v3015 = vpop.f32.mrf.mxu0
        %v3016 = vadd.f32 %v2973, %v3015
        %3017 = vdwg.mxu0
        %3018 = vmatprep.subr.bf16.mxu0 %v2270
        %3019 = vmatpush1.bf16.msra.mxu0 %v2269
        %3020 = vmatprep.subr.bf16.mxu0 %v2266
        %3021 = vmatpush1.bf16.msra.mxu0 %v2265
        %3022 = vmatprep.subr.bf16.mxu0 %v2262
        %3023 = vmatpush1.bf16.msra.mxu0 %v2261
        %3024 = vmatprep.subr.bf16.mxu0 %v2258
        %3025 = vmatpush1.bf16.msra.mxu0 %v2257
        %3026 = vmatprep.subr.bf16.mxu0 %v2254
        %3027 = vmatpush1.bf16.msra.mxu0 %v2253
        %3028 = vmatprep.subr.bf16.mxu0 %v2250
        %3029 = vmatpush1.bf16.msra.mxu0 %v2249
        %3030 = vmatprep.subr.bf16.mxu0 %v2246
        %3031 = vmatpush1.bf16.msra.mxu0 %v2245
        %3032 = vmatprep.subr.bf16.mxu0 %v2242
        %3033 = vmatpush1.bf16.msra.mxu0 %v2241
        %3034 = vmatprep.subr.bf16.mxu0 %v2302
        %3035 = vmatpush2.bf16.msra.mxu0 %v2301
        %3036 = vmatprep.subr.bf16.mxu0 %v2298
        %3037 = vmatpush2.bf16.msra.mxu0 %v2297
        %3038 = vmatprep.subr.bf16.mxu0 %v2294
        %3039 = vmatpush2.bf16.msra.mxu0 %v2293
        %3040 = vmatprep.subr.bf16.mxu0 %v2290
        %3041 = vmatpush2.bf16.msra.mxu0 %v2289
        %3042 = vmatprep.subr.bf16.mxu0 %v2286
        %3043 = vmatpush2.bf16.msra.mxu0 %v2285
        %3044 = vmatprep.subr.bf16.mxu0 %v2282
        %3045 = vmatpush2.bf16.msra.mxu0 %v2281
        %3046 = vmatprep.subr.bf16.mxu0 %v2278
        %3047 = vmatpush2.bf16.msra.mxu0 %v2277
        %3048 = vmatprep.subr.bf16.mxu0 %v2274
        %3049 = vmatpush2.bf16.msra.mxu0 %v2273
        %3050 = vmatprep.mubr.bf16.mxu0 %v284
        %3051 = vmatmul.mubr.bf16.gmra.mxu0 %v283
        %v3052 = vpop.f32.mrf.mxu0
        %v3053 = vadd.f32 %v3010, %v3052
        %v3054 = vpop.f32.mrf.mxu0
        %v3055 = vadd.f32 %v3012, %v3054
        %v3056 = vpop.f32.mrf.mxu0
        %v3057 = vadd.f32 %v3014, %v3056
        %v3058 = vpop.f32.mrf.mxu0
        %v3059 = vadd.f32 %v3016, %v3058
        %3060 = vdwg.mxu0
        %3061 = vmatprep.subr.bf16.mxu0 %v2334
        %3062 = vmatpush1.bf16.msra.mxu0 %v2333
        %3063 = vmatprep.subr.bf16.mxu0 %v2330
        %3064 = vmatpush1.bf16.msra.mxu0 %v2329
        %3065 = vmatprep.subr.bf16.mxu0 %v2326
        %3066 = vmatpush1.bf16.msra.mxu0 %v2325
        %3067 = vmatprep.subr.bf16.mxu0 %v2322
        %3068 = vmatpush1.bf16.msra.mxu0 %v2321
        %3069 = vmatprep.subr.bf16.mxu0 %v2318
        %3070 = vmatpush1.bf16.msra.mxu0 %v2317
        %3071 = vmatprep.subr.bf16.mxu0 %v2314
        %3072 = vmatpush1.bf16.msra.mxu0 %v2313
        %3073 = vmatprep.subr.bf16.mxu0 %v2310
        %3074 = vmatpush1.bf16.msra.mxu0 %v2309
        %3075 = vmatprep.subr.bf16.mxu0 %v2306
        %3076 = vmatpush1.bf16.msra.mxu0 %v2305
        %3077 = vmatprep.subr.bf16.mxu0 %v2366
        %3078 = vmatpush2.bf16.msra.mxu0 %v2365
        %3079 = vmatprep.subr.bf16.mxu0 %v2362
        %3080 = vmatpush2.bf16.msra.mxu0 %v2361
        %3081 = vmatprep.subr.bf16.mxu0 %v2358
        %3082 = vmatpush2.bf16.msra.mxu0 %v2357
        %3083 = vmatprep.subr.bf16.mxu0 %v2354
        %3084 = vmatpush2.bf16.msra.mxu0 %v2353
        %3085 = vmatprep.subr.bf16.mxu0 %v2350
        %3086 = vmatpush2.bf16.msra.mxu0 %v2349
        %3087 = vmatprep.subr.bf16.mxu0 %v2346
        %3088 = vmatpush2.bf16.msra.mxu0 %v2345
        %3089 = vmatprep.subr.bf16.mxu0 %v2342
        %3090 = vmatpush2.bf16.msra.mxu0 %v2341
        %3091 = vmatprep.subr.bf16.mxu0 %v2338
        %3092 = vmatpush2.bf16.msra.mxu0 %v2337
        %3093 = vmatprep.mubr.bf16.mxu0 %v286
        %3094 = vmatmul.mubr.bf16.gmra.mxu0 %v285
        %v3095 = vpop.f32.mrf.mxu0
        %v3096 = vadd.f32 %v3053, %v3095
        %v3097 = vpop.f32.mrf.mxu0
        %v3098 = vadd.f32 %v3055, %v3097
        %v3099 = vpop.f32.mrf.mxu0
        %v3100 = vadd.f32 %v3057, %v3099
        %v3101 = vpop.f32.mrf.mxu0
        %v3102 = vadd.f32 %v3059, %v3101
        %3103 = vdwg.mxu0
        %3104 = vmatprep.subr.bf16.mxu0 %v2398
        %3105 = vmatpush1.bf16.msra.mxu0 %v2397
        %3106 = vmatprep.subr.bf16.mxu0 %v2394
        %3107 = vmatpush1.bf16.msra.mxu0 %v2393
        %3108 = vmatprep.subr.bf16.mxu0 %v2390
        %3109 = vmatpush1.bf16.msra.mxu0 %v2389
        %3110 = vmatprep.subr.bf16.mxu0 %v2386
        %3111 = vmatpush1.bf16.msra.mxu0 %v2385
        %3112 = vmatprep.subr.bf16.mxu0 %v2382
        %3113 = vmatpush1.bf16.msra.mxu0 %v2381
        %3114 = vmatprep.subr.bf16.mxu0 %v2378
        %3115 = vmatpush1.bf16.msra.mxu0 %v2377
        %3116 = vmatprep.subr.bf16.mxu0 %v2374
        %3117 = vmatpush1.bf16.msra.mxu0 %v2373
        %3118 = vmatprep.subr.bf16.mxu0 %v2370
        %3119 = vmatpush1.bf16.msra.mxu0 %v2369
        %3120 = vmatprep.subr.bf16.mxu0 0
        %3121 = vmatpush2.bf16.msra.mxu0 0
        %3122 = vmatprep.subr.bf16.mxu0 0
        %3123 = vmatpush2.bf16.msra.mxu0 0
        %3124 = vmatprep.subr.bf16.mxu0 0
        %3125 = vmatpush2.bf16.msra.mxu0 0
        %3126 = vmatprep.subr.bf16.mxu0 0
        %3127 = vmatpush2.bf16.msra.mxu0 0
        %3128 = vmatprep.subr.bf16.mxu0 0
        %3129 = vmatpush2.bf16.msra.mxu0 0
        %3130 = vmatprep.subr.bf16.mxu0 0
        %3131 = vmatpush2.bf16.msra.mxu0 0
        %3132 = vmatprep.subr.bf16.mxu0 %v2838
        %3133 = vmatpush2.bf16.msra.mxu0 %v2835
        %3134 = vmatprep.subr.bf16.mxu0 %v2402
        %3135 = vmatpush2.bf16.msra.mxu0 %v2401
        %3136 = vmatprep.mubr.bf16.mxu0 %v2831
        %3137 = vmatmul.mubr.bf16.gmra.mxu0 %v287
        %v3138 = vpop.f32.mrf.mxu0
        %v3139 = vadd.f32 %v3096, %v3138
        %v3140 = vpop.f32.mrf.mxu0
        %v3141 = vadd.f32 %v3098, %v3140
        %v3142 = vpop.f32.mrf.mxu0
        %v3143 = vadd.f32 %v3100, %v3142
        %v3144 = vpop.f32.mrf.mxu0
        %v3145 = vadd.f32 %v3102, %v3144
        %3146 = vdwg.mxu0
        %3147 = vmatprep.subr.bf16.mxu0 %v2016
        %3148 = vmatpush1.bf16.msra.mxu0 %v2015
        %3149 = vmatprep.subr.bf16.mxu0 %v2012
        %3150 = vmatpush1.bf16.msra.mxu0 %v2011
        %3151 = vmatprep.subr.bf16.mxu0 %v2008
        %3152 = vmatpush1.bf16.msra.mxu0 %v2007
        %3153 = vmatprep.subr.bf16.mxu0 %v2004
        %3154 = vmatpush1.bf16.msra.mxu0 %v2003
        %3155 = vmatprep.subr.bf16.mxu0 %v2000
        %3156 = vmatpush1.bf16.msra.mxu0 %v1999
        %3157 = vmatprep.subr.bf16.mxu0 %v1996
        %3158 = vmatpush1.bf16.msra.mxu0 %v1995
        %3159 = vmatprep.subr.bf16.mxu0 %v1992
        %3160 = vmatpush1.bf16.msra.mxu0 %v1991
        %3161 = vmatprep.subr.bf16.mxu0 %v1988
        %3162 = vmatpush1.bf16.msra.mxu0 %v1987
        %3163 = vmatprep.subr.bf16.mxu0 %v2048
        %3164 = vmatpush2.bf16.msra.mxu0 %v2047
        %3165 = vmatprep.subr.bf16.mxu0 %v2044
        %3166 = vmatpush2.bf16.msra.mxu0 %v2043
        %3167 = vmatprep.subr.bf16.mxu0 %v2040
        %3168 = vmatpush2.bf16.msra.mxu0 %v2039
        %3169 = vmatprep.subr.bf16.mxu0 %v2036
        %3170 = vmatpush2.bf16.msra.mxu0 %v2035
        %3171 = vmatprep.subr.bf16.mxu0 %v2032
        %3172 = vmatpush2.bf16.msra.mxu0 %v2031
        %3173 = vmatprep.subr.bf16.mxu0 %v2028
        %3174 = vmatpush2.bf16.msra.mxu0 %v2027
        %3175 = vmatprep.subr.bf16.mxu0 %v2024
        %3176 = vmatpush2.bf16.msra.mxu0 %v2023
        %3177 = vmatprep.subr.bf16.mxu0 %v2020
        %3178 = vmatpush2.bf16.msra.mxu0 %v2019
        %3179 = vmatprep.mubr.bf16.mxu0 %v276
        %3180 = vmatmul.mubr.bf16.gmra.mxu0 %v275
        %v3181 = vpop.f32.mrf.mxu0
        %v3182 = vadd.f32 0.0, %v3181
        %v3183 = vpop.f32.mrf.mxu0
        %v3184 = vadd.f32 0.0, %v3183
        %v3185 = vpop.f32.mrf.mxu0
        %v3186 = vadd.f32 0.0, %v3185
        %v3187 = vpop.f32.mrf.mxu0
        %v3188 = vadd.f32 0.0, %v3187
        %3189 = vdwg.mxu0
        %3190 = vmatprep.subr.bf16.mxu0 %v2080
        %3191 = vmatpush1.bf16.msra.mxu0 %v2079
        %3192 = vmatprep.subr.bf16.mxu0 %v2076
        %3193 = vmatpush1.bf16.msra.mxu0 %v2075
        %3194 = vmatprep.subr.bf16.mxu0 %v2072
        %3195 = vmatpush1.bf16.msra.mxu0 %v2071
        %3196 = vmatprep.subr.bf16.mxu0 %v2068
        %3197 = vmatpush1.bf16.msra.mxu0 %v2067
        %3198 = vmatprep.subr.bf16.mxu0 %v2064
        %3199 = vmatpush1.bf16.msra.mxu0 %v2063
        %3200 = vmatprep.subr.bf16.mxu0 %v2060
        %3201 = vmatpush1.bf16.msra.mxu0 %v2059
        %3202 = vmatprep.subr.bf16.mxu0 %v2056
        %3203 = vmatpush1.bf16.msra.mxu0 %v2055
        %3204 = vmatprep.subr.bf16.mxu0 %v2052
        %3205 = vmatpush1.bf16.msra.mxu0 %v2051
        %3206 = vmatprep.subr.bf16.mxu0 %v2112
        %3207 = vmatpush2.bf16.msra.mxu0 %v2111
        %3208 = vmatprep.subr.bf16.mxu0 %v2108
        %3209 = vmatpush2.bf16.msra.mxu0 %v2107
        %3210 = vmatprep.subr.bf16.mxu0 %v2104
        %3211 = vmatpush2.bf16.msra.mxu0 %v2103
        %3212 = vmatprep.subr.bf16.mxu0 %v2100
        %3213 = vmatpush2.bf16.msra.mxu0 %v2099
        %3214 = vmatprep.subr.bf16.mxu0 %v2096
        %3215 = vmatpush2.bf16.msra.mxu0 %v2095
        %3216 = vmatprep.subr.bf16.mxu0 %v2092
        %3217 = vmatpush2.bf16.msra.mxu0 %v2091
        %3218 = vmatprep.subr.bf16.mxu0 %v2088
        %3219 = vmatpush2.bf16.msra.mxu0 %v2087
        %3220 = vmatprep.subr.bf16.mxu0 %v2084
        %3221 = vmatpush2.bf16.msra.mxu0 %v2083
        %3222 = vmatprep.mubr.bf16.mxu0 %v278
        %3223 = vmatmul.mubr.bf16.gmra.mxu0 %v277
        %v3224 = vpop.f32.mrf.mxu0
        %v3225 = vadd.f32 %v3182, %v3224
        %v3226 = vpop.f32.mrf.mxu0
        %v3227 = vadd.f32 %v3184, %v3226
        %v3228 = vpop.f32.mrf.mxu0
        %v3229 = vadd.f32 %v3186, %v3228
        %v3230 = vpop.f32.mrf.mxu0
        %v3231 = vadd.f32 %v3188, %v3230
        %3232 = vdwg.mxu0
        %3233 = vmatprep.subr.bf16.mxu0 %v2144
        %3234 = vmatpush1.bf16.msra.mxu0 %v2143
        %3235 = vmatprep.subr.bf16.mxu0 %v2140
        %3236 = vmatpush1.bf16.msra.mxu0 %v2139
        %3237 = vmatprep.subr.bf16.mxu0 %v2136
        %3238 = vmatpush1.bf16.msra.mxu0 %v2135
        %3239 = vmatprep.subr.bf16.mxu0 %v2132
        %3240 = vmatpush1.bf16.msra.mxu0 %v2131
        %3241 = vmatprep.subr.bf16.mxu0 %v2128
        %3242 = vmatpush1.bf16.msra.mxu0 %v2127
        %3243 = vmatprep.subr.bf16.mxu0 %v2124
        %3244 = vmatpush1.bf16.msra.mxu0 %v2123
        %3245 = vmatprep.subr.bf16.mxu0 %v2120
        %3246 = vmatpush1.bf16.msra.mxu0 %v2119
        %3247 = vmatprep.subr.bf16.mxu0 %v2116
        %3248 = vmatpush1.bf16.msra.mxu0 %v2115
        %3249 = vmatprep.subr.bf16.mxu0 %v2176
        %3250 = vmatpush2.bf16.msra.mxu0 %v2175
        %3251 = vmatprep.subr.bf16.mxu0 %v2172
        %3252 = vmatpush2.bf16.msra.mxu0 %v2171
        %3253 = vmatprep.subr.bf16.mxu0 %v2168
        %3254 = vmatpush2.bf16.msra.mxu0 %v2167
        %3255 = vmatprep.subr.bf16.mxu0 %v2164
        %3256 = vmatpush2.bf16.msra.mxu0 %v2163
        %3257 = vmatprep.subr.bf16.mxu0 %v2160
        %3258 = vmatpush2.bf16.msra.mxu0 %v2159
        %3259 = vmatprep.subr.bf16.mxu0 %v2156
        %3260 = vmatpush2.bf16.msra.mxu0 %v2155
        %3261 = vmatprep.subr.bf16.mxu0 %v2152
        %3262 = vmatpush2.bf16.msra.mxu0 %v2151
        %3263 = vmatprep.subr.bf16.mxu0 %v2148
        %3264 = vmatpush2.bf16.msra.mxu0 %v2147
        %3265 = vmatprep.mubr.bf16.mxu0 %v280
        %3266 = vmatmul.mubr.bf16.gmra.mxu0 %v279
        %v3267 = vpop.f32.mrf.mxu0
        %v3268 = vadd.f32 %v3225, %v3267
        %v3269 = vpop.f32.mrf.mxu0
        %v3270 = vadd.f32 %v3227, %v3269
        %v3271 = vpop.f32.mrf.mxu0
        %v3272 = vadd.f32 %v3229, %v3271
        %v3273 = vpop.f32.mrf.mxu0
        %v3274 = vadd.f32 %v3231, %v3273
        %3275 = vdwg.mxu0
        %3276 = vmatprep.subr.bf16.mxu0 %v2208
        %3277 = vmatpush1.bf16.msra.mxu0 %v2207
        %3278 = vmatprep.subr.bf16.mxu0 %v2204
        %3279 = vmatpush1.bf16.msra.mxu0 %v2203
        %3280 = vmatprep.subr.bf16.mxu0 %v2200
        %3281 = vmatpush1.bf16.msra.mxu0 %v2199
        %3282 = vmatprep.subr.bf16.mxu0 %v2196
        %3283 = vmatpush1.bf16.msra.mxu0 %v2195
        %3284 = vmatprep.subr.bf16.mxu0 %v2192
        %3285 = vmatpush1.bf16.msra.mxu0 %v2191
        %3286 = vmatprep.subr.bf16.mxu0 %v2188
        %3287 = vmatpush1.bf16.msra.mxu0 %v2187
        %3288 = vmatprep.subr.bf16.mxu0 %v2184
        %3289 = vmatpush1.bf16.msra.mxu0 %v2183
        %3290 = vmatprep.subr.bf16.mxu0 %v2180
        %3291 = vmatpush1.bf16.msra.mxu0 %v2179
        %3292 = vmatprep.subr.bf16.mxu0 %v2240
        %3293 = vmatpush2.bf16.msra.mxu0 %v2239
        %3294 = vmatprep.subr.bf16.mxu0 %v2236
        %3295 = vmatpush2.bf16.msra.mxu0 %v2235
        %3296 = vmatprep.subr.bf16.mxu0 %v2232
        %3297 = vmatpush2.bf16.msra.mxu0 %v2231
        %3298 = vmatprep.subr.bf16.mxu0 %v2228
        %3299 = vmatpush2.bf16.msra.mxu0 %v2227
        %3300 = vmatprep.subr.bf16.mxu0 %v2224
        %3301 = vmatpush2.bf16.msra.mxu0 %v2223
        %3302 = vmatprep.subr.bf16.mxu0 %v2220
        %3303 = vmatpush2.bf16.msra.mxu0 %v2219
        %3304 = vmatprep.subr.bf16.mxu0 %v2216
        %3305 = vmatpush2.bf16.msra.mxu0 %v2215
        %3306 = vmatprep.subr.bf16.mxu0 %v2212
        %3307 = vmatpush2.bf16.msra.mxu0 %v2211
        %3308 = vmatprep.mubr.bf16.mxu0 %v282
        %3309 = vmatmul.mubr.bf16.gmra.mxu0 %v281
        %v3310 = vpop.f32.mrf.mxu0
        %v3311 = vadd.f32 %v3268, %v3310
        %v3312 = vpop.f32.mrf.mxu0
        %v3313 = vadd.f32 %v3270, %v3312
        %v3314 = vpop.f32.mrf.mxu0
        %v3315 = vadd.f32 %v3272, %v3314
        %v3316 = vpop.f32.mrf.mxu0
        %v3317 = vadd.f32 %v3274, %v3316
        %3318 = vdwg.mxu0
        %3319 = vmatprep.subr.bf16.mxu0 %v2272
        %3320 = vmatpush1.bf16.msra.mxu0 %v2271
        %3321 = vmatprep.subr.bf16.mxu0 %v2268
        %3322 = vmatpush1.bf16.msra.mxu0 %v2267
        %3323 = vmatprep.subr.bf16.mxu0 %v2264
        %3324 = vmatpush1.bf16.msra.mxu0 %v2263
        %3325 = vmatprep.subr.bf16.mxu0 %v2260
        %3326 = vmatpush1.bf16.msra.mxu0 %v2259
        %3327 = vmatprep.subr.bf16.mxu0 %v2256
        %3328 = vmatpush1.bf16.msra.mxu0 %v2255
        %3329 = vmatprep.subr.bf16.mxu0 %v2252
        %3330 = vmatpush1.bf16.msra.mxu0 %v2251
        %3331 = vmatprep.subr.bf16.mxu0 %v2248
        %3332 = vmatpush1.bf16.msra.mxu0 %v2247
        %3333 = vmatprep.subr.bf16.mxu0 %v2244
        %3334 = vmatpush1.bf16.msra.mxu0 %v2243
        %3335 = vmatprep.subr.bf16.mxu0 %v2304
        %3336 = vmatpush2.bf16.msra.mxu0 %v2303
        %3337 = vmatprep.subr.bf16.mxu0 %v2300
        %3338 = vmatpush2.bf16.msra.mxu0 %v2299
        %3339 = vmatprep.subr.bf16.mxu0 %v2296
        %3340 = vmatpush2.bf16.msra.mxu0 %v2295
        %3341 = vmatprep.subr.bf16.mxu0 %v2292
        %3342 = vmatpush2.bf16.msra.mxu0 %v2291
        %3343 = vmatprep.subr.bf16.mxu0 %v2288
        %3344 = vmatpush2.bf16.msra.mxu0 %v2287
        %3345 = vmatprep.subr.bf16.mxu0 %v2284
        %3346 = vmatpush2.bf16.msra.mxu0 %v2283
        %3347 = vmatprep.subr.bf16.mxu0 %v2280
        %3348 = vmatpush2.bf16.msra.mxu0 %v2279
        %3349 = vmatprep.subr.bf16.mxu0 %v2276
        %3350 = vmatpush2.bf16.msra.mxu0 %v2275
        %3351 = vmatprep.mubr.bf16.mxu0 %v284
        %3352 = vmatmul.mubr.bf16.gmra.mxu0 %v283
        %v3353 = vpop.f32.mrf.mxu0
        %v3354 = vadd.f32 %v3311, %v3353
        %v3355 = vpop.f32.mrf.mxu0
        %v3356 = vadd.f32 %v3313, %v3355
        %v3357 = vpop.f32.mrf.mxu0
        %v3358 = vadd.f32 %v3315, %v3357
        %v3359 = vpop.f32.mrf.mxu0
        %v3360 = vadd.f32 %v3317, %v3359
        %3361 = vdwg.mxu0
        %3362 = vmatprep.subr.bf16.mxu0 %v2336
        %3363 = vmatpush1.bf16.msra.mxu0 %v2335
        %3364 = vmatprep.subr.bf16.mxu0 %v2332
        %3365 = vmatpush1.bf16.msra.mxu0 %v2331
        %3366 = vmatprep.subr.bf16.mxu0 %v2328
        %3367 = vmatpush1.bf16.msra.mxu0 %v2327
        %3368 = vmatprep.subr.bf16.mxu0 %v2324
        %3369 = vmatpush1.bf16.msra.mxu0 %v2323
        %3370 = vmatprep.subr.bf16.mxu0 %v2320
        %3371 = vmatpush1.bf16.msra.mxu0 %v2319
        %3372 = vmatprep.subr.bf16.mxu0 %v2316
        %3373 = vmatpush1.bf16.msra.mxu0 %v2315
        %3374 = vmatprep.subr.bf16.mxu0 %v2312
        %3375 = vmatpush1.bf16.msra.mxu0 %v2311
        %3376 = vmatprep.subr.bf16.mxu0 %v2308
        %3377 = vmatpush1.bf16.msra.mxu0 %v2307
        %3378 = vmatprep.subr.bf16.mxu0 %v2368
        %3379 = vmatpush2.bf16.msra.mxu0 %v2367
        %3380 = vmatprep.subr.bf16.mxu0 %v2364
        %3381 = vmatpush2.bf16.msra.mxu0 %v2363
        %3382 = vmatprep.subr.bf16.mxu0 %v2360
        %3383 = vmatpush2.bf16.msra.mxu0 %v2359
        %3384 = vmatprep.subr.bf16.mxu0 %v2356
        %3385 = vmatpush2.bf16.msra.mxu0 %v2355
        %3386 = vmatprep.subr.bf16.mxu0 %v2352
        %3387 = vmatpush2.bf16.msra.mxu0 %v2351
        %3388 = vmatprep.subr.bf16.mxu0 %v2348
        %3389 = vmatpush2.bf16.msra.mxu0 %v2347
        %3390 = vmatprep.subr.bf16.mxu0 %v2344
        %3391 = vmatpush2.bf16.msra.mxu0 %v2343
        %3392 = vmatprep.subr.bf16.mxu0 %v2340
        %3393 = vmatpush2.bf16.msra.mxu0 %v2339
        %3394 = vmatprep.mubr.bf16.mxu0 %v286
        %3395 = vmatmul.mubr.bf16.gmra.mxu0 %v285
        %v3396 = vpop.f32.mrf.mxu0
        %v3397 = vadd.f32 %v3354, %v3396
        %v3398 = vpop.f32.mrf.mxu0
        %v3399 = vadd.f32 %v3356, %v3398
        %v3400 = vpop.f32.mrf.mxu0
        %v3401 = vadd.f32 %v3358, %v3400
        %v3402 = vpop.f32.mrf.mxu0
        %v3403 = vadd.f32 %v3360, %v3402
        %3404 = vdwg.mxu0
        %3405 = vmatprep.subr.bf16.mxu0 %v2400
        %3406 = vmatpush1.bf16.msra.mxu0 %v2399
        %3407 = vmatprep.subr.bf16.mxu0 %v2396
        %3408 = vmatpush1.bf16.msra.mxu0 %v2395
        %3409 = vmatprep.subr.bf16.mxu0 %v2392
        %3410 = vmatpush1.bf16.msra.mxu0 %v2391
        %3411 = vmatprep.subr.bf16.mxu0 %v2388
        %3412 = vmatpush1.bf16.msra.mxu0 %v2387
        %3413 = vmatprep.subr.bf16.mxu0 %v2384
        %3414 = vmatpush1.bf16.msra.mxu0 %v2383
        %3415 = vmatprep.subr.bf16.mxu0 %v2380
        %3416 = vmatpush1.bf16.msra.mxu0 %v2379
        %3417 = vmatprep.subr.bf16.mxu0 %v2376
        %3418 = vmatpush1.bf16.msra.mxu0 %v2375
        %3419 = vmatprep.subr.bf16.mxu0 %v2372
        %3420 = vmatpush1.bf16.msra.mxu0 %v2371
        %3421 = vmatprep.subr.bf16.mxu0 0
        %3422 = vmatpush2.bf16.msra.mxu0 0
        %3423 = vmatprep.subr.bf16.mxu0 0
        %3424 = vmatpush2.bf16.msra.mxu0 0
        %3425 = vmatprep.subr.bf16.mxu0 0
        %3426 = vmatpush2.bf16.msra.mxu0 0
        %3427 = vmatprep.subr.bf16.mxu0 0
        %3428 = vmatpush2.bf16.msra.mxu0 0
        %3429 = vmatprep.subr.bf16.mxu0 0
        %3430 = vmatpush2.bf16.msra.mxu0 0
        %3431 = vmatprep.subr.bf16.mxu0 0
        %3432 = vmatpush2.bf16.msra.mxu0 0
        %3433 = vmatprep.subr.bf16.mxu0 %v2844
        %3434 = vmatpush2.bf16.msra.mxu0 %v2841
        %3435 = vmatprep.subr.bf16.mxu0 %v2404
        %3436 = vmatpush2.bf16.msra.mxu0 %v2403
        %3437 = vmatprep.mubr.bf16.mxu0 %v2831
        %3438 = vmatmul.mubr.bf16.gmra.mxu0 %v287
        %v3439 = vpop.f32.mrf.mxu0
        %v3440 = vadd.f32 %v3397, %v3439
        %v3441 = vpop.f32.mrf.mxu0
        %v3442 = vadd.f32 %v3399, %v3441
        %v3443 = vpop.f32.mrf.mxu0
        %v3444 = vadd.f32 %v3401, %v3443
        %v3445 = vpop.f32.mrf.mxu0
        %v3446 = vadd.f32 %v3403, %v3445
        %3447 = vdwg.mxu0
        %v3448 = vmax.f32 %v3139, 0.0
        %v3449 = vmax.f32 %v3141, 0.0
        %v3450 = vmax.f32 %v3440, 0.0
        %v3451 = vmax.f32 %v3442, 0.0
        %v3452 = vmax.f32 %v3143, 0.0
        %v3453 = vmax.f32 %v3145, 0.0
        %v3454 = vmax.f32 %v3444, 0.0
        %v3455 = vmax.f32 %v3446, 0.0
        %v3456 = vpack.c.bf16 %v3452, %v3448
        %v3457 = vpack.c.bf16 %v3453, %v3449
        %v3458 = vpack.c.bf16 %v3454, %v3450
        %v3459 = vpack.c.bf16 %v3455, %v3451
        %v3460 = vld [vmem:[%s2] sm:$0xff]
        %v3461 = vld [vmem:[%s2 + $0x8] sm:$0xff]
        %v3462 = vld [vmem:[%s2 + $0x10] sm:$0xff]
        %v3463 = vld [vmem:[%s2 + $0x18] sm:$0xff]
        %v3464 = vld [vmem:[%s2 + $0x20] sm:$0xff]
        %v3465 = vld [vmem:[%s2 + $0x28] sm:$0xff]
        %v3466 = vld [vmem:[%s2 + $0x30] sm:$0xff]
        %v3467 = vld [vmem:[%s2 + $0x38] sm:$0xff]
        %v3468 = vld [vmem:[%s2 + $0x40] sm:$0xff]
        %v3469 = vld [vmem:[%s2 + $0x48] sm:$0xff]
        %v3470 = vld [vmem:[%s2 + $0x50] sm:$0xff]
        %v3471 = vld [vmem:[%s2 + $0x58] sm:$0xff]
        %v3472 = vld [vmem:[%s2 + $0x60] sm:$0xff]
        %v3473 = vld [vmem:[%s2 + $0x68] sm:$0xff]
        %v3474 = vld [vmem:[%s2 + $0x70] sm:$0xff]
        %v3475 = vld [vmem:[%s2 + $0x78] sm:$0xff]
        %v3476 = vld [vmem:[%s2 + $0x80] sm:$0xff]
        %v3477 = vld [vmem:[%s2 + $0x88] sm:$0xff]
        %v3478 = vld [vmem:[%s2 + $0x90] sm:$0xff]
        %v3479 = vld [vmem:[%s2 + $0x98] sm:$0xff]
        %v3480 = vld [vmem:[%s2 + $0xa0] sm:$0xff]
        %v3481 = vld [vmem:[%s2 + $0xa8] sm:$0xff]
        %v3482 = vld [vmem:[%s2 + $0xb0] sm:$0xff]
        %v3483 = vld [vmem:[%s2 + $0xb8] sm:$0xff]
        %v3484 = vld [vmem:[%s2 + $0xc0] sm:$0xff]
        %v3485 = vld [vmem:[%s2 + $0xc8] sm:$0xff]
        %v3486 = vld [vmem:[%s2 + $0xd0] sm:$0xff]
        %v3487 = vld [vmem:[%s2 + $0xd8] sm:$0xff]
        %v3488 = vld [vmem:[%s2 + $0xe0] sm:$0xff]
        %v3489 = vld [vmem:[%s2 + $0xe8] sm:$0xff]
        %v3490 = vld [vmem:[%s2 + $0xf0] sm:$0xff]
        %v3491 = vld [vmem:[%s2 + $0xf8] sm:$0xff]
        %v3492 = vld [vmem:[%s2 + $0x100] sm:$0xff]
        %v3493 = vld [vmem:[%s2 + $0x108] sm:$0xff]
        %v3494 = vld [vmem:[%s2 + $0x110] sm:$0xff]
        %v3495 = vld [vmem:[%s2 + $0x118] sm:$0xff]
        %v3496 = vld [vmem:[%s2 + $0x120] sm:$0xff]
        %v3497 = vld [vmem:[%s2 + $0x128] sm:$0xff]
        %v3498 = vld [vmem:[%s2 + $0x130] sm:$0xff]
        %v3499 = vld [vmem:[%s2 + $0x138] sm:$0xff]
        %v3500 = vld [vmem:[%s2 + $0x140] sm:$0xff]
        %v3501 = vld [vmem:[%s2 + $0x148] sm:$0xff]
        %v3502 = vld [vmem:[%s2 + $0x150] sm:$0xff]
        %v3503 = vld [vmem:[%s2 + $0x158] sm:$0xff]
        %v3504 = vld [vmem:[%s2 + $0x160] sm:$0xff]
        %v3505 = vld [vmem:[%s2 + $0x168] sm:$0xff]
        %v3506 = vld [vmem:[%s2 + $0x170] sm:$0xff]
        %v3507 = vld [vmem:[%s2 + $0x178] sm:$0xff]
        %v3508 = vld [vmem:[%s2 + $0x180] sm:$0xff]
        %v3509 = vld [vmem:[%s2 + $0x188] sm:$0xff]
        %v3510 = vld [vmem:[%s2 + $0x190] sm:$0xff]
        %v3511 = vld [vmem:[%s2 + $0x198] sm:$0xff]
        %v3512 = vld [vmem:[%s2 + $0x1a0] sm:$0xff]
        %v3513 = vld [vmem:[%s2 + $0x1a8] sm:$0xff]
        %v3514 = vld [vmem:[%s2 + $0x1b0] sm:$0xff]
        %v3515 = vld [vmem:[%s2 + $0x1b8] sm:$0xff]
        %v3516 = vld [vmem:[%s2 + $0x1c0] sm:$0xff]
        %v3517 = vld [vmem:[%s2 + $0x1c8] sm:$0xff]
        %v3518 = vld [vmem:[%s2 + $0x1d0] sm:$0xff]
        %v3519 = vld [vmem:[%s2 + $0x1d8] sm:$0xff]
        %v3520 = vld [vmem:[%s2 + $0x1e0] sm:$0xff]
        %v3521 = vld [vmem:[%s2 + $0x1e8] sm:$0xff]
        %v3522 = vld [vmem:[%s2 + $0x1f0] sm:$0xff]
        %v3523 = vld [vmem:[%s2 + $0x1f8] sm:$0xff]
        %v3588 = vunpack.c.l.b16 %v3460
        %v3589 = vunpack.c.h.b16 %v3460
        %v3590 = vunpack.c.l.b16 %v3461
        %v3591 = vunpack.c.h.b16 %v3461
        %v3592 = vunpack.c.l.b16 %v3462
        %v3593 = vunpack.c.h.b16 %v3462
        %v3594 = vunpack.c.l.b16 %v3463
        %v3595 = vunpack.c.h.b16 %v3463
        %v3596 = vunpack.c.l.b16 %v3464
        %v3597 = vunpack.c.h.b16 %v3464
        %v3598 = vunpack.c.l.b16 %v3465
        %v3599 = vunpack.c.h.b16 %v3465
        %v3600 = vunpack.c.l.b16 %v3466
        %v3601 = vunpack.c.h.b16 %v3466
        %v3602 = vunpack.c.l.b16 %v3467
        %v3603 = vunpack.c.h.b16 %v3467
        %v3604 = vunpack.c.l.b16 %v3468
        %v3605 = vunpack.c.h.b16 %v3468
        %v3606 = vunpack.c.l.b16 %v3469
        %v3607 = vunpack.c.h.b16 %v3469
        %v3608 = vunpack.c.l.b16 %v3470
        %v3609 = vunpack.c.h.b16 %v3470
        %v3610 = vunpack.c.l.b16 %v3471
        %v3611 = vunpack.c.h.b16 %v3471
        %v3612 = vunpack.c.l.b16 %v3472
        %v3613 = vunpack.c.h.b16 %v3472
        %v3614 = vunpack.c.l.b16 %v3473
        %v3615 = vunpack.c.h.b16 %v3473
        %v3616 = vunpack.c.l.b16 %v3474
        %v3617 = vunpack.c.h.b16 %v3474
        %v3618 = vunpack.c.l.b16 %v3475
        %v3619 = vunpack.c.h.b16 %v3475
        %v3620 = vunpack.c.l.b16 %v3476
        %v3621 = vunpack.c.h.b16 %v3476
        %v3622 = vunpack.c.l.b16 %v3477
        %v3623 = vunpack.c.h.b16 %v3477
        %v3624 = vunpack.c.l.b16 %v3478
        %v3625 = vunpack.c.h.b16 %v3478
        %v3626 = vunpack.c.l.b16 %v3479
        %v3627 = vunpack.c.h.b16 %v3479
        %v3628 = vunpack.c.l.b16 %v3480
        %v3629 = vunpack.c.h.b16 %v3480
        %v3630 = vunpack.c.l.b16 %v3481
        %v3631 = vunpack.c.h.b16 %v3481
        %v3632 = vunpack.c.l.b16 %v3482
        %v3633 = vunpack.c.h.b16 %v3482
        %v3634 = vunpack.c.l.b16 %v3483
        %v3635 = vunpack.c.h.b16 %v3483
        %v3636 = vunpack.c.l.b16 %v3484
        %v3637 = vunpack.c.h.b16 %v3484
        %v3638 = vunpack.c.l.b16 %v3485
        %v3639 = vunpack.c.h.b16 %v3485
        %v3640 = vunpack.c.l.b16 %v3486
        %v3641 = vunpack.c.h.b16 %v3486
        %v3642 = vunpack.c.l.b16 %v3487
        %v3643 = vunpack.c.h.b16 %v3487
        %v3644 = vunpack.c.l.b16 %v3488
        %v3645 = vunpack.c.h.b16 %v3488
        %v3646 = vunpack.c.l.b16 %v3489
        %v3647 = vunpack.c.h.b16 %v3489
        %v3648 = vunpack.c.l.b16 %v3490
        %v3649 = vunpack.c.h.b16 %v3490
        %v3650 = vunpack.c.l.b16 %v3491
        %v3651 = vunpack.c.h.b16 %v3491
        %v3652 = vunpack.c.l.b16 %v3492
        %v3653 = vunpack.c.h.b16 %v3492
        %v3654 = vunpack.c.l.b16 %v3493
        %v3655 = vunpack.c.h.b16 %v3493
        %v3656 = vunpack.c.l.b16 %v3494
        %v3657 = vunpack.c.h.b16 %v3494
        %v3658 = vunpack.c.l.b16 %v3495
        %v3659 = vunpack.c.h.b16 %v3495
        %v3660 = vunpack.c.l.b16 %v3496
        %v3661 = vunpack.c.h.b16 %v3496
        %v3662 = vunpack.c.l.b16 %v3497
        %v3663 = vunpack.c.h.b16 %v3497
        %v3664 = vunpack.c.l.b16 %v3498
        %v3665 = vunpack.c.h.b16 %v3498
        %v3666 = vunpack.c.l.b16 %v3499
        %v3667 = vunpack.c.h.b16 %v3499
        %v3668 = vunpack.c.l.b16 %v3500
        %v3669 = vunpack.c.h.b16 %v3500
        %v3670 = vunpack.c.l.b16 %v3501
        %v3671 = vunpack.c.h.b16 %v3501
        %v3672 = vunpack.c.l.b16 %v3502
        %v3673 = vunpack.c.h.b16 %v3502
        %v3674 = vunpack.c.l.b16 %v3503
        %v3675 = vunpack.c.h.b16 %v3503
        %v3676 = vunpack.c.l.b16 %v3504
        %v3677 = vunpack.c.h.b16 %v3504
        %v3678 = vunpack.c.l.b16 %v3505
        %v3679 = vunpack.c.h.b16 %v3505
        %v3680 = vunpack.c.l.b16 %v3506
        %v3681 = vunpack.c.h.b16 %v3506
        %v3682 = vunpack.c.l.b16 %v3507
        %v3683 = vunpack.c.h.b16 %v3507
        %v3684 = vunpack.c.l.b16 %v3508
        %v3685 = vunpack.c.h.b16 %v3508
        %v3686 = vunpack.c.l.b16 %v3509
        %v3687 = vunpack.c.h.b16 %v3509
        %v3688 = vunpack.c.l.b16 %v3510
        %v3689 = vunpack.c.h.b16 %v3510
        %v3690 = vunpack.c.l.b16 %v3511
        %v3691 = vunpack.c.h.b16 %v3511
        %v3692 = vunpack.c.l.b16 %v3512
        %v3693 = vunpack.c.h.b16 %v3512
        %v3694 = vunpack.c.l.b16 %v3513
        %v3695 = vunpack.c.h.b16 %v3513
        %v3696 = vunpack.c.l.b16 %v3514
        %v3697 = vunpack.c.h.b16 %v3514
        %v3698 = vunpack.c.l.b16 %v3515
        %v3699 = vunpack.c.h.b16 %v3515
        %v3700 = vunpack.c.l.b16 %v3516
        %v3701 = vunpack.c.h.b16 %v3516
        %v3702 = vunpack.c.l.b16 %v3517
        %v3703 = vunpack.c.h.b16 %v3517
        %v3704 = vunpack.c.l.b16 %v3518
        %v3705 = vunpack.c.h.b16 %v3518
        %v3706 = vunpack.c.l.b16 %v3519
        %v3707 = vunpack.c.h.b16 %v3519
        %v3708 = vunpack.c.l.b16 %v3520
        %v3709 = vunpack.c.h.b16 %v3520
        %v3710 = vunpack.c.l.b16 %v3521
        %v3711 = vunpack.c.h.b16 %v3521
        %v3712 = vunpack.c.l.b16 %v3522
        %v3713 = vunpack.c.h.b16 %v3522
        %v3714 = vunpack.c.l.b16 %v3523
        %v3715 = vunpack.c.h.b16 %v3523
        %v3716 = vpack.c.b16 %v3590, %v3588
        %v3717 = vpack.c.b16 %v3591, %v3589
        %v3718 = vpack.c.b16 %v3594, %v3592
        %v3719 = vpack.c.b16 %v3595, %v3593
        %v3720 = vpack.c.b16 %v3598, %v3596
        %v3721 = vpack.c.b16 %v3599, %v3597
        %v3722 = vpack.c.b16 %v3602, %v3600
        %v3723 = vpack.c.b16 %v3603, %v3601
        %v3724 = vpack.c.b16 %v3606, %v3604
        %v3725 = vpack.c.b16 %v3607, %v3605
        %v3726 = vpack.c.b16 %v3610, %v3608
        %v3727 = vpack.c.b16 %v3611, %v3609
        %v3728 = vpack.c.b16 %v3614, %v3612
        %v3729 = vpack.c.b16 %v3615, %v3613
        %v3730 = vpack.c.b16 %v3618, %v3616
        %v3731 = vpack.c.b16 %v3619, %v3617
        %v3732 = vpack.c.b16 %v3622, %v3620
        %v3733 = vpack.c.b16 %v3623, %v3621
        %v3734 = vpack.c.b16 %v3626, %v3624
        %v3735 = vpack.c.b16 %v3627, %v3625
        %v3736 = vpack.c.b16 %v3630, %v3628
        %v3737 = vpack.c.b16 %v3631, %v3629
        %v3738 = vpack.c.b16 %v3634, %v3632
        %v3739 = vpack.c.b16 %v3635, %v3633
        %v3740 = vpack.c.b16 %v3638, %v3636
        %v3741 = vpack.c.b16 %v3639, %v3637
        %v3742 = vpack.c.b16 %v3642, %v3640
        %v3743 = vpack.c.b16 %v3643, %v3641
        %v3744 = vpack.c.b16 %v3646, %v3644
        %v3745 = vpack.c.b16 %v3647, %v3645
        %v3746 = vpack.c.b16 %v3650, %v3648
        %v3747 = vpack.c.b16 %v3651, %v3649
        %v3748 = vpack.c.b16 %v3654, %v3652
        %v3749 = vpack.c.b16 %v3655, %v3653
        %v3750 = vpack.c.b16 %v3658, %v3656
        %v3751 = vpack.c.b16 %v3659, %v3657
        %v3752 = vpack.c.b16 %v3662, %v3660
        %v3753 = vpack.c.b16 %v3663, %v3661
        %v3754 = vpack.c.b16 %v3666, %v3664
        %v3755 = vpack.c.b16 %v3667, %v3665
        %v3756 = vpack.c.b16 %v3670, %v3668
        %v3757 = vpack.c.b16 %v3671, %v3669
        %v3758 = vpack.c.b16 %v3674, %v3672
        %v3759 = vpack.c.b16 %v3675, %v3673
        %v3760 = vpack.c.b16 %v3678, %v3676
        %v3761 = vpack.c.b16 %v3679, %v3677
        %v3762 = vpack.c.b16 %v3682, %v3680
        %v3763 = vpack.c.b16 %v3683, %v3681
        %v3764 = vpack.c.b16 %v3686, %v3684
        %v3765 = vpack.c.b16 %v3687, %v3685
        %v3766 = vpack.c.b16 %v3690, %v3688
        %v3767 = vpack.c.b16 %v3691, %v3689
        %v3768 = vpack.c.b16 %v3694, %v3692
        %v3769 = vpack.c.b16 %v3695, %v3693
        %v3770 = vpack.c.b16 %v3698, %v3696
        %v3771 = vpack.c.b16 %v3699, %v3697
        %v3772 = vpack.c.b16 %v3702, %v3700
        %v3773 = vpack.c.b16 %v3703, %v3701
        %v3774 = vpack.c.b16 %v3706, %v3704
        %v3775 = vpack.c.b16 %v3707, %v3705
        %v3776 = vpack.c.b16 %v3710, %v3708
        %v3777 = vpack.c.b16 %v3711, %v3709
        %v3778 = vpack.c.b16 %v3714, %v3712
        %v3779 = vpack.c.b16 %v3715, %v3713
        %3844 = vmatprep.subr.bf16.mxu0 %v3731
        %3845 = vmatpush1.bf16.msra.mxu0 %v3730
        %3846 = vmatprep.subr.bf16.mxu0 %v3729
        %3847 = vmatpush1.bf16.msra.mxu0 %v3728
        %3848 = vmatprep.subr.bf16.mxu0 %v3727
        %3849 = vmatpush1.bf16.msra.mxu0 %v3726
        %3850 = vmatprep.subr.bf16.mxu0 %v3725
        %3851 = vmatpush1.bf16.msra.mxu0 %v3724
        %3852 = vmatprep.subr.bf16.mxu0 %v3723
        %3853 = vmatpush1.bf16.msra.mxu0 %v3722
        %3854 = vmatprep.subr.bf16.mxu0 %v3721
        %3855 = vmatpush1.bf16.msra.mxu0 %v3720
        %3856 = vmatprep.subr.bf16.mxu0 %v3719
        %3857 = vmatpush1.bf16.msra.mxu0 %v3718
        %3858 = vmatprep.subr.bf16.mxu0 %v3717
        %3859 = vmatpush1.bf16.msra.mxu0 %v3716
        %3860 = vmatprep.subr.bf16.mxu0 %v3747
        %3861 = vmatpush2.bf16.msra.mxu0 %v3746
        %3862 = vmatprep.subr.bf16.mxu0 %v3745
        %3863 = vmatpush2.bf16.msra.mxu0 %v3744
        %3864 = vmatprep.subr.bf16.mxu0 %v3743
        %3865 = vmatpush2.bf16.msra.mxu0 %v3742
        %3866 = vmatprep.subr.bf16.mxu0 %v3741
        %3867 = vmatpush2.bf16.msra.mxu0 %v3740
        %3868 = vmatprep.subr.bf16.mxu0 %v3739
        %3869 = vmatpush2.bf16.msra.mxu0 %v3738
        %3870 = vmatprep.subr.bf16.mxu0 %v3737
        %3871 = vmatpush2.bf16.msra.mxu0 %v3736
        %3872 = vmatprep.subr.bf16.mxu0 %v3735
        %3873 = vmatpush2.bf16.msra.mxu0 %v3734
        %3874 = vmatprep.subr.bf16.mxu0 %v3733
        %3875 = vmatpush2.bf16.msra.mxu0 %v3732
        %3876 = vmatprep.mubr.bf16.mxu0 %v3457
        %3877 = vmatmul.mubr.bf16.gmra.mxu0 %v3456
        %v3878 = vpop.f32.mrf.mxu0
        %v3879 = vadd.f32 0.0, %v3878
        %v3880 = vpop.f32.mrf.mxu0
        %v3881 = vadd.f32 0.0, %v3880
        %v3882 = vpop.f32.mrf.mxu0
        %v3883 = vadd.f32 0.0, %v3882
        %v3884 = vpop.f32.mrf.mxu0
        %v3885 = vadd.f32 0.0, %v3884
        %3886 = vdwg.mxu0
        %3887 = vmatprep.subr.bf16.mxu0 %v3763
        %3888 = vmatpush1.bf16.msra.mxu0 %v3762
        %3889 = vmatprep.subr.bf16.mxu0 %v3761
        %3890 = vmatpush1.bf16.msra.mxu0 %v3760
        %3891 = vmatprep.subr.bf16.mxu0 %v3759
        %3892 = vmatpush1.bf16.msra.mxu0 %v3758
        %3893 = vmatprep.subr.bf16.mxu0 %v3757
        %3894 = vmatpush1.bf16.msra.mxu0 %v3756
        %3895 = vmatprep.subr.bf16.mxu0 %v3755
        %3896 = vmatpush1.bf16.msra.mxu0 %v3754
        %3897 = vmatprep.subr.bf16.mxu0 %v3753
        %3898 = vmatpush1.bf16.msra.mxu0 %v3752
        %3899 = vmatprep.subr.bf16.mxu0 %v3751
        %3900 = vmatpush1.bf16.msra.mxu0 %v3750
        %3901 = vmatprep.subr.bf16.mxu0 %v3749
        %3902 = vmatpush1.bf16.msra.mxu0 %v3748
        %3903 = vmatprep.subr.bf16.mxu0 %v3779
        %3904 = vmatpush2.bf16.msra.mxu0 %v3778
        %3905 = vmatprep.subr.bf16.mxu0 %v3777
        %3906 = vmatpush2.bf16.msra.mxu0 %v3776
        %3907 = vmatprep.subr.bf16.mxu0 %v3775
        %3908 = vmatpush2.bf16.msra.mxu0 %v3774
        %3909 = vmatprep.subr.bf16.mxu0 %v3773
        %3910 = vmatpush2.bf16.msra.mxu0 %v3772
        %3911 = vmatprep.subr.bf16.mxu0 %v3771
        %3912 = vmatpush2.bf16.msra.mxu0 %v3770
        %3913 = vmatprep.subr.bf16.mxu0 %v3769
        %3914 = vmatpush2.bf16.msra.mxu0 %v3768
        %3915 = vmatprep.subr.bf16.mxu0 %v3767
        %3916 = vmatpush2.bf16.msra.mxu0 %v3766
        %3917 = vmatprep.subr.bf16.mxu0 %v3765
        %3918 = vmatpush2.bf16.msra.mxu0 %v3764
        %3919 = vmatprep.mubr.bf16.mxu0 %v3459
        %3920 = vmatmul.mubr.bf16.gmra.mxu0 %v3458
        %v3921 = vpop.f32.mrf.mxu0
        %v3922 = vadd.f32 %v3879, %v3921
        %v3923 = vpop.f32.mrf.mxu0
        %v3924 = vadd.f32 %v3881, %v3923
        %v3925 = vpop.f32.mrf.mxu0
        %v3926 = vadd.f32 %v3883, %v3925
        %v3927 = vpop.f32.mrf.mxu0
        %v3928 = vadd.f32 %v3885, %v3927
        %3929 = vdwg.mxu0
        %v3930 = vmax.f32 %v3922, 0.0
        %v3931 = vmax.f32 %v3924, 0.0
        %v3932 = vmax.f32 %v3926, 0.0
        %v3933 = vmax.f32 %v3928, 0.0
        %v3934 = vpack.c.bf16 %v3932, %v3930
        %v3935 = vpack.c.bf16 %v3933, %v3931
        %v3936 = vld [vmem:[%s3] sm:$0xf]
        %v3937 = vld [vmem:[%s3 + $0x4] sm:$0xf]
        %v3938 = vld [vmem:[%s3 + $0x8] sm:$0xf]
        %v3939 = vld [vmem:[%s3 + $0xc] sm:$0xf]
        %v3940 = vld [vmem:[%s3 + $0x10] sm:$0xf]
        %v3941 = vld [vmem:[%s3 + $0x14] sm:$0xf]
        %v3942 = vld [vmem:[%s3 + $0x18] sm:$0xf]
        %v3943 = vld [vmem:[%s3 + $0x1c] sm:$0xf]
        %v3944 = vld [vmem:[%s3 + $0x20] sm:$0xf]
        %v3945 = vld [vmem:[%s3 + $0x24] sm:$0xf]
        %v3946 = vld [vmem:[%s3 + $0x28] sm:$0xf]
        %v3947 = vld [vmem:[%s3 + $0x2c] sm:$0xf]
        %v3948 = vld [vmem:[%s3 + $0x30] sm:$0xf]
        %v3949 = vld [vmem:[%s3 + $0x34] sm:$0xf]
        %v3950 = vld [vmem:[%s3 + $0x38] sm:$0xf]
        %v3951 = vld [vmem:[%s3 + $0x3c] sm:$0xf]
        %v3952 = vld [vmem:[%s3 + $0x40] sm:$0xf]
        %v3953 = vld [vmem:[%s3 + $0x44] sm:$0xf]
        %v3954 = vld [vmem:[%s3 + $0x48] sm:$0xf]
        %v3955 = vld [vmem:[%s3 + $0x4c] sm:$0xf]
        %v3956 = vld [vmem:[%s3 + $0x50] sm:$0xf]
        %v3957 = vld [vmem:[%s3 + $0x54] sm:$0xf]
        %v3958 = vld [vmem:[%s3 + $0x58] sm:$0xf]
        %v3959 = vld [vmem:[%s3 + $0x5c] sm:$0xf]
        %v3960 = vld [vmem:[%s3 + $0x60] sm:$0xf]
        %v3961 = vld [vmem:[%s3 + $0x64] sm:$0xf]
        %v3962 = vld [vmem:[%s3 + $0x68] sm:$0xf]
        %v3963 = vld [vmem:[%s3 + $0x6c] sm:$0xf]
        %v3964 = vld [vmem:[%s3 + $0x70] sm:$0xf]
        %v3965 = vld [vmem:[%s3 + $0x74] sm:$0xf]
        %v3966 = vld [vmem:[%s3 + $0x78] sm:$0xf]
        %v3967 = vld [vmem:[%s3 + $0x7c] sm:$0xf]
        %v4000 = vunpack.c.l.b16 %v3936
        %v4001 = vunpack.c.l.b16 %v3937
        %v4002 = vunpack.c.l.b16 %v3938
        %v4003 = vunpack.c.l.b16 %v3939
        %v4004 = vunpack.c.l.b16 %v3940
        %v4005 = vunpack.c.l.b16 %v3941
        %v4006 = vunpack.c.l.b16 %v3942
        %v4007 = vunpack.c.l.b16 %v3943
        %v4008 = vunpack.c.l.b16 %v3944
        %v4009 = vunpack.c.l.b16 %v3945
        %v4010 = vunpack.c.l.b16 %v3946
        %v4011 = vunpack.c.l.b16 %v3947
        %v4012 = vunpack.c.l.b16 %v3948
        %v4013 = vunpack.c.l.b16 %v3949
        %v4014 = vunpack.c.l.b16 %v3950
        %v4015 = vunpack.c.l.b16 %v3951
        %v4016 = vunpack.c.l.b16 %v3952
        %v4017 = vunpack.c.l.b16 %v3953
        %v4018 = vunpack.c.l.b16 %v3954
        %v4019 = vunpack.c.l.b16 %v3955
        %v4020 = vunpack.c.l.b16 %v3956
        %v4021 = vunpack.c.l.b16 %v3957
        %v4022 = vunpack.c.l.b16 %v3958
        %v4023 = vunpack.c.l.b16 %v3959
        %v4024 = vunpack.c.l.b16 %v3960
        %v4025 = vunpack.c.l.b16 %v3961
        %v4026 = vunpack.c.l.b16 %v3962
        %v4027 = vunpack.c.l.b16 %v3963
        %v4028 = vunpack.c.l.b16 %v3964
        %v4029 = vunpack.c.l.b16 %v3965
        %v4030 = vunpack.c.l.b16 %v3966
        %v4031 = vunpack.c.l.b16 %v3967
        %v4032 = vpack.c.b16 %v4001, %v4000
        %v4033 = vpack.c.b16 %v4003, %v4002
        %v4034 = vpack.c.b16 %v4005, %v4004
        %v4035 = vpack.c.b16 %v4007, %v4006
        %v4036 = vpack.c.b16 %v4009, %v4008
        %v4037 = vpack.c.b16 %v4011, %v4010
        %v4038 = vpack.c.b16 %v4013, %v4012
        %v4039 = vpack.c.b16 %v4015, %v4014
        %v4040 = vpack.c.b16 %v4017, %v4016
        %v4041 = vpack.c.b16 %v4019, %v4018
        %v4042 = vpack.c.b16 %v4021, %v4020
        %v4043 = vpack.c.b16 %v4023, %v4022
        %v4044 = vpack.c.b16 %v4025, %v4024
        %v4045 = vpack.c.b16 %v4027, %v4026
        %v4046 = vpack.c.b16 %v4029, %v4028
        %v4047 = vpack.c.b16 %v4031, %v4030
        %4064 = vmatprep.subr.bf16.mxu0 0
        %4065 = vmatpush1.bf16.msra.mxu0 %v4039
        %4066 = vmatprep.subr.bf16.mxu0 0
        %4067 = vmatpush1.bf16.msra.mxu0 %v4038
        %4068 = vmatprep.subr.bf16.mxu0 0
        %4069 = vmatpush1.bf16.msra.mxu0 %v4037
        %4070 = vmatprep.subr.bf16.mxu0 0
        %4071 = vmatpush1.bf16.msra.mxu0 %v4036
        %4072 = vmatprep.subr.bf16.mxu0 0
        %4073 = vmatpush1.bf16.msra.mxu0 %v4035
        %4074 = vmatprep.subr.bf16.mxu0 0
        %4075 = vmatpush1.bf16.msra.mxu0 %v4034
        %4076 = vmatprep.subr.bf16.mxu0 0
        %4077 = vmatpush1.bf16.msra.mxu0 %v4033
        %4078 = vmatprep.subr.bf16.mxu0 0
        %4079 = vmatpush1.bf16.msra.mxu0 %v4032
        %4080 = vmatprep.subr.bf16.mxu0 0
        %4081 = vmatpush2.bf16.msra.mxu0 %v4047
        %4082 = vmatprep.subr.bf16.mxu0 0
        %4083 = vmatpush2.bf16.msra.mxu0 %v4046
        %4084 = vmatprep.subr.bf16.mxu0 0
        %4085 = vmatpush2.bf16.msra.mxu0 %v4045
        %4086 = vmatprep.subr.bf16.mxu0 0
        %4087 = vmatpush2.bf16.msra.mxu0 %v4044
        %4088 = vmatprep.subr.bf16.mxu0 0
        %4089 = vmatpush2.bf16.msra.mxu0 %v4043
        %4090 = vmatprep.subr.bf16.mxu0 0
        %4091 = vmatpush2.bf16.msra.mxu0 %v4042
        %4092 = vmatprep.subr.bf16.mxu0 0
        %4093 = vmatpush2.bf16.msra.mxu0 %v4041
        %4094 = vmatprep.subr.bf16.mxu0 0
        %4095 = vmatpush2.bf16.msra.mxu0 %v4040
        %4096 = vmatprep.mubr.bf16.mxu0 %v3935
        %4097 = vmatmul.mubr.bf16.gmra.mxu0 %v3934
        %v4098 = vpop.f32.mrf.mxu0
        %v4099 = vadd.f32 0.0, %v4098
        %v4100 = vpop.f32.mrf.mxu0
        %v4101 = vpop.f32.mrf.mxu0
        %v4102 = vadd.f32 0.0, %v4101
        %v4103 = vpop.f32.mrf.mxu0
        %4104 = vdwg.mxu0
        %v4105 = vmax.f32 %v4099, 0.0
        %v4106 = vmax.f32 %v4102, 0.0
        %v4107 = vpack.c.bf16 %v4106, %v4105
        %v4108 = vld [vmem:[%s4] sm:$0xf]
        %v4109 = vld [vmem:[%s4 + $0x4] sm:$0xf]
        %v4110 = vld [vmem:[%s4 + $0x8] sm:$0xf]
        %v4111 = vld [vmem:[%s4 + $0xc] sm:$0xf]
        %v4112 = vld [vmem:[%s4 + $0x10] sm:$0xf]
        %v4113 = vld [vmem:[%s4 + $0x14] sm:$0xf]
        %v4114 = vld [vmem:[%s4 + $0x18] sm:$0xf]
        %v4115 = vld [vmem:[%s4 + $0x1c] sm:$0xf]
        %v4116 = vld [vmem:[%s4 + $0x20] sm:$0xf]
        %v4117 = vld [vmem:[%s4 + $0x24] sm:$0xf]
        %v4118 = vld [vmem:[%s4 + $0x28] sm:$0xf]
        %v4119 = vld [vmem:[%s4 + $0x2c] sm:$0xf]
        %v4120 = vld [vmem:[%s4 + $0x30] sm:$0xf]
        %v4121 = vld [vmem:[%s4 + $0x34] sm:$0xf]
        %v4122 = vld [vmem:[%s4 + $0x38] sm:$0xf]
        %v4123 = vld [vmem:[%s4 + $0x3c] sm:$0xf]
        %v4140 = vunpack.c.l.b16 %v4108
        %v4141 = vunpack.c.l.b16 %v4109
        %v4142 = vunpack.c.l.b16 %v4110
        %v4143 = vunpack.c.l.b16 %v4111
        %v4144 = vunpack.c.l.b16 %v4112
        %v4145 = vunpack.c.l.b16 %v4113
        %v4146 = vunpack.c.l.b16 %v4114
        %v4147 = vunpack.c.l.b16 %v4115
        %v4148 = vunpack.c.l.b16 %v4116
        %v4149 = vunpack.c.l.b16 %v4117
        %v4150 = vunpack.c.l.b16 %v4118
        %v4151 = vunpack.c.l.b16 %v4119
        %v4152 = vunpack.c.l.b16 %v4120
        %v4153 = vunpack.c.l.b16 %v4121
        %v4154 = vunpack.c.l.b16 %v4122
        %v4155 = vunpack.c.l.b16 %v4123
        %v4156 = vpack.c.b16 %v4141, %v4140
        %v4157 = vpack.c.b16 %v4143, %v4142
        %v4158 = vpack.c.b16 %v4145, %v4144
        %v4159 = vpack.c.b16 %v4147, %v4146
        %v4160 = vpack.c.b16 %v4149, %v4148
        %v4161 = vpack.c.b16 %v4151, %v4150
        %v4162 = vpack.c.b16 %v4153, %v4152
        %v4163 = vpack.c.b16 %v4155, %v4154
        %4172 = vmatprep.subr.bf16.mxu0 0
        %4173 = vmatpush1.bf16.msra.mxu0 %v4163
        %4174 = vmatprep.subr.bf16.mxu0 0
        %4175 = vmatpush1.bf16.msra.mxu0 %v4162
        %4176 = vmatprep.subr.bf16.mxu0 0
        %4177 = vmatpush1.bf16.msra.mxu0 %v4161
        %4178 = vmatprep.subr.bf16.mxu0 0
        %4179 = vmatpush1.bf16.msra.mxu0 %v4160
        %4180 = vmatprep.subr.bf16.mxu0 0
        %4181 = vmatpush1.bf16.msra.mxu0 %v4159
        %4182 = vmatprep.subr.bf16.mxu0 0
        %4183 = vmatpush1.bf16.msra.mxu0 %v4158
        %4184 = vmatprep.subr.bf16.mxu0 0
        %4185 = vmatpush1.bf16.msra.mxu0 %v4157
        %4186 = vmatprep.subr.bf16.mxu0 0
        %4187 = vmatpush1.bf16.msra.mxu0 %v4156
        %4188 = vmatprep.subr.bf16.mxu0 0
        %4189 = vmatpush2.bf16.msra.mxu0 0
        %4190 = vmatprep.subr.bf16.mxu0 0
        %4191 = vmatpush2.bf16.msra.mxu0 0
        %4192 = vmatprep.subr.bf16.mxu0 0
        %4193 = vmatpush2.bf16.msra.mxu0 0
        %4194 = vmatprep.subr.bf16.mxu0 0
        %4195 = vmatpush2.bf16.msra.mxu0 0
        %4196 = vmatprep.subr.bf16.mxu0 0
        %4197 = vmatpush2.bf16.msra.mxu0 0
        %4198 = vmatprep.subr.bf16.mxu0 0
        %4199 = vmatpush2.bf16.msra.mxu0 0
        %4200 = vmatprep.subr.bf16.mxu0 0
        %4201 = vmatpush2.bf16.msra.mxu0 0
        %4202 = vmatprep.subr.bf16.mxu0 0
        %4203 = vmatpush2.bf16.msra.mxu0 0
        %4204 = vmatprep.mubr.bf16.mxu0 0
        %4205 = vmatmul.mubr.bf16.gmra.mxu0 %v4107
        %v4206 = vpop.f32.mrf.mxu0
        %v4207 = vadd.f32 0.0, %v4206
        %v4208 = vpop.f32.mrf.mxu0
        %v4209 = vpop.f32.mrf.mxu0
        %v4210 = vadd.f32 0.0, %v4209
        %v4211 = vpop.f32.mrf.mxu0
        %4212 = vdwg.mxu0
        %v4213 = vpack.c.bf16 %v4210, %v4207
        %v4215 = vunpack.c.l.b16 %v4213
        %v4216 = vunpack.c.h.b16 %v4213
        %v4217 = vpack.c.b16 %v4215, %v4215
        %v4218 = vpack.c.b16 %v4216, %v4216
        %4221 = vst [vmem:[%s244] sm:$0xf] %v4217
        %4222 = vst [vmem:[%s244 + $0x4] sm:$0xf] %v4218
        %s4223 = smul.u32 2, %s17
        %p4224 = scmp.lt.s32.totalorder %s4223, 3
        %s4225 = scalar_select %p4224, %s4223, 3
        %s4226 = smul.addr %s4225, 4
        %s4227 = scalar_lea.vmem %s5, %s4226
        // Predicated region
        $region45: #{net_forward.1} parent=39 // pred_check
          %p4228 = pneg %p145
        $region46: #{net_forward.1} parent=39 // pred_check_branch
          %4230 = sbr.rel (%p4228) target = $region48
        $region47: #{net_forward.1} parent=39 // pred_region
          %s4231 = smul.u32 2, %s17
        $region48: #{net_forward.1} parent=39 // pred_fallthru
          _
      $region40: #{net_forward.1} parent=5 // pred_fallthru
        _
      %p4232 = scmp.le.s32.totalorder 2, %s12
      // Predicated region
      $region49: #{net_forward.1} parent=5 // pred_check
        %p4233 = pneg %p4232
      $region50: #{net_forward.1} parent=5 // pred_check_branch
        %4235 = sbr.rel (%p4233) target = $region52
      $region51: #{net_forward.1} parent=5 // pred_region
        %s4236 = ssub.s32 %s12, 2
        // Predicated region
        $region53: #{net_forward.1} parent=51 // pred_check
          %p4237 = pneg %p151
        $region54: #{net_forward.1} parent=51 // pred_check_branch
          %4239 = sbr.rel (%p4237) target = $region56
        $region55: #{net_forward.1} parent=51 // pred_region
          %s4240 = smul.u32 2, %s18
          %p4241 = scmp.lt.s32.totalorder %s4240, 3
          %s4242 = scalar_select %p4241, %s4240, 3
          %s4243 = smul.addr %s4242, 4
          %s4244 = scalar_lea.vmem %s5, %s4243
        $region56: #{net_forward.1} parent=51 // pred_fallthru
          _
      $region52: #{net_forward.1} parent=5 // pred_fallthru
        _
    $region6: #{net_forward.1} parent=1 // loop_footer
      %s16 = sadd.s32 1, %s12
    $region7: #{net_forward.1} parent=1 // loop_footer_branch
      %11 = sbr.rel target = $region3
    $region8: #{net_forward.1} parent=1 // loop_exit
      _
    %4245 = vsyncpa [#allocation3], 1
    %s4246 = scalar_lea.sflag [#allocation3], 1
    %4247 = vsyncpa %s4246, 1

</llo_original>
